<compile_context>
chip_gen: v7x
topology: tpu7x:2x2x1
jax: 0.10.0
libtpu: 0.0.40
codegen_flags: <defaults>
</compile_context>

<pallas_src>
import math
import jax
import jax.numpy as jnp
from jax.experimental import pallas as pl
from jax.experimental.pallas import tpu as pltpu


# ----------------------------------------------------------------------------
# Helpers
# ----------------------------------------------------------------------------
def _pick_tile(dim, candidates):
    """Largest candidate that divides `dim`, else `dim` itself (full extent)."""
    for c in candidates:
        if c <= dim and dim % c == 0:
            return c
    return dim


# ----------------------------------------------------------------------------
# Pallas kernels
# ----------------------------------------------------------------------------
def conv3x3_relu_kernel(x_ref, w_ref, b_ref, o_ref, xpad_ref):
    """3x3 conv (pad=1) + bias + ReLU for a block of B images (NHWC).

    x_ref    : (B, H, W, Cin)  f32   input block            (VMEM)
    w_ref    : (9, Cin, Cout)  bf16  weights, tap-major      (VMEM)
    b_ref    : (1, Cout)       f32   bias                    (VMEM)
    o_ref    : (B, H, W, Cout) f32   output block            (VMEM)
    xpad_ref : (B, H+2, W+2, Cin) f32 padded-activation scratch (VMEM)
    """
    B, H, W, Cin = x_ref.shape
    Cout = o_ref.shape[-1]
    M = B * H * W

    # In-kernel zero padding: zero the halo (whole buffer — cheap vs. conv FLOPs
    # and safe under megacore scratch-per-core), then copy the interior.
    xpad_ref[...] = jnp.zeros_like(xpad_ref)
    xpad_ref[:, 1:H + 1, 1:W + 1, :] = x_ref[...]

    taps = [(dy, dx) for dy in range(3) for dx in range(3)]
    if Cin % 128 == 0:
        # Lane-aligned channels: build the (M, 9*Cin) im2col slab once and run a
        # single MXU matmul with K = 9*Cin (bf16 x bf16 -> f32 accumulate).
        patches = [
            xpad_ref[:, dy:dy + H, dx:dx + W, :].reshape(M, Cin)
            for dy, dx in taps
        ]
        col = jnp.concatenate(patches, axis=-1).astype(jnp.bfloat16)
        acc = jnp.dot(col, w_ref[...].reshape(9 * Cin, Cout),
                      preferred_element_type=jnp.float32)
    else:
        # Tiny / unaligned channel count (toy config): accumulate 9 shifted-patch
        # matmuls, still batched over B images, bf16 MXU inputs, f32 accumulate.
        acc = jnp.zeros((M, Cout), jnp.float32)
        for t, (dy, dx) in enumerate(taps):
            patch = xpad_ref[:, dy:dy + H, dx:dx + W, :].reshape(M, Cin)
            acc += jnp.dot(patch.astype(jnp.bfloat16), w_ref[t],
                           preferred_element_type=jnp.float32)

    acc = jnp.maximum(acc + b_ref[...].astype(jnp.float32), 0.0)
    o_ref[...] = acc.reshape(B, H, W, Cout).astype(o_ref.dtype)


def fc_relu_kernel(x_ref, w_ref, b_ref, o_ref, acc_ref):
    """One (tm, tn) output tile of ReLU(x @ W + b), accumulated over k tiles.

    x_ref : (tm, tk) activations, w_ref : (tk, tn) bf16 weights,
    b_ref : (1, tn) f32 bias, o_ref : (tm, tn), acc_ref : (tm, tn) f32 scratch.
    """
    @pl.when(pl.program_id(2) == 0)
    def _():
        acc_ref[...] = jnp.zeros_like(acc_ref)

    acc_ref[...] += jnp.dot(x_ref[...].astype(jnp.bfloat16), w_ref[...],
                            preferred_element_type=jnp.float32)

    @pl.when(pl.program_id(2) == pl.num_programs(2) - 1)
    def _():
        y = acc_ref[...] + b_ref[...].astype(jnp.float32)
        o_ref[...] = jnp.maximum(y, 0.0).astype(o_ref.dtype)


# ----------------------------------------------------------------------------
# Wrappers (grid / BlockSpecs)
# ----------------------------------------------------------------------------
def conv3x3_relu(x_nhwc, w9_bf16, b):
    """x_nhwc: (N,H,W,Cin) f32; w9_bf16: (9,Cin,Cout) bf16; b: (Cout,) f32."""
    N, H, W, Cin = x_nhwc.shape
    Cout = w9_bf16.shape[-1]
    B = _pick_tile(N, (16, 8, 4, 2, 1))         # images per grid step
    b2 = b.reshape(1, Cout).astype(jnp.float32)

    return pl.pallas_call(
        conv3x3_relu_kernel,
        out_shape=jax.ShapeDtypeStruct((N, H, W, Cout), x_nhwc.dtype),
        grid=(N // B,),
        in_specs=[
            pl.BlockSpec((B, H, W, Cin), lambda n: (n, 0, 0, 0)),
            pl.BlockSpec((9, Cin, Cout), lambda n: (0, 0, 0)),
            pl.BlockSpec((1, Cout), lambda n: (0, 0)),
        ],
        out_specs=pl.BlockSpec((B, H, W, Cout), lambda n: (n, 0, 0, 0)),
        scratch_shapes=[pltpu.VMEM((B, H + 2, W + 2, Cin), jnp.float32)],
        compiler_params=pltpu.CompilerParams(
            dimension_semantics=("parallel",),
            vmem_limit_bytes=32 * 1024 * 1024),
    )(x_nhwc, w9_bf16, b2)


def fc_relu(x, w_bf16, b):
    """x: (N,D) f32; w_bf16: (D,F) bf16; b: (F,) f32."""
    N, D = x.shape
    F = w_bf16.shape[1]
    tm = _pick_tile(N, (256, 128, 32, 8))
    tn = _pick_tile(F, (256, 128))
    tk = _pick_tile(D, (512, 256, 128))
    b2 = b.reshape(1, F).astype(jnp.float32)

    # Double-buffered inputs/outputs + f32 accumulator, with headroom; clamped so
    # it stays inside v7x's 64 MiB physical VMEM while lifting v5e/v6e defaults.
    est = 2 * (tm * tk * 4 + tk * tn * 2 + 2 * tn * 4 + tm * tn * 4) + tm * tn * 4
    vmem_limit = int(min(max(2 * est, 32 * 1024 * 1024), 56 * 1024 * 1024))

    return pl.pallas_call(
        fc_relu_kernel,
        out_shape=jax.ShapeDtypeStruct((N, F), x.dtype),
        grid=(N // tm, F // tn, D // tk),
        in_specs=[
            pl.BlockSpec((tm, tk), lambda i, j, k: (i, k)),
            pl.BlockSpec((tk, tn), lambda i, j, k: (k, j)),
            pl.BlockSpec((1, tn), lambda i, j, k: (0, j)),
        ],
        out_specs=pl.BlockSpec((tm, tn), lambda i, j, k: (i, j)),
        scratch_shapes=[pltpu.VMEM((tm, tn), jnp.float32)],
        compiler_params=pltpu.CompilerParams(
            dimension_semantics=("parallel", "parallel", "arbitrary"),
            vmem_limit_bytes=vmem_limit),
    )(x, w_bf16, b2)


# ----------------------------------------------------------------------------
# Parameter construction (mirrors __init__ init schemes; weights stored bf16)
# ----------------------------------------------------------------------------
def build_params(key, in_channels, H, W, num_conv, conv_dim, num_fc, fc_dim):
    params = {"convs": [], "fcs": []}
    c_in = in_channels
    for _ in range(num_conv):
        key, kw = jax.random.split(key)
        # c2_msra_fill: kaiming normal, fan_out = 3*3*conv_dim, relu gain
        std = math.sqrt(2.0 / (3 * 3 * conv_dim))
        w_oihw = std * jax.random.normal(kw, (conv_dim, c_in, 3, 3),
                                         dtype=jnp.float32)
        # OIHW -> (ky, kx, Cin, Cout) -> (9, Cin, Cout), tap-major rows (dy, dx)
        w9 = jnp.transpose(w_oihw, (2, 3, 1, 0)).reshape(9, c_in, conv_dim)
        b = jnp.zeros((conv_dim,), jnp.float32)
        params["convs"].append((w9.astype(jnp.bfloat16), b))
        c_in = conv_dim

    flat_c = conv_dim if num_conv > 0 else in_channels
    d_in = flat_c * H * W
    for idx in range(num_fc):
        key, kw = jax.random.split(key)
        # c2_xavier_fill: kaiming_uniform_(a=1) -> bound = sqrt(3 / fan_in)
        bound = math.sqrt(3.0 / d_in)
        w_t = jax.random.uniform(kw, (fc_dim, d_in), minval=-bound,
                                 maxval=bound, dtype=jnp.float32)
        w = w_t.T                                     # (d_in, fc_dim), torch row order
        if idx == 0 and num_conv > 0:
            # Fold the flatten-order difference into the weight: torch flattens
            # CHW, our conv output flattens HWC.  One-time host permutation —
            # removes the per-forward NHWC->NCHW HBM transpose.
            w = (w.reshape(flat_c, H, W, fc_dim)
                   .transpose(1, 2, 0, 3)
                   .reshape(H * W * flat_c, fc_dim))
        b = jnp.zeros((fc_dim,), jnp.float32)
        params["fcs"].append((w.astype(jnp.bfloat16), b))
        d_in = fc_dim
    return params


# ----------------------------------------------------------------------------
# Forward (matches MyFastRCNNConvFCHead.forward)
# ----------------------------------------------------------------------------
def box_head_forward(x_nchw, params):
    x = x_nchw
    if params["convs"]:
        x = jnp.transpose(x, (0, 2, 3, 1))   # NCHW -> NHWC (channels on lanes)
        for (w9, b) in params["convs"]:
            x = conv3x3_relu(x, w9, b)
    if params["fcs"]:
        if x.ndim > 2:
            x = x.reshape(x.shape[0], -1)    # NHWC flatten; fc1 rows pre-permuted
        for (w, b) in params["fcs"]:
            x = fc_relu(x, w, b)
    elif params["convs"]:
        x = jnp.transpose(x, (0, 3, 1, 2))   # no FCs: return NCHW like PyTorch
    return x


# ----------------------------------------------------------------------------
# Pure-JAX reference (same bf16 matmul inputs, f32 accumulation)
# ----------------------------------------------------------------------------
def reference_forward(x_nchw, params):
    x = jnp.transpose(x_nchw, (0, 2, 3, 1)).astype(jnp.float32)   # NHWC
    for (w9, b) in params["convs"]:
        N_, H_, W_, Cin = x.shape
        Cout = w9.shape[-1]
        xp = jnp.pad(x, ((0, 0), (1, 1), (1, 1), (0, 0)))
        acc = jnp.zeros((N_, H_, W_, Cout), jnp.float32)
        t = 0
        for dy in range(3):
            for dx in range(3):
                patch = xp[:, dy:dy + H_, dx:dx + W_, :].astype(jnp.bfloat16)
                acc = acc + jnp.einsum("nhwc,co->nhwo", patch, w9[t],
                                       preferred_element_type=jnp.float32)
                t += 1
        x = jnp.maximum(acc + b, 0.0)
    if params["fcs"]:
        if x.ndim > 2:
            x = x.reshape(x.shape[0], -1)
        for (w, b) in params["fcs"]:
            y = jnp.dot(x.astype(jnp.bfloat16), w,
                        preferred_element_type=jnp.float32) + b
            x = jnp.maximum(y, 0.0)
    elif params["convs"]:
        x = jnp.transpose(x, (0, 3, 1, 2))
    return x


# ----------------------------------------------------------------------------
if __name__ == "__main__":
    # Small synthetic config: NUM_CONV=1, CONV_DIM=8, NUM_FC=2, FC_DIM=32, NORM=""
    N, C, H, W = 2, 4, 16, 16
    NUM_CONV, CONV_DIM = 1, 8
    NUM_FC, FC_DIM = 2, 32

    key = jax.random.PRNGKey(0)
    key, kx = jax.random.split(key)
    x = jax.random.normal(kx, (N, C, H, W), dtype=jnp.float32)  # NCHW input

    params = build_params(key, C, H, W, NUM_CONV, CONV_DIM, NUM_FC, FC_DIM)

    out = box_head_forward(x, params)
    out = jax.block_until_ready(out)
    assert out.shape == (N, FC_DIM), out.shape
    assert bool(jnp.all(jnp.isfinite(out)))

    ref = jax.block_until_ready(reference_forward(x, params))
    max_err = float(jnp.max(jnp.abs(out - ref)))
    assert max_err < 2e-2, f"mismatch vs reference: max abs err {max_err}"

    print("KERNEL_OK")
</pallas_src>

<mosaic_0001>
module attributes {stable_mosaic.version = 11 : i64} {
  func.func @conv3x3_relu_kernel(%arg0: i32, %arg1: memref<2x16x16x4xf32, #tpu.memory_space<vmem>>, %arg2: memref<9x4x8xbf16, #tpu.memory_space<vmem>>, %arg3: memref<1x8xf32, #tpu.memory_space<vmem>>, %arg4: memref<2x16x16x8xf32, #tpu.memory_space<vmem>>, %arg5: memref<2x18x18x4xf32, #tpu.memory_space<vmem>>) attributes {dimension_semantics = [#tpu.dimension_semantics<parallel>], iteration_bounds = array<i64: 1>, scalar_prefetch = 0 : i64, scratch_operands = 1 : i64, tpu.core_type = #tpu.core_type<tc>, window_params = [{transform_indices = @transform_0, window_bounds = array<i64: 2, 16, 16, 4>}, {pipeline_mode = #tpu.pipeline_mode<synchronous>, transform_indices = @transform_1, window_bounds = array<i64: 9, 4, 8>}, {pipeline_mode = #tpu.pipeline_mode<synchronous>, transform_indices = @transform_2, window_bounds = array<i64: 1, 8>}, {transform_indices = @transform_3, window_bounds = array<i64: 2, 16, 16, 8>}]} {
    %cst = arith.constant 0.000000e+00 : f32
    %0 = vector.broadcast %cst : f32 to vector<2x18x18x4xf32>
    %c0 = arith.constant 0 : index
    %c0_0 = arith.constant 0 : index
    %c0_1 = arith.constant 0 : index
    %c0_2 = arith.constant 0 : index
    %1 = vector.load %arg5[%c0, %c0_0, %c0_1, %c0_2] : memref<2x18x18x4xf32, #tpu.memory_space<vmem>>, vector<2x18x18x4xf32>
    tpu.vector_store %arg5[%c0, %c0_0, %c0_1, %c0_2], %0 {strides = array<i32>} : memref<2x18x18x4xf32, #tpu.memory_space<vmem>>, vector<2x18x18x4xf32>,
    %c0_3 = arith.constant 0 : index
    %c0_4 = arith.constant 0 : index
    %c0_5 = arith.constant 0 : index
    %c0_6 = arith.constant 0 : index
    %2 = vector.load %arg1[%c0_3, %c0_4, %c0_5, %c0_6] : memref<2x16x16x4xf32, #tpu.memory_space<vmem>>, vector<2x16x16x4xf32>
    %c0_7 = arith.constant 0 : index
    %c1 = arith.constant 1 : index
    %c1_8 = arith.constant 1 : index
    %c0_9 = arith.constant 0 : index
    %3 = vector.load %arg5[%c0_7, %c1, %c1_8, %c0_9] : memref<2x18x18x4xf32, #tpu.memory_space<vmem>>, vector<2x16x16x4xf32>
    tpu.vector_store %arg5[%c0_7, %c1, %c1_8, %c0_9], %2 {strides = array<i32>} : memref<2x18x18x4xf32, #tpu.memory_space<vmem>>, vector<2x16x16x4xf32>,
    %cst_10 = arith.constant 0.000000e+00 : f32
    %4 = vector.broadcast %cst_10 : f32 to vector<512x8xf32>
    %c0_11 = arith.constant 0 : index
    %c0_12 = arith.constant 0 : index
    %c0_13 = arith.constant 0 : index
    %c0_14 = arith.constant 0 : index
    %5 = vector.load %arg5[%c0_11, %c0_12, %c0_13, %c0_14] : memref<2x18x18x4xf32, #tpu.memory_space<vmem>>, vector<2x16x16x4xf32>
    %6 = vector.shape_cast %5 : vector<2x16x16x4xf32> to vector<512x4xf32>
    %7 = arith.truncf %6 : vector<512x4xf32> to vector<512x4xbf16>
    %c0_15 = arith.constant 0 : index
    %c0_16 = arith.constant 0 : index
    %c0_17 = arith.constant 0 : index
    %8 = vector.load %arg2[%c0_15, %c0_16, %c0_17] : memref<9x4x8xbf16, #tpu.memory_space<vmem>>, vector<1x4x8xbf16>
    %9 = vector.shape_cast %8 : vector<1x4x8xbf16> to vector<4x8xbf16>
    %cst_18 = arith.constant dense<0.000000e+00> : vector<512x8xf32>
    %10 = tpu.matmul %7, %9, %cst_18 {dimension_numbers = #tpu.dot_dimension_numbers<[1], [0], [0], [1], [0, 0, 1, 1], [], []>} : vector<512x4xbf16>, vector<4x8xbf16>, vector<512x8xf32> -> vector<512x8xf32>
    %11 = arith.addf %4, %10 : vector<512x8xf32>
    %c0_19 = arith.constant 0 : index
    %c0_20 = arith.constant 0 : index
    %c1_21 = arith.constant 1 : index
    %c0_22 = arith.constant 0 : index
    %12 = vector.load %arg5[%c0_19, %c0_20, %c1_21, %c0_22] : memref<2x18x18x4xf32, #tpu.memory_space<vmem>>, vector<2x16x16x4xf32>
    %13 = vector.shape_cast %12 : vector<2x16x16x4xf32> to vector<512x4xf32>
    %14 = arith.truncf %13 : vector<512x4xf32> to vector<512x4xbf16>
    %c1_23 = arith.constant 1 : index
    %c0_24 = arith.constant 0 : index
    %c0_25 = arith.constant 0 : index
    %15 = vector.load %arg2[%c1_23, %c0_24, %c0_25] : memref<9x4x8xbf16, #tpu.memory_space<vmem>>, vector<1x4x8xbf16>
    %16 = vector.shape_cast %15 : vector<1x4x8xbf16> to vector<4x8xbf16>
    %cst_26 = arith.constant dense<0.000000e+00> : vector<512x8xf32>
    %17 = tpu.matmul %14, %16, %cst_26 {dimension_numbers = #tpu.dot_dimension_numbers<[1], [0], [0], [1], [0, 0, 1, 1], [], []>} : vector<512x4xbf16>, vector<4x8xbf16>, vector<512x8xf32> -> vector<512x8xf32>
    %18 = arith.addf %11, %17 : vector<512x8xf32>
    %c0_27 = arith.constant 0 : index
    %c0_28 = arith.constant 0 : index
    %c2 = arith.constant 2 : index
    %c0_29 = arith.constant 0 : index
    %19 = vector.load %arg5[%c0_27, %c0_28, %c2, %c0_29] : memref<2x18x18x4xf32, #tpu.memory_space<vmem>>, vector<2x16x16x4xf32>
    %20 = vector.shape_cast %19 : vector<2x16x16x4xf32> to vector<512x4xf32>
    %21 = arith.truncf %20 : vector<512x4xf32> to vector<512x4xbf16>
    %c2_30 = arith.constant 2 : index
    %c0_31 = arith.constant 0 : index
    %c0_32 = arith.constant 0 : index
    %22 = vector.load %arg2[%c2_30, %c0_31, %c0_32] : memref<9x4x8xbf16, #tpu.memory_space<vmem>>, vector<1x4x8xbf16>
    %23 = vector.shape_cast %22 : vector<1x4x8xbf16> to vector<4x8xbf16>
    %cst_33 = arith.constant dense<0.000000e+00> : vector<512x8xf32>
    %24 = tpu.matmul %21, %23, %cst_33 {dimension_numbers = #tpu.dot_dimension_numbers<[1], [0], [0], [1], [0, 0, 1, 1], [], []>} : vector<512x4xbf16>, vector<4x8xbf16>, vector<512x8xf32> -> vector<512x8xf32>
    %25 = arith.addf %18, %24 : vector<512x8xf32>
    %c0_34 = arith.constant 0 : index
    %c1_35 = arith.constant 1 : index
    %c0_36 = arith.constant 0 : index
    %c0_37 = arith.constant 0 : index
    %26 = vector.load %arg5[%c0_34, %c1_35, %c0_36, %c0_37] : memref<2x18x18x4xf32, #tpu.memory_space<vmem>>, vector<2x16x16x4xf32>
    %27 = vector.shape_cast %26 : vector<2x16x16x4xf32> to vector<512x4xf32>
    %28 = arith.truncf %27 : vector<512x4xf32> to vector<512x4xbf16>
    %c3 = arith.constant 3 : index
    %c0_38 = arith.constant 0 : index
    %c0_39 = arith.constant 0 : index
    %29 = vector.load %arg2[%c3, %c0_38, %c0_39] : memref<9x4x8xbf16, #tpu.memory_space<vmem>>, vector<1x4x8xbf16>
    %30 = vector.shape_cast %29 : vector<1x4x8xbf16> to vector<4x8xbf16>
    %cst_40 = arith.constant dense<0.000000e+00> : vector<512x8xf32>
    %31 = tpu.matmul %28, %30, %cst_40 {dimension_numbers = #tpu.dot_dimension_numbers<[1], [0], [0], [1], [0, 0, 1, 1], [], []>} : vector<512x4xbf16>, vector<4x8xbf16>, vector<512x8xf32> -> vector<512x8xf32>
    %32 = arith.addf %25, %31 : vector<512x8xf32>
    %c0_41 = arith.constant 0 : index
    %c1_42 = arith.constant 1 : index
    %c1_43 = arith.constant 1 : index
    %c0_44 = arith.constant 0 : index
    %33 = vector.load %arg5[%c0_41, %c1_42, %c1_43, %c0_44] : memref<2x18x18x4xf32, #tpu.memory_space<vmem>>, vector<2x16x16x4xf32>
    %34 = vector.shape_cast %33 : vector<2x16x16x4xf32> to vector<512x4xf32>
    %35 = arith.truncf %34 : vector<512x4xf32> to vector<512x4xbf16>
    %c4 = arith.constant 4 : index
    %c0_45 = arith.constant 0 : index
    %c0_46 = arith.constant 0 : index
    %36 = vector.load %arg2[%c4, %c0_45, %c0_46] : memref<9x4x8xbf16, #tpu.memory_space<vmem>>, vector<1x4x8xbf16>
    %37 = vector.shape_cast %36 : vector<1x4x8xbf16> to vector<4x8xbf16>
    %cst_47 = arith.constant dense<0.000000e+00> : vector<512x8xf32>
    %38 = tpu.matmul %35, %37, %cst_47 {dimension_numbers = #tpu.dot_dimension_numbers<[1], [0], [0], [1], [0, 0, 1, 1], [], []>} : vector<512x4xbf16>, vector<4x8xbf16>, vector<512x8xf32> -> vector<512x8xf32>
    %39 = arith.addf %32, %38 : vector<512x8xf32>
    %c0_48 = arith.constant 0 : index
    %c1_49 = arith.constant 1 : index
    %c2_50 = arith.constant 2 : index
    %c0_51 = arith.constant 0 : index
    %40 = vector.load %arg5[%c0_48, %c1_49, %c2_50, %c0_51] : memref<2x18x18x4xf32, #tpu.memory_space<vmem>>, vector<2x16x16x4xf32>
    %41 = vector.shape_cast %40 : vector<2x16x16x4xf32> to vector<512x4xf32>
    %42 = arith.truncf %41 : vector<512x4xf32> to vector<512x4xbf16>
    %c5 = arith.constant 5 : index
    %c0_52 = arith.constant 0 : index
    %c0_53 = arith.constant 0 : index
    %43 = vector.load %arg2[%c5, %c0_52, %c0_53] : memref<9x4x8xbf16, #tpu.memory_space<vmem>>, vector<1x4x8xbf16>
    %44 = vector.shape_cast %43 : vector<1x4x8xbf16> to vector<4x8xbf16>
    %cst_54 = arith.constant dense<0.000000e+00> : vector<512x8xf32>
    %45 = tpu.matmul %42, %44, %cst_54 {dimension_numbers = #tpu.dot_dimension_numbers<[1], [0], [0], [1], [0, 0, 1, 1], [], []>} : vector<512x4xbf16>, vector<4x8xbf16>, vector<512x8xf32> -> vector<512x8xf32>
    %46 = arith.addf %39, %45 : vector<512x8xf32>
    %c0_55 = arith.constant 0 : index
    %c2_56 = arith.constant 2 : index
    %c0_57 = arith.constant 0 : index
    %c0_58 = arith.constant 0 : index
    %47 = vector.load %arg5[%c0_55, %c2_56, %c0_57, %c0_58] : memref<2x18x18x4xf32, #tpu.memory_space<vmem>>, vector<2x16x16x4xf32>
    %48 = vector.shape_cast %47 : vector<2x16x16x4xf32> to vector<512x4xf32>
    %49 = arith.truncf %48 : vector<512x4xf32> to vector<512x4xbf16>
    %c6 = arith.constant 6 : index
    %c0_59 = arith.constant 0 : index
    %c0_60 = arith.constant 0 : index
    %50 = vector.load %arg2[%c6, %c0_59, %c0_60] : memref<9x4x8xbf16, #tpu.memory_space<vmem>>, vector<1x4x8xbf16>
    %51 = vector.shape_cast %50 : vector<1x4x8xbf16> to vector<4x8xbf16>
    %cst_61 = arith.constant dense<0.000000e+00> : vector<512x8xf32>
    %52 = tpu.matmul %49, %51, %cst_61 {dimension_numbers = #tpu.dot_dimension_numbers<[1], [0], [0], [1], [0, 0, 1, 1], [], []>} : vector<512x4xbf16>, vector<4x8xbf16>, vector<512x8xf32> -> vector<512x8xf32>
    %53 = arith.addf %46, %52 : vector<512x8xf32>
    %c0_62 = arith.constant 0 : index
    %c2_63 = arith.constant 2 : index
    %c1_64 = arith.constant 1 : index
    %c0_65 = arith.constant 0 : index
    %54 = vector.load %arg5[%c0_62, %c2_63, %c1_64, %c0_65] : memref<2x18x18x4xf32, #tpu.memory_space<vmem>>, vector<2x16x16x4xf32>
    %55 = vector.shape_cast %54 : vector<2x16x16x4xf32> to vector<512x4xf32>
    %56 = arith.truncf %55 : vector<512x4xf32> to vector<512x4xbf16>
    %c7 = arith.constant 7 : index
    %c0_66 = arith.constant 0 : index
    %c0_67 = arith.constant 0 : index
    %57 = vector.load %arg2[%c7, %c0_66, %c0_67] : memref<9x4x8xbf16, #tpu.memory_space<vmem>>, vector<1x4x8xbf16>
    %58 = vector.shape_cast %57 : vector<1x4x8xbf16> to vector<4x8xbf16>
    %cst_68 = arith.constant dense<0.000000e+00> : vector<512x8xf32>
    %59 = tpu.matmul %56, %58, %cst_68 {dimension_numbers = #tpu.dot_dimension_numbers<[1], [0], [0], [1], [0, 0, 1, 1], [], []>} : vector<512x4xbf16>, vector<4x8xbf16>, vector<512x8xf32> -> vector<512x8xf32>
    %60 = arith.addf %53, %59 : vector<512x8xf32>
    %c0_69 = arith.constant 0 : index
    %c2_70 = arith.constant 2 : index
    %c2_71 = arith.constant 2 : index
    %c0_72 = arith.constant 0 : index
    %61 = vector.load %arg5[%c0_69, %c2_70, %c2_71, %c0_72] : memref<2x18x18x4xf32, #tpu.memory_space<vmem>>, vector<2x16x16x4xf32>
    %62 = vector.shape_cast %61 : vector<2x16x16x4xf32> to vector<512x4xf32>
    %63 = arith.truncf %62 : vector<512x4xf32> to vector<512x4xbf16>
    %c8 = arith.constant 8 : index
    %c0_73 = arith.constant 0 : index
    %c0_74 = arith.constant 0 : index
    %64 = vector.load %arg2[%c8, %c0_73, %c0_74] : memref<9x4x8xbf16, #tpu.memory_space<vmem>>, vector<1x4x8xbf16>
    %65 = vector.shape_cast %64 : vector<1x4x8xbf16> to vector<4x8xbf16>
    %cst_75 = arith.constant dense<0.000000e+00> : vector<512x8xf32>
    %66 = tpu.matmul %63, %65, %cst_75 {dimension_numbers = #tpu.dot_dimension_numbers<[1], [0], [0], [1], [0, 0, 1, 1], [], []>} : vector<512x4xbf16>, vector<4x8xbf16>, vector<512x8xf32> -> vector<512x8xf32>
    %67 = arith.addf %60, %66 : vector<512x8xf32>
    %c0_76 = arith.constant 0 : index
    %c0_77 = arith.constant 0 : index
    %68 = vector.load %arg3[%c0_76, %c0_77] : memref<1x8xf32, #tpu.memory_space<vmem>>, vector<1x8xf32>
    %69 = vector.broadcast %68 : vector<1x8xf32> to vector<512x8xf32>
    %70 = arith.addf %67, %69 : vector<512x8xf32>
    %cst_78 = arith.constant 0.000000e+00 : f32
    %71 = vector.broadcast %cst_78 : f32 to vector<512x8xf32>
    %72 = arith.maximumf %70, %71 : vector<512x8xf32>
    %73 = vector.shape_cast %72 : vector<512x8xf32> to vector<2x16x16x8xf32>
    %c0_79 = arith.constant 0 : index
    %c0_80 = arith.constant 0 : index
    %c0_81 = arith.constant 0 : index
    %c0_82 = arith.constant 0 : index
    %74 = vector.load %arg4[%c0_79, %c0_80, %c0_81, %c0_82] : memref<2x16x16x8xf32, #tpu.memory_space<vmem>>, vector<2x16x16x8xf32>
    tpu.vector_store %arg4[%c0_79, %c0_80, %c0_81, %c0_82], %73 {strides = array<i32>} : memref<2x16x16x8xf32, #tpu.memory_space<vmem>>, vector<2x16x16x8xf32>,
    return
  }
  func.func @transform_0(%arg0: i32) -> (i32, i32, i32, i32) {
    %c0_i32 = arith.constant 0 : i32
    %c0_i32_0 = arith.constant 0 : i32
    %c0_i32_1 = arith.constant 0 : i32
    %c0_i32_2 = arith.constant 0 : i32
    return %arg0, %c0_i32, %c0_i32_0, %c0_i32_1 : i32, i32, i32, i32
  }
  func.func @transform_1(%arg0: i32) -> (i32, i32, i32) {
    %c0_i32 = arith.constant 0 : i32
    %c0_i32_0 = arith.constant 0 : i32
    %c0_i32_1 = arith.constant 0 : i32
    %c0_i32_2 = arith.constant 0 : i32
    return %c0_i32, %c0_i32_0, %c0_i32_1 : i32, i32, i32
  }
  func.func @transform_2(%arg0: i32) -> (i32, i32) {
    %c0_i32 = arith.constant 0 : i32
    %c0_i32_0 = arith.constant 0 : i32
    %c0_i32_1 = arith.constant 0 : i32
    return %c0_i32, %c0_i32_0 : i32, i32
  }
  func.func @transform_3(%arg0: i32) -> (i32, i32, i32, i32) {
    %c0_i32 = arith.constant 0 : i32
    %c0_i32_0 = arith.constant 0 : i32
    %c0_i32_1 = arith.constant 0 : i32
    %c0_i32_2 = arith.constant 0 : i32
    return %arg0, %c0_i32, %c0_i32_0, %c0_i32_1 : i32, i32, i32, i32
  }
}

</mosaic_0001>

<llo_original>
// kernel: tpu_custom_call.1
$region0: #{tpu_custom_call.1}
  #allocation0 [shape = 'u32[]', space=smem, size = 0x4, offset = 0x4, fixed_abs, tag = 'smem constant byte address 0x4 - core index']
  #allocation1 [shape = 'u32[144,128]{1,0:T(1,128)}', space=vmem, size = 0x12000, scoped, tag = 'internal scratch']
  #allocation2 [shape = 'f32[2,18,18,4]{3,2,1,0:T(8,128)}', space=vmem, size = 0x6c000, scoped, tag = 'scratch operand']
  %s0 = inlined_call_operand.vmem [shape: f32[2,16,16,4], index: 0, kind: input, shape index: {}]
  %s1 = inlined_call_operand.vmem [shape: bf16[9,4,8], index: 1, kind: input, shape index: {}]
  %s2 = inlined_call_operand.vmem [shape: f32[1,8], index: 2, kind: input, shape index: {}]
  %s3 = inlined_call_operand.vmem [shape: f32[2,16,16,8], index: 3, kind: output, shape index: {}]
  %s4 = sld [smem:[#allocation0]]
  $region22: #{tpu_custom_call.1} parent=0
    _
  %s6 = ssub.s32 1, %s4
  %s7 = scalar_select 0, %s6, %s4
  // Predicated region
  $region2: #{tpu_custom_call.1} parent=0 // pred_check
    _
  $region3: #{tpu_custom_call.1} parent=0 // pred_check_branch
    %9 = sbr.rel (0) target = $region5
  $region4: #{tpu_custom_call.1} parent=0 // pred_region
    _
  $region5: #{tpu_custom_call.1} parent=0 // pred_fallthru
    _
  // Predicated region
  $region6: #{tpu_custom_call.1} parent=0 // pred_check
    _
  $region7: #{tpu_custom_call.1} parent=0 // pred_check_branch
    %11 = sbr.rel (0) target = $region9
  $region8: #{tpu_custom_call.1} parent=0 // pred_region
    _
  $region9: #{tpu_custom_call.1} parent=0 // pred_fallthru
    _
  // Predicated region
  $region10: #{tpu_custom_call.1} parent=0 // pred_check
    _
  $region11: #{tpu_custom_call.1} parent=0 // pred_check_branch
    %13 = sbr.rel (0) target = $region13
  $region12: #{tpu_custom_call.1} parent=0 // pred_region
    _
  $region13: #{tpu_custom_call.1} parent=0 // pred_fallthru
    _
  %vm15 = vcmask 31744
  %16 = vst.msk [vmem:[#allocation2] sm:$0xff] %vm15, 0.0
  %17 = vst.msk [vmem:[#allocation2 + $0x8] sm:$0xff] %vm15, 0.0
  %vm18 = vcmask 25600
  %19 = vst.msk [vmem:[#allocation2 + $0x10] sm:$0x3] %vm18, 0.0
  %20 = vst.msk [vmem:[#allocation2 + $0x18] sm:$0xff] %vm15, 0.0
  %21 = vst.msk [vmem:[#allocation2 + $0x20] sm:$0xff] %vm15, 0.0
  %22 = vst.msk [vmem:[#allocation2 + $0x28] sm:$0x3] %vm18, 0.0
  %23 = vst.msk [vmem:[#allocation2 + $0x30] sm:$0xff] %vm15, 0.0
  %24 = vst.msk [vmem:[#allocation2 + $0x38] sm:$0xff] %vm15, 0.0
  %25 = vst.msk [vmem:[#allocation2 + $0x40] sm:$0x3] %vm18, 0.0
  %26 = vst.msk [vmem:[#allocation2 + $0x48] sm:$0xff] %vm15, 0.0
  %27 = vst.msk [vmem:[#allocation2 + $0x50] sm:$0xff] %vm15, 0.0
  %28 = vst.msk [vmem:[#allocation2 + $0x58] sm:$0x3] %vm18, 0.0
  %29 = vst.msk [vmem:[#allocation2 + $0x60] sm:$0xff] %vm15, 0.0
  %30 = vst.msk [vmem:[#allocation2 + $0x68] sm:$0xff] %vm15, 0.0
  %31 = vst.msk [vmem:[#allocation2 + $0x70] sm:$0x3] %vm18, 0.0
  %32 = vst.msk [vmem:[#allocation2 + $0x78] sm:$0xff] %vm15, 0.0
  %33 = vst.msk [vmem:[#allocation2 + $0x80] sm:$0xff] %vm15, 0.0
  %34 = vst.msk [vmem:[#allocation2 + $0x88] sm:$0x3] %vm18, 0.0
  %35 = vst.msk [vmem:[#allocation2 + $0x90] sm:$0xff] %vm15, 0.0
  %36 = vst.msk [vmem:[#allocation2 + $0x98] sm:$0xff] %vm15, 0.0
  %37 = vst.msk [vmem:[#allocation2 + $0xa0] sm:$0x3] %vm18, 0.0
  %38 = vst.msk [vmem:[#allocation2 + $0xa8] sm:$0xff] %vm15, 0.0
  %39 = vst.msk [vmem:[#allocation2 + $0xb0] sm:$0xff] %vm15, 0.0
  %40 = vst.msk [vmem:[#allocation2 + $0xb8] sm:$0x3] %vm18, 0.0
  %41 = vst.msk [vmem:[#allocation2 + $0xc0] sm:$0xff] %vm15, 0.0
  %42 = vst.msk [vmem:[#allocation2 + $0xc8] sm:$0xff] %vm15, 0.0
  %43 = vst.msk [vmem:[#allocation2 + $0xd0] sm:$0x3] %vm18, 0.0
  %44 = vst.msk [vmem:[#allocation2 + $0xd8] sm:$0xff] %vm15, 0.0
  %45 = vst.msk [vmem:[#allocation2 + $0xe0] sm:$0xff] %vm15, 0.0
  %46 = vst.msk [vmem:[#allocation2 + $0xe8] sm:$0x3] %vm18, 0.0
  %47 = vst.msk [vmem:[#allocation2 + $0xf0] sm:$0xff] %vm15, 0.0
  %48 = vst.msk [vmem:[#allocation2 + $0xf8] sm:$0xff] %vm15, 0.0
  %49 = vst.msk [vmem:[#allocation2 + $0x100] sm:$0x3] %vm18, 0.0
  %50 = vst.msk [vmem:[#allocation2 + $0x108] sm:$0xff] %vm15, 0.0
  %51 = vst.msk [vmem:[#allocation2 + $0x110] sm:$0xff] %vm15, 0.0
  %52 = vst.msk [vmem:[#allocation2 + $0x118] sm:$0x3] %vm18, 0.0
  %53 = vst.msk [vmem:[#allocation2 + $0x120] sm:$0xff] %vm15, 0.0
  %54 = vst.msk [vmem:[#allocation2 + $0x128] sm:$0xff] %vm15, 0.0
  %55 = vst.msk [vmem:[#allocation2 + $0x130] sm:$0x3] %vm18, 0.0
  %56 = vst.msk [vmem:[#allocation2 + $0x138] sm:$0xff] %vm15, 0.0
  %57 = vst.msk [vmem:[#allocation2 + $0x140] sm:$0xff] %vm15, 0.0
  %58 = vst.msk [vmem:[#allocation2 + $0x148] sm:$0x3] %vm18, 0.0
  %59 = vst.msk [vmem:[#allocation2 + $0x150] sm:$0xff] %vm15, 0.0
  %60 = vst.msk [vmem:[#allocation2 + $0x158] sm:$0xff] %vm15, 0.0
  %61 = vst.msk [vmem:[#allocation2 + $0x160] sm:$0x3] %vm18, 0.0
  %62 = vst.msk [vmem:[#allocation2 + $0x168] sm:$0xff] %vm15, 0.0
  %63 = vst.msk [vmem:[#allocation2 + $0x170] sm:$0xff] %vm15, 0.0
  %64 = vst.msk [vmem:[#allocation2 + $0x178] sm:$0x3] %vm18, 0.0
  %65 = vst.msk [vmem:[#allocation2 + $0x180] sm:$0xff] %vm15, 0.0
  %66 = vst.msk [vmem:[#allocation2 + $0x188] sm:$0xff] %vm15, 0.0
  %67 = vst.msk [vmem:[#allocation2 + $0x190] sm:$0x3] %vm18, 0.0
  %68 = vst.msk [vmem:[#allocation2 + $0x198] sm:$0xff] %vm15, 0.0
  %69 = vst.msk [vmem:[#allocation2 + $0x1a0] sm:$0xff] %vm15, 0.0
  %70 = vst.msk [vmem:[#allocation2 + $0x1a8] sm:$0x3] %vm18, 0.0
  %71 = vst.msk [vmem:[#allocation2 + $0x1b0] sm:$0xff] %vm15, 0.0
  %72 = vst.msk [vmem:[#allocation2 + $0x1b8] sm:$0xff] %vm15, 0.0
  %73 = vst.msk [vmem:[#allocation2 + $0x1c0] sm:$0x3] %vm18, 0.0
  %74 = vst.msk [vmem:[#allocation2 + $0x1c8] sm:$0xff] %vm15, 0.0
  %75 = vst.msk [vmem:[#allocation2 + $0x1d0] sm:$0xff] %vm15, 0.0
  %76 = vst.msk [vmem:[#allocation2 + $0x1d8] sm:$0x3] %vm18, 0.0
  %77 = vst.msk [vmem:[#allocation2 + $0x1e0] sm:$0xff] %vm15, 0.0
  %78 = vst.msk [vmem:[#allocation2 + $0x1e8] sm:$0xff] %vm15, 0.0
  %79 = vst.msk [vmem:[#allocation2 + $0x1f0] sm:$0x3] %vm18, 0.0
  %80 = vst.msk [vmem:[#allocation2 + $0x1f8] sm:$0xff] %vm15, 0.0
  %81 = vst.msk [vmem:[#allocation2 + $0x200] sm:$0xff] %vm15, 0.0
  %82 = vst.msk [vmem:[#allocation2 + $0x208] sm:$0x3] %vm18, 0.0
  %83 = vst.msk [vmem:[#allocation2 + $0x210] sm:$0xff] %vm15, 0.0
  %84 = vst.msk [vmem:[#allocation2 + $0x218] sm:$0xff] %vm15, 0.0
  %85 = vst.msk [vmem:[#allocation2 + $0x220] sm:$0x3] %vm18, 0.0
  %86 = vst.msk [vmem:[#allocation2 + $0x228] sm:$0xff] %vm15, 0.0
  %87 = vst.msk [vmem:[#allocation2 + $0x230] sm:$0xff] %vm15, 0.0
  %88 = vst.msk [vmem:[#allocation2 + $0x238] sm:$0x3] %vm18, 0.0
  %89 = vst.msk [vmem:[#allocation2 + $0x240] sm:$0xff] %vm15, 0.0
  %90 = vst.msk [vmem:[#allocation2 + $0x248] sm:$0xff] %vm15, 0.0
  %91 = vst.msk [vmem:[#allocation2 + $0x250] sm:$0x3] %vm18, 0.0
  %92 = vst.msk [vmem:[#allocation2 + $0x258] sm:$0xff] %vm15, 0.0
  %93 = vst.msk [vmem:[#allocation2 + $0x260] sm:$0xff] %vm15, 0.0
  %94 = vst.msk [vmem:[#allocation2 + $0x268] sm:$0x3] %vm18, 0.0
  %95 = vst.msk [vmem:[#allocation2 + $0x270] sm:$0xff] %vm15, 0.0
  %96 = vst.msk [vmem:[#allocation2 + $0x278] sm:$0xff] %vm15, 0.0
  %97 = vst.msk [vmem:[#allocation2 + $0x280] sm:$0x3] %vm18, 0.0
  %98 = vst.msk [vmem:[#allocation2 + $0x288] sm:$0xff] %vm15, 0.0
  %99 = vst.msk [vmem:[#allocation2 + $0x290] sm:$0xff] %vm15, 0.0
  %100 = vst.msk [vmem:[#allocation2 + $0x298] sm:$0x3] %vm18, 0.0
  %101 = vst.msk [vmem:[#allocation2 + $0x2a0] sm:$0xff] %vm15, 0.0
  %102 = vst.msk [vmem:[#allocation2 + $0x2a8] sm:$0xff] %vm15, 0.0
  %103 = vst.msk [vmem:[#allocation2 + $0x2b0] sm:$0x3] %vm18, 0.0
  %104 = vst.msk [vmem:[#allocation2 + $0x2b8] sm:$0xff] %vm15, 0.0
  %105 = vst.msk [vmem:[#allocation2 + $0x2c0] sm:$0xff] %vm15, 0.0
  %106 = vst.msk [vmem:[#allocation2 + $0x2c8] sm:$0x3] %vm18, 0.0
  %107 = vst.msk [vmem:[#allocation2 + $0x2d0] sm:$0xff] %vm15, 0.0
  %108 = vst.msk [vmem:[#allocation2 + $0x2d8] sm:$0xff] %vm15, 0.0
  %109 = vst.msk [vmem:[#allocation2 + $0x2e0] sm:$0x3] %vm18, 0.0
  %110 = vst.msk [vmem:[#allocation2 + $0x2e8] sm:$0xff] %vm15, 0.0
  %111 = vst.msk [vmem:[#allocation2 + $0x2f0] sm:$0xff] %vm15, 0.0
  %112 = vst.msk [vmem:[#allocation2 + $0x2f8] sm:$0x3] %vm18, 0.0
  %113 = vst.msk [vmem:[#allocation2 + $0x300] sm:$0xff] %vm15, 0.0
  %114 = vst.msk [vmem:[#allocation2 + $0x308] sm:$0xff] %vm15, 0.0
  %115 = vst.msk [vmem:[#allocation2 + $0x310] sm:$0x3] %vm18, 0.0
  %116 = vst.msk [vmem:[#allocation2 + $0x318] sm:$0xff] %vm15, 0.0
  %117 = vst.msk [vmem:[#allocation2 + $0x320] sm:$0xff] %vm15, 0.0
  %118 = vst.msk [vmem:[#allocation2 + $0x328] sm:$0x3] %vm18, 0.0
  %119 = vst.msk [vmem:[#allocation2 + $0x330] sm:$0xff] %vm15, 0.0
  %120 = vst.msk [vmem:[#allocation2 + $0x338] sm:$0xff] %vm15, 0.0
  %121 = vst.msk [vmem:[#allocation2 + $0x340] sm:$0x3] %vm18, 0.0
  %122 = vst.msk [vmem:[#allocation2 + $0x348] sm:$0xff] %vm15, 0.0
  %123 = vst.msk [vmem:[#allocation2 + $0x350] sm:$0xff] %vm15, 0.0
  %124 = vst.msk [vmem:[#allocation2 + $0x358] sm:$0x3] %vm18, 0.0
  %v125 = vld [vmem:[%s0] sm:$0xff]
  %v126 = vld [vmem:[%s0 + $0x8] sm:$0xff]
  %v127 = vld [vmem:[%s0 + $0x10] sm:$0xff]
  %v128 = vld [vmem:[%s0 + $0x18] sm:$0xff]
  %v129 = vld [vmem:[%s0 + $0x20] sm:$0xff]
  %v130 = vld [vmem:[%s0 + $0x28] sm:$0xff]
  %v131 = vld [vmem:[%s0 + $0x30] sm:$0xff]
  %v132 = vld [vmem:[%s0 + $0x38] sm:$0xff]
  %v133 = vld [vmem:[%s0 + $0x40] sm:$0xff]
  %v134 = vld [vmem:[%s0 + $0x48] sm:$0xff]
  %v135 = vld [vmem:[%s0 + $0x50] sm:$0xff]
  %v136 = vld [vmem:[%s0 + $0x58] sm:$0xff]
  %v137 = vld [vmem:[%s0 + $0x60] sm:$0xff]
  %v138 = vld [vmem:[%s0 + $0x68] sm:$0xff]
  %v139 = vld [vmem:[%s0 + $0x70] sm:$0xff]
  %v140 = vld [vmem:[%s0 + $0x78] sm:$0xff]
  %v141 = vld [vmem:[%s0 + $0x80] sm:$0xff]
  %v142 = vld [vmem:[%s0 + $0x88] sm:$0xff]
  %v143 = vld [vmem:[%s0 + $0x90] sm:$0xff]
  %v144 = vld [vmem:[%s0 + $0x98] sm:$0xff]
  %v145 = vld [vmem:[%s0 + $0xa0] sm:$0xff]
  %v146 = vld [vmem:[%s0 + $0xa8] sm:$0xff]
  %v147 = vld [vmem:[%s0 + $0xb0] sm:$0xff]
  %v148 = vld [vmem:[%s0 + $0xb8] sm:$0xff]
  %v149 = vld [vmem:[%s0 + $0xc0] sm:$0xff]
  %v150 = vld [vmem:[%s0 + $0xc8] sm:$0xff]
  %v151 = vld [vmem:[%s0 + $0xd0] sm:$0xff]
  %v152 = vld [vmem:[%s0 + $0xd8] sm:$0xff]
  %v153 = vld [vmem:[%s0 + $0xe0] sm:$0xff]
  %v154 = vld [vmem:[%s0 + $0xe8] sm:$0xff]
  %v155 = vld [vmem:[%s0 + $0xf0] sm:$0xff]
  %v156 = vld [vmem:[%s0 + $0xf8] sm:$0xff]
  %v157 = vld [vmem:[%s0 + $0x100] sm:$0xff]
  %v158 = vld [vmem:[%s0 + $0x108] sm:$0xff]
  %v159 = vld [vmem:[%s0 + $0x110] sm:$0xff]
  %v160 = vld [vmem:[%s0 + $0x118] sm:$0xff]
  %v161 = vld [vmem:[%s0 + $0x120] sm:$0xff]
  %v162 = vld [vmem:[%s0 + $0x128] sm:$0xff]
  %v163 = vld [vmem:[%s0 + $0x130] sm:$0xff]
  %v164 = vld [vmem:[%s0 + $0x138] sm:$0xff]
  %v165 = vld [vmem:[%s0 + $0x140] sm:$0xff]
  %v166 = vld [vmem:[%s0 + $0x148] sm:$0xff]
  %v167 = vld [vmem:[%s0 + $0x150] sm:$0xff]
  %v168 = vld [vmem:[%s0 + $0x158] sm:$0xff]
  %v169 = vld [vmem:[%s0 + $0x160] sm:$0xff]
  %v170 = vld [vmem:[%s0 + $0x168] sm:$0xff]
  %v171 = vld [vmem:[%s0 + $0x170] sm:$0xff]
  %v172 = vld [vmem:[%s0 + $0x178] sm:$0xff]
  %v173 = vld [vmem:[%s0 + $0x180] sm:$0xff]
  %v174 = vld [vmem:[%s0 + $0x188] sm:$0xff]
  %v175 = vld [vmem:[%s0 + $0x190] sm:$0xff]
  %v176 = vld [vmem:[%s0 + $0x198] sm:$0xff]
  %v177 = vld [vmem:[%s0 + $0x1a0] sm:$0xff]
  %v178 = vld [vmem:[%s0 + $0x1a8] sm:$0xff]
  %v179 = vld [vmem:[%s0 + $0x1b0] sm:$0xff]
  %v180 = vld [vmem:[%s0 + $0x1b8] sm:$0xff]
  %v181 = vld [vmem:[%s0 + $0x1c0] sm:$0xff]
  %v182 = vld [vmem:[%s0 + $0x1c8] sm:$0xff]
  %v183 = vld [vmem:[%s0 + $0x1d0] sm:$0xff]
  %v184 = vld [vmem:[%s0 + $0x1d8] sm:$0xff]
  %v185 = vld [vmem:[%s0 + $0x1e0] sm:$0xff]
  %v186 = vld [vmem:[%s0 + $0x1e8] sm:$0xff]
  %v187 = vld [vmem:[%s0 + $0x1f0] sm:$0xff]
  %v188 = vld [vmem:[%s0 + $0x1f8] sm:$0xff]
  %s189 = scalar_lea.vmem [#allocation2], 24
  %190 = vst.msk [vmem:[%s189 + $0x1] sm:$0xff] %vm15, %v125
  %191 = vst.msk [vmem:[%s189 + $0x9] sm:$0xff] %vm15, %v126
  %192 = vst.msk [vmem:[%s189 + $0x19] sm:$0xff] %vm15, %v127
  %193 = vst.msk [vmem:[%s189 + $0x21] sm:$0xff] %vm15, %v128
  %194 = vst.msk [vmem:[%s189 + $0x31] sm:$0xff] %vm15, %v129
  %195 = vst.msk [vmem:[%s189 + $0x39] sm:$0xff] %vm15, %v130
  %196 = vst.msk [vmem:[%s189 + $0x49] sm:$0xff] %vm15, %v131
  %197 = vst.msk [vmem:[%s189 + $0x51] sm:$0xff] %vm15, %v132
  %198 = vst.msk [vmem:[%s189 + $0x61] sm:$0xff] %vm15, %v133
  %199 = vst.msk [vmem:[%s189 + $0x69] sm:$0xff] %vm15, %v134
  %200 = vst.msk [vmem:[%s189 + $0x79] sm:$0xff] %vm15, %v135
  %201 = vst.msk [vmem:[%s189 + $0x81] sm:$0xff] %vm15, %v136
  %202 = vst.msk [vmem:[%s189 + $0x91] sm:$0xff] %vm15, %v137
  %203 = vst.msk [vmem:[%s189 + $0x99] sm:$0xff] %vm15, %v138
  %204 = vst.msk [vmem:[%s189 + $0xa9] sm:$0xff] %vm15, %v139
  %205 = vst.msk [vmem:[%s189 + $0xb1] sm:$0xff] %vm15, %v140
  %206 = vst.msk [vmem:[%s189 + $0xc1] sm:$0xff] %vm15, %v141
  %207 = vst.msk [vmem:[%s189 + $0xc9] sm:$0xff] %vm15, %v142
  %208 = vst.msk [vmem:[%s189 + $0xd9] sm:$0xff] %vm15, %v143
  %209 = vst.msk [vmem:[%s189 + $0xe1] sm:$0xff] %vm15, %v144
  %210 = vst.msk [vmem:[%s189 + $0xf1] sm:$0xff] %vm15, %v145
  %211 = vst.msk [vmem:[%s189 + $0xf9] sm:$0xff] %vm15, %v146
  %212 = vst.msk [vmem:[%s189 + $0x109] sm:$0xff] %vm15, %v147
  %213 = vst.msk [vmem:[%s189 + $0x111] sm:$0xff] %vm15, %v148
  %214 = vst.msk [vmem:[%s189 + $0x121] sm:$0xff] %vm15, %v149
  %215 = vst.msk [vmem:[%s189 + $0x129] sm:$0xff] %vm15, %v150
  %216 = vst.msk [vmem:[%s189 + $0x139] sm:$0xff] %vm15, %v151
  %217 = vst.msk [vmem:[%s189 + $0x141] sm:$0xff] %vm15, %v152
  %218 = vst.msk [vmem:[%s189 + $0x151] sm:$0xff] %vm15, %v153
  %219 = vst.msk [vmem:[%s189 + $0x159] sm:$0xff] %vm15, %v154
  %220 = vst.msk [vmem:[%s189 + $0x169] sm:$0xff] %vm15, %v155
  %221 = vst.msk [vmem:[%s189 + $0x171] sm:$0xff] %vm15, %v156
  %222 = vst.msk [vmem:[%s189 + $0x1b1] sm:$0xff] %vm15, %v157
  %223 = vst.msk [vmem:[%s189 + $0x1b9] sm:$0xff] %vm15, %v158
  %224 = vst.msk [vmem:[%s189 + $0x1c9] sm:$0xff] %vm15, %v159
  %225 = vst.msk [vmem:[%s189 + $0x1d1] sm:$0xff] %vm15, %v160
  %226 = vst.msk [vmem:[%s189 + $0x1e1] sm:$0xff] %vm15, %v161
  %227 = vst.msk [vmem:[%s189 + $0x1e9] sm:$0xff] %vm15, %v162
  %228 = vst.msk [vmem:[%s189 + $0x1f9] sm:$0xff] %vm15, %v163
  %229 = vst.msk [vmem:[%s189 + $0x201] sm:$0xff] %vm15, %v164
  %230 = vst.msk [vmem:[%s189 + $0x211] sm:$0xff] %vm15, %v165
  %231 = vst.msk [vmem:[%s189 + $0x219] sm:$0xff] %vm15, %v166
  %232 = vst.msk [vmem:[%s189 + $0x229] sm:$0xff] %vm15, %v167
  %233 = vst.msk [vmem:[%s189 + $0x231] sm:$0xff] %vm15, %v168
  %234 = vst.msk [vmem:[%s189 + $0x241] sm:$0xff] %vm15, %v169
  %235 = vst.msk [vmem:[%s189 + $0x249] sm:$0xff] %vm15, %v170
  %236 = vst.msk [vmem:[%s189 + $0x259] sm:$0xff] %vm15, %v171
  %237 = vst.msk [vmem:[%s189 + $0x261] sm:$0xff] %vm15, %v172
  %238 = vst.msk [vmem:[%s189 + $0x271] sm:$0xff] %vm15, %v173
  %239 = vst.msk [vmem:[%s189 + $0x279] sm:$0xff] %vm15, %v174
  %240 = vst.msk [vmem:[%s189 + $0x289] sm:$0xff] %vm15, %v175
  %241 = vst.msk [vmem:[%s189 + $0x291] sm:$0xff] %vm15, %v176
  %242 = vst.msk [vmem:[%s189 + $0x2a1] sm:$0xff] %vm15, %v177
  %243 = vst.msk [vmem:[%s189 + $0x2a9] sm:$0xff] %vm15, %v178
  %244 = vst.msk [vmem:[%s189 + $0x2b9] sm:$0xff] %vm15, %v179
  %245 = vst.msk [vmem:[%s189 + $0x2c1] sm:$0xff] %vm15, %v180
  %246 = vst.msk [vmem:[%s189 + $0x2d1] sm:$0xff] %vm15, %v181
  %247 = vst.msk [vmem:[%s189 + $0x2d9] sm:$0xff] %vm15, %v182
  %248 = vst.msk [vmem:[%s189 + $0x2e9] sm:$0xff] %vm15, %v183
  %249 = vst.msk [vmem:[%s189 + $0x2f1] sm:$0xff] %vm15, %v184
  %250 = vst.msk [vmem:[%s189 + $0x301] sm:$0xff] %vm15, %v185
  %251 = vst.msk [vmem:[%s189 + $0x309] sm:$0xff] %vm15, %v186
  %252 = vst.msk [vmem:[%s189 + $0x319] sm:$0xff] %vm15, %v187
  %253 = vst.msk [vmem:[%s189 + $0x321] sm:$0xff] %vm15, %v188
  %v254 = vld [vmem:[#allocation2] sm:$0xff]
  %v255 = vld [vmem:[#allocation2 + $0x8] sm:$0xff]
  %v256 = vld [vmem:[#allocation2 + $0x18] sm:$0xff]
  %v257 = vld [vmem:[#allocation2 + $0x20] sm:$0xff]
  %v258 = vld [vmem:[#allocation2 + $0x30] sm:$0xff]
  %v259 = vld [vmem:[#allocation2 + $0x38] sm:$0xff]
  %v260 = vld [vmem:[#allocation2 + $0x48] sm:$0xff]
  %v261 = vld [vmem:[#allocation2 + $0x50] sm:$0xff]
  %v262 = vld [vmem:[#allocation2 + $0x60] sm:$0xff]
  %v263 = vld [vmem:[#allocation2 + $0x68] sm:$0xff]
  %v264 = vld [vmem:[#allocation2 + $0x78] sm:$0xff]
  %v265 = vld [vmem:[#allocation2 + $0x80] sm:$0xff]
  %v266 = vld [vmem:[#allocation2 + $0x90] sm:$0xff]
  %v267 = vld [vmem:[#allocation2 + $0x98] sm:$0xff]
  %v268 = vld [vmem:[#allocation2 + $0xa8] sm:$0xff]
  %v269 = vld [vmem:[#allocation2 + $0xb0] sm:$0xff]
  %v270 = vld [vmem:[#allocation2 + $0xc0] sm:$0xff]
  %v271 = vld [vmem:[#allocation2 + $0xc8] sm:$0xff]
  %v272 = vld [vmem:[#allocation2 + $0xd8] sm:$0xff]
  %v273 = vld [vmem:[#allocation2 + $0xe0] sm:$0xff]
  %v274 = vld [vmem:[#allocation2 + $0xf0] sm:$0xff]
  %v275 = vld [vmem:[#allocation2 + $0xf8] sm:$0xff]
  %v276 = vld [vmem:[#allocation2 + $0x108] sm:$0xff]
  %v277 = vld [vmem:[#allocation2 + $0x110] sm:$0xff]
  %v278 = vld [vmem:[#allocation2 + $0x120] sm:$0xff]
  %v279 = vld [vmem:[#allocation2 + $0x128] sm:$0xff]
  %v280 = vld [vmem:[#allocation2 + $0x138] sm:$0xff]
  %v281 = vld [vmem:[#allocation2 + $0x140] sm:$0xff]
  %v282 = vld [vmem:[#allocation2 + $0x150] sm:$0xff]
  %v283 = vld [vmem:[#allocation2 + $0x158] sm:$0xff]
  %v284 = vld [vmem:[#allocation2 + $0x168] sm:$0xff]
  %v285 = vld [vmem:[#allocation2 + $0x170] sm:$0xff]
  %v286 = vld [vmem:[#allocation2 + $0x1b0] sm:$0xff]
  %v287 = vld [vmem:[#allocation2 + $0x1b8] sm:$0xff]
  %v288 = vld [vmem:[#allocation2 + $0x1c8] sm:$0xff]
  %v289 = vld [vmem:[#allocation2 + $0x1d0] sm:$0xff]
  %v290 = vld [vmem:[#allocation2 + $0x1e0] sm:$0xff]
  %v291 = vld [vmem:[#allocation2 + $0x1e8] sm:$0xff]
  %v292 = vld [vmem:[#allocation2 + $0x1f8] sm:$0xff]
  %v293 = vld [vmem:[#allocation2 + $0x200] sm:$0xff]
  %v294 = vld [vmem:[#allocation2 + $0x210] sm:$0xff]
  %v295 = vld [vmem:[#allocation2 + $0x218] sm:$0xff]
  %v296 = vld [vmem:[#allocation2 + $0x228] sm:$0xff]
  %v297 = vld [vmem:[#allocation2 + $0x230] sm:$0xff]
  %v298 = vld [vmem:[#allocation2 + $0x240] sm:$0xff]
  %v299 = vld [vmem:[#allocation2 + $0x248] sm:$0xff]
  %v300 = vld [vmem:[#allocation2 + $0x258] sm:$0xff]
  %v301 = vld [vmem:[#allocation2 + $0x260] sm:$0xff]
  %v302 = vld [vmem:[#allocation2 + $0x270] sm:$0xff]
  %v303 = vld [vmem:[#allocation2 + $0x278] sm:$0xff]
  %v304 = vld [vmem:[#allocation2 + $0x288] sm:$0xff]
  %v305 = vld [vmem:[#allocation2 + $0x290] sm:$0xff]
  %v306 = vld [vmem:[#allocation2 + $0x2a0] sm:$0xff]
  %v307 = vld [vmem:[#allocation2 + $0x2a8] sm:$0xff]
  %v308 = vld [vmem:[#allocation2 + $0x2b8] sm:$0xff]
  %v309 = vld [vmem:[#allocation2 + $0x2c0] sm:$0xff]
  %v310 = vld [vmem:[#allocation2 + $0x2d0] sm:$0xff]
  %v311 = vld [vmem:[#allocation2 + $0x2d8] sm:$0xff]
  %v312 = vld [vmem:[#allocation2 + $0x2e8] sm:$0xff]
  %v313 = vld [vmem:[#allocation2 + $0x2f0] sm:$0xff]
  %v314 = vld [vmem:[#allocation2 + $0x300] sm:$0xff]
  %v315 = vld [vmem:[#allocation2 + $0x308] sm:$0xff]
  %v316 = vld [vmem:[#allocation2 + $0x318] sm:$0xff]
  %v317 = vld [vmem:[#allocation2 + $0x320] sm:$0xff]
  %v318 = vpack.c.bf16 %v255, %v254
  %v319 = vpack.c.bf16 %v257, %v256
  %v320 = vpack.c.bf16 %v259, %v258
  %v321 = vpack.c.bf16 %v261, %v260
  %v322 = vpack.c.bf16 %v263, %v262
  %v323 = vpack.c.bf16 %v265, %v264
  %v324 = vpack.c.bf16 %v267, %v266
  %v325 = vpack.c.bf16 %v269, %v268
  %v326 = vpack.c.bf16 %v271, %v270
  %v327 = vpack.c.bf16 %v273, %v272
  %v328 = vpack.c.bf16 %v275, %v274
  %v329 = vpack.c.bf16 %v277, %v276
  %v330 = vpack.c.bf16 %v279, %v278
  %v331 = vpack.c.bf16 %v281, %v280
  %v332 = vpack.c.bf16 %v283, %v282
  %v333 = vpack.c.bf16 %v285, %v284
  %v334 = vpack.c.bf16 %v287, %v286
  %v335 = vpack.c.bf16 %v289, %v288
  %v336 = vpack.c.bf16 %v291, %v290
  %v337 = vpack.c.bf16 %v293, %v292
  %v338 = vpack.c.bf16 %v295, %v294
  %v339 = vpack.c.bf16 %v297, %v296
  %v340 = vpack.c.bf16 %v299, %v298
  %v341 = vpack.c.bf16 %v301, %v300
  %v342 = vpack.c.bf16 %v303, %v302
  %v343 = vpack.c.bf16 %v305, %v304
  %v344 = vpack.c.bf16 %v307, %v306
  %v345 = vpack.c.bf16 %v309, %v308
  %v346 = vpack.c.bf16 %v311, %v310
  %v347 = vpack.c.bf16 %v313, %v312
  %v348 = vpack.c.bf16 %v315, %v314
  %v349 = vpack.c.bf16 %v317, %v316
  %v350 = vld [vmem:[%s1] sm:$0x3]
  %v351 = vld [vmem:[#allocation2 + $0x1] sm:$0xff]
  %v352 = vld [vmem:[#allocation2 + $0x9] sm:$0xff]
  %v353 = vld [vmem:[#allocation2 + $0x19] sm:$0xff]
  %v354 = vld [vmem:[#allocation2 + $0x21] sm:$0xff]
  %v355 = vld [vmem:[#allocation2 + $0x31] sm:$0xff]
  %v356 = vld [vmem:[#allocation2 + $0x39] sm:$0xff]
  %v357 = vld [vmem:[#allocation2 + $0x49] sm:$0xff]
  %v358 = vld [vmem:[#allocation2 + $0x51] sm:$0xff]
  %v359 = vld [vmem:[#allocation2 + $0x61] sm:$0xff]
  %v360 = vld [vmem:[#allocation2 + $0x69] sm:$0xff]
  %v361 = vld [vmem:[#allocation2 + $0x79] sm:$0xff]
  %v362 = vld [vmem:[#allocation2 + $0x81] sm:$0xff]
  %v363 = vld [vmem:[#allocation2 + $0x91] sm:$0xff]
  %v364 = vld [vmem:[#allocation2 + $0x99] sm:$0xff]
  %v365 = vld [vmem:[#allocation2 + $0xa9] sm:$0xff]
  %v366 = vld [vmem:[#allocation2 + $0xb1] sm:$0xff]
  %v367 = vld [vmem:[#allocation2 + $0xc1] sm:$0xff]
  %v368 = vld [vmem:[#allocation2 + $0xc9] sm:$0xff]
  %v369 = vld [vmem:[#allocation2 + $0xd9] sm:$0xff]
  %v370 = vld [vmem:[#allocation2 + $0xe1] sm:$0xff]
  %v371 = vld [vmem:[#allocation2 + $0xf1] sm:$0xff]
  %v372 = vld [vmem:[#allocation2 + $0xf9] sm:$0xff]
  %v373 = vld [vmem:[#allocation2 + $0x109] sm:$0xff]
  %v374 = vld [vmem:[#allocation2 + $0x111] sm:$0xff]
  %v375 = vld [vmem:[#allocation2 + $0x121] sm:$0xff]
  %v376 = vld [vmem:[#allocation2 + $0x129] sm:$0xff]
  %v377 = vld [vmem:[#allocation2 + $0x139] sm:$0xff]
  %v378 = vld [vmem:[#allocation2 + $0x141] sm:$0xff]
  %v379 = vld [vmem:[#allocation2 + $0x151] sm:$0xff]
  %v380 = vld [vmem:[#allocation2 + $0x159] sm:$0xff]
  %v381 = vld [vmem:[#allocation2 + $0x169] sm:$0xff]
  %v382 = vld [vmem:[#allocation2 + $0x171] sm:$0xff]
  %v383 = vld [vmem:[#allocation2 + $0x1b1] sm:$0xff]
  %v384 = vld [vmem:[#allocation2 + $0x1b9] sm:$0xff]
  %v385 = vld [vmem:[#allocation2 + $0x1c9] sm:$0xff]
  %v386 = vld [vmem:[#allocation2 + $0x1d1] sm:$0xff]
  %v387 = vld [vmem:[#allocation2 + $0x1e1] sm:$0xff]
  %v388 = vld [vmem:[#allocation2 + $0x1e9] sm:$0xff]
  %v389 = vld [vmem:[#allocation2 + $0x1f9] sm:$0xff]
  %v390 = vld [vmem:[#allocation2 + $0x201] sm:$0xff]
  %v391 = vld [vmem:[#allocation2 + $0x211] sm:$0xff]
  %v392 = vld [vmem:[#allocation2 + $0x219] sm:$0xff]
  %v393 = vld [vmem:[#allocation2 + $0x229] sm:$0xff]
  %v394 = vld [vmem:[#allocation2 + $0x231] sm:$0xff]
  %v395 = vld [vmem:[#allocation2 + $0x241] sm:$0xff]
  %v396 = vld [vmem:[#allocation2 + $0x249] sm:$0xff]
  %v397 = vld [vmem:[#allocation2 + $0x259] sm:$0xff]
  %v398 = vld [vmem:[#allocation2 + $0x261] sm:$0xff]
  %v399 = vld [vmem:[#allocation2 + $0x271] sm:$0xff]
  %v400 = vld [vmem:[#allocation2 + $0x279] sm:$0xff]
  %v401 = vld [vmem:[#allocation2 + $0x289] sm:$0xff]
  %v402 = vld [vmem:[#allocation2 + $0x291] sm:$0xff]
  %v403 = vld [vmem:[#allocation2 + $0x2a1] sm:$0xff]
  %v404 = vld [vmem:[#allocation2 + $0x2a9] sm:$0xff]
  %v405 = vld [vmem:[#allocation2 + $0x2b9] sm:$0xff]
  %v406 = vld [vmem:[#allocation2 + $0x2c1] sm:$0xff]
  %v407 = vld [vmem:[#allocation2 + $0x2d1] sm:$0xff]
  %v408 = vld [vmem:[#allocation2 + $0x2d9] sm:$0xff]
  %v409 = vld [vmem:[#allocation2 + $0x2e9] sm:$0xff]
  %v410 = vld [vmem:[#allocation2 + $0x2f1] sm:$0xff]
  %v411 = vld [vmem:[#allocation2 + $0x301] sm:$0xff]
  %v412 = vld [vmem:[#allocation2 + $0x309] sm:$0xff]
  %v413 = vld [vmem:[#allocation2 + $0x319] sm:$0xff]
  %v414 = vld [vmem:[#allocation2 + $0x321] sm:$0xff]
  %v415 = vpack.c.bf16 %v352, %v351
  %v416 = vpack.c.bf16 %v354, %v353
  %v417 = vpack.c.bf16 %v356, %v355
  %v418 = vpack.c.bf16 %v358, %v357
  %v419 = vpack.c.bf16 %v360, %v359
  %v420 = vpack.c.bf16 %v362, %v361
  %v421 = vpack.c.bf16 %v364, %v363
  %v422 = vpack.c.bf16 %v366, %v365
  %v423 = vpack.c.bf16 %v368, %v367
  %v424 = vpack.c.bf16 %v370, %v369
  %v425 = vpack.c.bf16 %v372, %v371
  %v426 = vpack.c.bf16 %v374, %v373
  %v427 = vpack.c.bf16 %v376, %v375
  %v428 = vpack.c.bf16 %v378, %v377
  %v429 = vpack.c.bf16 %v380, %v379
  %v430 = vpack.c.bf16 %v382, %v381
  %v431 = vpack.c.bf16 %v384, %v383
  %v432 = vpack.c.bf16 %v386, %v385
  %v433 = vpack.c.bf16 %v388, %v387
  %v434 = vpack.c.bf16 %v390, %v389
  %v435 = vpack.c.bf16 %v392, %v391
  %v436 = vpack.c.bf16 %v394, %v393
  %v437 = vpack.c.bf16 %v396, %v395
  %v438 = vpack.c.bf16 %v398, %v397
  %v439 = vpack.c.bf16 %v400, %v399
  %v440 = vpack.c.bf16 %v402, %v401
  %v441 = vpack.c.bf16 %v404, %v403
  %v442 = vpack.c.bf16 %v406, %v405
  %v443 = vpack.c.bf16 %v408, %v407
  %v444 = vpack.c.bf16 %v410, %v409
  %v445 = vpack.c.bf16 %v412, %v411
  %v446 = vpack.c.bf16 %v414, %v413
  %s447 = scalar_lea.vmem %s1, 2
  %v448 = vld [vmem:[%s447] sm:$0x3]
  %v450 = vsel %vm15, %v415, 0
  %v453 = vsel %vm15, %v416, 0
  %v456 = vsel %vm15, %v417, 0
  %v459 = vsel %vm15, %v418, 0
  %v462 = vsel %vm15, %v419, 0
  %v465 = vsel %vm15, %v420, 0
  %v468 = vsel %vm15, %v421, 0
  %v471 = vsel %vm15, %v422, 0
  %v474 = vsel %vm15, %v423, 0
  %v477 = vsel %vm15, %v424, 0
  %v480 = vsel %vm15, %v425, 0
  %v483 = vsel %vm15, %v426, 0
  %v486 = vsel %vm15, %v427, 0
  %v489 = vsel %vm15, %v428, 0
  %v492 = vsel %vm15, %v429, 0
  %v495 = vsel %vm15, %v430, 0
  %v498 = vsel %vm15, %v431, 0
  %v501 = vsel %vm15, %v432, 0
  %v504 = vsel %vm15, %v433, 0
  %v507 = vsel %vm15, %v434, 0
  %v510 = vsel %vm15, %v435, 0
  %v513 = vsel %vm15, %v436, 0
  %v516 = vsel %vm15, %v437, 0
  %v519 = vsel %vm15, %v438, 0
  %v522 = vsel %vm15, %v439, 0
  %v525 = vsel %vm15, %v440, 0
  %v528 = vsel %vm15, %v441, 0
  %v531 = vsel %vm15, %v442, 0
  %v534 = vsel %vm15, %v443, 0
  %v537 = vsel %vm15, %v444, 0
  %v540 = vsel %vm15, %v445, 0
  %v543 = vsel %vm15, %v446, 0
  %vm545 = vcmask 1041408
  %v547 = vsel %vm545, %v448, 0
  %549 = vmatprep.subr.bf16.mxu0 0
  %550 = vmatpush1.bf16.msra.mxu0 %v547
  %551 = vmatprep.subr.bf16.mxu0 0
  %552 = vmatpush1.bf16.msra.mxu0 0
  %553 = vmatprep.subr.bf16.mxu0 0
  %554 = vmatpush1.bf16.msra.mxu0 0
  %555 = vmatprep.subr.bf16.mxu0 0
  %556 = vmatpush1.bf16.msra.mxu0 0
  %557 = vmatprep.subr.bf16.mxu0 0
  %558 = vmatpush1.bf16.msra.mxu0 0
  %559 = vmatprep.subr.bf16.mxu0 0
  %560 = vmatpush1.bf16.msra.mxu0 0
  %561 = vmatprep.subr.bf16.mxu0 0
  %562 = vmatpush1.bf16.msra.mxu0 0
  %563 = vmatprep.subr.bf16.mxu0 0
  %564 = vmatpush1.bf16.msra.mxu0 0
  %565 = vmatprep.subr.bf16.mxu0 0
  %566 = vmatpush1.bf16.msra.mxu0 0
  %567 = vmatprep.subr.bf16.mxu0 0
  %568 = vmatpush1.bf16.msra.mxu0 0
  %569 = vmatprep.subr.bf16.mxu0 0
  %570 = vmatpush1.bf16.msra.mxu0 0
  %571 = vmatprep.subr.bf16.mxu0 0
  %572 = vmatpush1.bf16.msra.mxu0 0
  %573 = vmatprep.subr.bf16.mxu0 0
  %574 = vmatpush1.bf16.msra.mxu0 0
  %575 = vmatprep.subr.bf16.mxu0 0
  %576 = vmatpush1.bf16.msra.mxu0 0
  %577 = vmatprep.subr.bf16.mxu0 0
  %578 = vmatpush1.bf16.msra.mxu0 0
  %579 = vmatprep.subr.bf16.mxu0 0
  %580 = vmatpush1.bf16.msra.mxu0 0
  %581 = vmatprep.mubr.bf16.mxu0 0
  %582 = vmatmul.mubr.bf16.gmra.mrb[0].mxu0 %v450
  %v583 = vpop.f32.mrb[0].mxu0
  %v584 = vadd.f32 0.0, %v583
  %v585 = vpop.f32.mrb[0].mxu0
  %v586 = vpop.f32.mrb[0].mxu0
  %v587 = vadd.f32 0.0, %v586
  %v588 = vpop.f32.mrb[0].mxu0
  %589 = vmatprep.mubr.bf16.mxu0 0
  %590 = vmatmul.mubr.bf16.gmra.mrb[0].mxu0 %v453
  %v591 = vpop.f32.mrb[0].mxu0
  %v592 = vadd.f32 0.0, %v591
  %v593 = vpop.f32.mrb[0].mxu0
  %v594 = vpop.f32.mrb[0].mxu0
  %v595 = vadd.f32 0.0, %v594
  %v596 = vpop.f32.mrb[0].mxu0
  %597 = vmatprep.mubr.bf16.mxu0 0
  %598 = vmatmul.mubr.bf16.gmra.mrb[0].mxu0 %v456
  %v599 = vpop.f32.mrb[0].mxu0
  %v600 = vadd.f32 0.0, %v599
  %v601 = vpop.f32.mrb[0].mxu0
  %v602 = vpop.f32.mrb[0].mxu0
  %v603 = vadd.f32 0.0, %v602
  %v604 = vpop.f32.mrb[0].mxu0
  %605 = vmatprep.mubr.bf16.mxu0 0
  %606 = vmatmul.mubr.bf16.gmra.mrb[0].mxu0 %v459
  %v607 = vpop.f32.mrb[0].mxu0
  %v608 = vadd.f32 0.0, %v607
  %v609 = vpop.f32.mrb[0].mxu0
  %v610 = vpop.f32.mrb[0].mxu0
  %v611 = vadd.f32 0.0, %v610
  %v612 = vpop.f32.mrb[0].mxu0
  %613 = vmatprep.mubr.bf16.mxu0 0
  %614 = vmatmul.mubr.bf16.gmra.mrb[0].mxu0 %v462
  %v615 = vpop.f32.mrb[0].mxu0
  %v616 = vadd.f32 0.0, %v615
  %v617 = vpop.f32.mrb[0].mxu0
  %v618 = vpop.f32.mrb[0].mxu0
  %v619 = vadd.f32 0.0, %v618
  %v620 = vpop.f32.mrb[0].mxu0
  %621 = vmatprep.mubr.bf16.mxu0 0
  %622 = vmatmul.mubr.bf16.gmra.mrb[0].mxu0 %v465
  %v623 = vpop.f32.mrb[0].mxu0
  %v624 = vadd.f32 0.0, %v623
  %v625 = vpop.f32.mrb[0].mxu0
  %v626 = vpop.f32.mrb[0].mxu0
  %v627 = vadd.f32 0.0, %v626
  %v628 = vpop.f32.mrb[0].mxu0
  %629 = vmatprep.mubr.bf16.mxu0 0
  %630 = vmatmul.mubr.bf16.gmra.mrb[0].mxu0 %v468
  %v631 = vpop.f32.mrb[0].mxu0
  %v632 = vadd.f32 0.0, %v631
  %v633 = vpop.f32.mrb[0].mxu0
  %v634 = vpop.f32.mrb[0].mxu0
  %v635 = vadd.f32 0.0, %v634
  %v636 = vpop.f32.mrb[0].mxu0
  %637 = vmatprep.mubr.bf16.mxu0 0
  %638 = vmatmul.mubr.bf16.gmra.mrb[0].mxu0 %v471
  %v639 = vpop.f32.mrb[0].mxu0
  %v640 = vadd.f32 0.0, %v639
  %v641 = vpop.f32.mrb[0].mxu0
  %v642 = vpop.f32.mrb[0].mxu0
  %v643 = vadd.f32 0.0, %v642
  %v644 = vpop.f32.mrb[0].mxu0
  %645 = vmatprep.mubr.bf16.mxu0 0
  %646 = vmatmul.mubr.bf16.gmra.mrb[0].mxu0 %v474
  %v647 = vpop.f32.mrb[0].mxu0
  %v648 = vadd.f32 0.0, %v647
  %v649 = vpop.f32.mrb[0].mxu0
  %v650 = vpop.f32.mrb[0].mxu0
  %v651 = vadd.f32 0.0, %v650
  %v652 = vpop.f32.mrb[0].mxu0
  %653 = vmatprep.mubr.bf16.mxu0 0
  %654 = vmatmul.mubr.bf16.gmra.mrb[0].mxu0 %v477
  %v655 = vpop.f32.mrb[0].mxu0
  %v656 = vadd.f32 0.0, %v655
  %v657 = vpop.f32.mrb[0].mxu0
  %v658 = vpop.f32.mrb[0].mxu0
  %v659 = vadd.f32 0.0, %v658
  %v660 = vpop.f32.mrb[0].mxu0
  %661 = vmatprep.mubr.bf16.mxu0 0
  %662 = vmatmul.mubr.bf16.gmra.mrb[0].mxu0 %v480
  %v663 = vpop.f32.mrb[0].mxu0
  %v664 = vadd.f32 0.0, %v663
  %v665 = vpop.f32.mrb[0].mxu0
  %v666 = vpop.f32.mrb[0].mxu0
  %v667 = vadd.f32 0.0, %v666
  %v668 = vpop.f32.mrb[0].mxu0
  %669 = vmatprep.mubr.bf16.mxu0 0
  %670 = vmatmul.mubr.bf16.gmra.mrb[0].mxu0 %v483
  %v671 = vpop.f32.mrb[0].mxu0
  %v672 = vadd.f32 0.0, %v671
  %v673 = vpop.f32.mrb[0].mxu0
  %v674 = vpop.f32.mrb[0].mxu0
  %v675 = vadd.f32 0.0, %v674
  %v676 = vpop.f32.mrb[0].mxu0
  %677 = vmatprep.mubr.bf16.mxu0 0
  %678 = vmatmul.mubr.bf16.gmra.mrb[0].mxu0 %v486
  %v679 = vpop.f32.mrb[0].mxu0
  %v680 = vadd.f32 0.0, %v679
  %v681 = vpop.f32.mrb[0].mxu0
  %v682 = vpop.f32.mrb[0].mxu0
  %v683 = vadd.f32 0.0, %v682
  %v684 = vpop.f32.mrb[0].mxu0
  %685 = vmatprep.mubr.bf16.mxu0 0
  %686 = vmatmul.mubr.bf16.gmra.mrb[0].mxu0 %v489
  %v687 = vpop.f32.mrb[0].mxu0
  %v688 = vadd.f32 0.0, %v687
  %v689 = vpop.f32.mrb[0].mxu0
  %v690 = vpop.f32.mrb[0].mxu0
  %v691 = vadd.f32 0.0, %v690
  %v692 = vpop.f32.mrb[0].mxu0
  %693 = vmatprep.mubr.bf16.mxu0 0
  %694 = vmatmul.mubr.bf16.gmra.mrb[0].mxu0 %v492
  %v695 = vpop.f32.mrb[0].mxu0
  %v696 = vadd.f32 0.0, %v695
  %v697 = vpop.f32.mrb[0].mxu0
  %v698 = vpop.f32.mrb[0].mxu0
  %v699 = vadd.f32 0.0, %v698
  %v700 = vpop.f32.mrb[0].mxu0
  %701 = vmatprep.mubr.bf16.mxu0 0
  %702 = vmatmul.mubr.bf16.gmra.mrb[0].mxu0 %v495
  %v703 = vpop.f32.mrb[0].mxu0
  %v704 = vadd.f32 0.0, %v703
  %v705 = vpop.f32.mrb[0].mxu0
  %v706 = vpop.f32.mrb[0].mxu0
  %v707 = vadd.f32 0.0, %v706
  %v708 = vpop.f32.mrb[0].mxu0
  %709 = vmatprep.mubr.bf16.mxu0 0
  %710 = vmatmul.mubr.bf16.gmra.mrb[0].mxu0 %v498
  %v711 = vpop.f32.mrb[0].mxu0
  %v712 = vadd.f32 0.0, %v711
  %v713 = vpop.f32.mrb[0].mxu0
  %v714 = vpop.f32.mrb[0].mxu0
  %v715 = vadd.f32 0.0, %v714
  %v716 = vpop.f32.mrb[0].mxu0
  %717 = vmatprep.mubr.bf16.mxu0 0
  %718 = vmatmul.mubr.bf16.gmra.mrb[0].mxu0 %v501
  %v719 = vpop.f32.mrb[0].mxu0
  %v720 = vadd.f32 0.0, %v719
  %v721 = vpop.f32.mrb[0].mxu0
  %v722 = vpop.f32.mrb[0].mxu0
  %v723 = vadd.f32 0.0, %v722
  %v724 = vpop.f32.mrb[0].mxu0
  %725 = vmatprep.mubr.bf16.mxu0 0
  %726 = vmatmul.mubr.bf16.gmra.mrb[0].mxu0 %v504
  %v727 = vpop.f32.mrb[0].mxu0
  %v728 = vadd.f32 0.0, %v727
  %v729 = vpop.f32.mrb[0].mxu0
  %v730 = vpop.f32.mrb[0].mxu0
  %v731 = vadd.f32 0.0, %v730
  %v732 = vpop.f32.mrb[0].mxu0
  %733 = vmatprep.mubr.bf16.mxu0 0
  %734 = vmatmul.mubr.bf16.gmra.mrb[0].mxu0 %v507
  %v735 = vpop.f32.mrb[0].mxu0
  %v736 = vadd.f32 0.0, %v735
  %v737 = vpop.f32.mrb[0].mxu0
  %v738 = vpop.f32.mrb[0].mxu0
  %v739 = vadd.f32 0.0, %v738
  %v740 = vpop.f32.mrb[0].mxu0
  %741 = vmatprep.mubr.bf16.mxu0 0
  %742 = vmatmul.mubr.bf16.gmra.mrb[0].mxu0 %v510
  %v743 = vpop.f32.mrb[0].mxu0
  %v744 = vadd.f32 0.0, %v743
  %v745 = vpop.f32.mrb[0].mxu0
  %v746 = vpop.f32.mrb[0].mxu0
  %v747 = vadd.f32 0.0, %v746
  %v748 = vpop.f32.mrb[0].mxu0
  %749 = vmatprep.mubr.bf16.mxu0 0
  %750 = vmatmul.mubr.bf16.gmra.mrb[0].mxu0 %v513
  %v751 = vpop.f32.mrb[0].mxu0
  %v752 = vadd.f32 0.0, %v751
  %v753 = vpop.f32.mrb[0].mxu0
  %v754 = vpop.f32.mrb[0].mxu0
  %v755 = vadd.f32 0.0, %v754
  %v756 = vpop.f32.mrb[0].mxu0
  %757 = vmatprep.mubr.bf16.mxu0 0
  %758 = vmatmul.mubr.bf16.gmra.mrb[0].mxu0 %v516
  %v759 = vpop.f32.mrb[0].mxu0
  %v760 = vadd.f32 0.0, %v759
  %v761 = vpop.f32.mrb[0].mxu0
  %v762 = vpop.f32.mrb[0].mxu0
  %v763 = vadd.f32 0.0, %v762
  %v764 = vpop.f32.mrb[0].mxu0
  %765 = vmatprep.mubr.bf16.mxu0 0
  %766 = vmatmul.mubr.bf16.gmra.mrb[0].mxu0 %v519
  %v767 = vpop.f32.mrb[0].mxu0
  %v768 = vadd.f32 0.0, %v767
  %v769 = vpop.f32.mrb[0].mxu0
  %v770 = vpop.f32.mrb[0].mxu0
  %v771 = vadd.f32 0.0, %v770
  %v772 = vpop.f32.mrb[0].mxu0
  %773 = vmatprep.mubr.bf16.mxu0 0
  %774 = vmatmul.mubr.bf16.gmra.mrb[0].mxu0 %v522
  %v775 = vpop.f32.mrb[0].mxu0
  %v776 = vadd.f32 0.0, %v775
  %v777 = vpop.f32.mrb[0].mxu0
  %v778 = vpop.f32.mrb[0].mxu0
  %v779 = vadd.f32 0.0, %v778
  %v780 = vpop.f32.mrb[0].mxu0
  %781 = vmatprep.mubr.bf16.mxu0 0
  %782 = vmatmul.mubr.bf16.gmra.mrb[0].mxu0 %v525
  %v783 = vpop.f32.mrb[0].mxu0
  %v784 = vadd.f32 0.0, %v783
  %v785 = vpop.f32.mrb[0].mxu0
  %v786 = vpop.f32.mrb[0].mxu0
  %v787 = vadd.f32 0.0, %v786
  %v788 = vpop.f32.mrb[0].mxu0
  %789 = vmatprep.mubr.bf16.mxu0 0
  %790 = vmatmul.mubr.bf16.gmra.mrb[0].mxu0 %v528
  %v791 = vpop.f32.mrb[0].mxu0
  %v792 = vadd.f32 0.0, %v791
  %v793 = vpop.f32.mrb[0].mxu0
  %v794 = vpop.f32.mrb[0].mxu0
  %v795 = vadd.f32 0.0, %v794
  %v796 = vpop.f32.mrb[0].mxu0
  %797 = vmatprep.mubr.bf16.mxu0 0
  %798 = vmatmul.mubr.bf16.gmra.mrb[0].mxu0 %v531
  %v799 = vpop.f32.mrb[0].mxu0
  %v800 = vadd.f32 0.0, %v799
  %v801 = vpop.f32.mrb[0].mxu0
  %v802 = vpop.f32.mrb[0].mxu0
  %v803 = vadd.f32 0.0, %v802
  %v804 = vpop.f32.mrb[0].mxu0
  %805 = vmatprep.mubr.bf16.mxu0 0
  %806 = vmatmul.mubr.bf16.gmra.mrb[0].mxu0 %v534
  %v807 = vpop.f32.mrb[0].mxu0
  %v808 = vadd.f32 0.0, %v807
  %v809 = vpop.f32.mrb[0].mxu0
  %v810 = vpop.f32.mrb[0].mxu0
  %v811 = vadd.f32 0.0, %v810
  %v812 = vpop.f32.mrb[0].mxu0
  %813 = vmatprep.mubr.bf16.mxu0 0
  %814 = vmatmul.mubr.bf16.gmra.mrb[0].mxu0 %v537
  %v815 = vpop.f32.mrb[0].mxu0
  %v816 = vadd.f32 0.0, %v815
  %v817 = vpop.f32.mrb[0].mxu0
  %v818 = vpop.f32.mrb[0].mxu0
  %v819 = vadd.f32 0.0, %v818
  %v820 = vpop.f32.mrb[0].mxu0
  %821 = vmatprep.mubr.bf16.mxu0 0
  %822 = vmatmul.mubr.bf16.gmra.mrb[0].mxu0 %v540
  %v823 = vpop.f32.mrb[0].mxu0
  %v824 = vadd.f32 0.0, %v823
  %v825 = vpop.f32.mrb[0].mxu0
  %v826 = vpop.f32.mrb[0].mxu0
  %v827 = vadd.f32 0.0, %v826
  %v828 = vpop.f32.mrb[0].mxu0
  %829 = vmatprep.mubr.bf16.mxu0 0
  %830 = vmatmul.mubr.bf16.gmra.mrb[0].mxu0 %v543
  %v831 = vpop.f32.mrb[0].mxu0
  %v832 = vadd.f32 0.0, %v831
  %v833 = vpop.f32.mrb[0].mxu0
  %v834 = vpop.f32.mrb[0].mxu0
  %v835 = vadd.f32 0.0, %v834
  %v836 = vpop.f32.mrb[0].mxu0
  %837 = vdwg.mxu0
  %v839 = vsel %vm15, %v318, 0
  %v842 = vsel %vm15, %v319, 0
  %v845 = vsel %vm15, %v320, 0
  %v848 = vsel %vm15, %v321, 0
  %v851 = vsel %vm15, %v322, 0
  %v854 = vsel %vm15, %v323, 0
  %v857 = vsel %vm15, %v324, 0
  %v860 = vsel %vm15, %v325, 0
  %v863 = vsel %vm15, %v326, 0
  %v866 = vsel %vm15, %v327, 0
  %v869 = vsel %vm15, %v328, 0
  %v872 = vsel %vm15, %v329, 0
  %v875 = vsel %vm15, %v330, 0
  %v878 = vsel %vm15, %v331, 0
  %v881 = vsel %vm15, %v332, 0
  %v884 = vsel %vm15, %v333, 0
  %v887 = vsel %vm15, %v334, 0
  %v890 = vsel %vm15, %v335, 0
  %v893 = vsel %vm15, %v336, 0
  %v896 = vsel %vm15, %v337, 0
  %v899 = vsel %vm15, %v338, 0
  %v902 = vsel %vm15, %v339, 0
  %v905 = vsel %vm15, %v340, 0
  %v908 = vsel %vm15, %v341, 0
  %v911 = vsel %vm15, %v342, 0
  %v914 = vsel %vm15, %v343, 0
  %v917 = vsel %vm15, %v344, 0
  %v920 = vsel %vm15, %v345, 0
  %v923 = vsel %vm15, %v346, 0
  %v926 = vsel %vm15, %v347, 0
  %v929 = vsel %vm15, %v348, 0
  %v932 = vsel %vm15, %v349, 0
  %v935 = vsel %vm545, %v350, 0
  %937 = vmatprep.subr.bf16.mxu0 0
  %938 = vmatpush1.bf16.msra.mxu0 %v935
  %939 = vmatprep.subr.bf16.mxu0 0
  %940 = vmatpush1.bf16.msra.mxu0 0
  %941 = vmatprep.subr.bf16.mxu0 0
  %942 = vmatpush1.bf16.msra.mxu0 0
  %943 = vmatprep.subr.bf16.mxu0 0
  %944 = vmatpush1.bf16.msra.mxu0 0
  %945 = vmatprep.subr.bf16.mxu0 0
  %946 = vmatpush1.bf16.msra.mxu0 0
  %947 = vmatprep.subr.bf16.mxu0 0
  %948 = vmatpush1.bf16.msra.mxu0 0
  %949 = vmatprep.subr.bf16.mxu0 0
  %950 = vmatpush1.bf16.msra.mxu0 0
  %951 = vmatprep.subr.bf16.mxu0 0
  %952 = vmatpush1.bf16.msra.mxu0 0
  %953 = vmatprep.subr.bf16.mxu0 0
  %954 = vmatpush1.bf16.msra.mxu0 0
  %955 = vmatprep.subr.bf16.mxu0 0
  %956 = vmatpush1.bf16.msra.mxu0 0
  %957 = vmatprep.subr.bf16.mxu0 0
  %958 = vmatpush1.bf16.msra.mxu0 0
  %959 = vmatprep.subr.bf16.mxu0 0
  %960 = vmatpush1.bf16.msra.mxu0 0
  %961 = vmatprep.subr.bf16.mxu0 0
  %962 = vmatpush1.bf16.msra.mxu0 0
  %963 = vmatprep.subr.bf16.mxu0 0
  %964 = vmatpush1.bf16.msra.mxu0 0
  %965 = vmatprep.subr.bf16.mxu0 0
  %966 = vmatpush1.bf16.msra.mxu0 0
  %967 = vmatprep.subr.bf16.mxu0 0
  %968 = vmatpush1.bf16.msra.mxu0 0
  %969 = vmatprep.mubr.bf16.mxu0 0
  %970 = vmatmul.mubr.bf16.gmra.mrb[0].mxu0 %v839
  %v971 = vpop.f32.mrb[0].mxu0
  %v972 = vadd.f32 %v584, %v971
  %v973 = vpop.f32.mrb[0].mxu0
  %v974 = vpop.f32.mrb[0].mxu0
  %v975 = vadd.f32 %v587, %v974
  %v976 = vpop.f32.mrb[0].mxu0
  %977 = vmatprep.mubr.bf16.mxu0 0
  %978 = vmatmul.mubr.bf16.gmra.mrb[0].mxu0 %v842
  %v979 = vpop.f32.mrb[0].mxu0
  %v980 = vadd.f32 %v592, %v979
  %v981 = vpop.f32.mrb[0].mxu0
  %v982 = vpop.f32.mrb[0].mxu0
  %v983 = vadd.f32 %v595, %v982
  %v984 = vpop.f32.mrb[0].mxu0
  %985 = vmatprep.mubr.bf16.mxu0 0
  %986 = vmatmul.mubr.bf16.gmra.mrb[0].mxu0 %v845
  %v987 = vpop.f32.mrb[0].mxu0
  %v988 = vadd.f32 %v600, %v987
  %v989 = vpop.f32.mrb[0].mxu0
  %v990 = vpop.f32.mrb[0].mxu0
  %v991 = vadd.f32 %v603, %v990
  %v992 = vpop.f32.mrb[0].mxu0
  %993 = vmatprep.mubr.bf16.mxu0 0
  %994 = vmatmul.mubr.bf16.gmra.mrb[0].mxu0 %v848
  %v995 = vpop.f32.mrb[0].mxu0
  %v996 = vadd.f32 %v608, %v995
  %v997 = vpop.f32.mrb[0].mxu0
  %v998 = vpop.f32.mrb[0].mxu0
  %v999 = vadd.f32 %v611, %v998
  %v1000 = vpop.f32.mrb[0].mxu0
  %1001 = vmatprep.mubr.bf16.mxu0 0
  %1002 = vmatmul.mubr.bf16.gmra.mrb[0].mxu0 %v851
  %v1003 = vpop.f32.mrb[0].mxu0
  %v1004 = vadd.f32 %v616, %v1003
  %v1005 = vpop.f32.mrb[0].mxu0
  %v1006 = vpop.f32.mrb[0].mxu0
  %v1007 = vadd.f32 %v619, %v1006
  %v1008 = vpop.f32.mrb[0].mxu0
  %1009 = vmatprep.mubr.bf16.mxu0 0
  %1010 = vmatmul.mubr.bf16.gmra.mrb[0].mxu0 %v854
  %v1011 = vpop.f32.mrb[0].mxu0
  %v1012 = vadd.f32 %v624, %v1011
  %v1013 = vpop.f32.mrb[0].mxu0
  %v1014 = vpop.f32.mrb[0].mxu0
  %v1015 = vadd.f32 %v627, %v1014
  %v1016 = vpop.f32.mrb[0].mxu0
  %1017 = vmatprep.mubr.bf16.mxu0 0
  %1018 = vmatmul.mubr.bf16.gmra.mrb[0].mxu0 %v857
  %v1019 = vpop.f32.mrb[0].mxu0
  %v1020 = vadd.f32 %v632, %v1019
  %v1021 = vpop.f32.mrb[0].mxu0
  %v1022 = vpop.f32.mrb[0].mxu0
  %v1023 = vadd.f32 %v635, %v1022
  %v1024 = vpop.f32.mrb[0].mxu0
  %1025 = vmatprep.mubr.bf16.mxu0 0
  %1026 = vmatmul.mubr.bf16.gmra.mrb[0].mxu0 %v860
  %v1027 = vpop.f32.mrb[0].mxu0
  %v1028 = vadd.f32 %v640, %v1027
  %v1029 = vpop.f32.mrb[0].mxu0
  %v1030 = vpop.f32.mrb[0].mxu0
  %v1031 = vadd.f32 %v643, %v1030
  %v1032 = vpop.f32.mrb[0].mxu0
  %1033 = vmatprep.mubr.bf16.mxu0 0
  %1034 = vmatmul.mubr.bf16.gmra.mrb[0].mxu0 %v863
  %v1035 = vpop.f32.mrb[0].mxu0
  %v1036 = vadd.f32 %v648, %v1035
  %v1037 = vpop.f32.mrb[0].mxu0
  %v1038 = vpop.f32.mrb[0].mxu0
  %v1039 = vadd.f32 %v651, %v1038
  %v1040 = vpop.f32.mrb[0].mxu0
  %1041 = vmatprep.mubr.bf16.mxu0 0
  %1042 = vmatmul.mubr.bf16.gmra.mrb[0].mxu0 %v866
  %v1043 = vpop.f32.mrb[0].mxu0
  %v1044 = vadd.f32 %v656, %v1043
  %v1045 = vpop.f32.mrb[0].mxu0
  %v1046 = vpop.f32.mrb[0].mxu0
  %v1047 = vadd.f32 %v659, %v1046
  %v1048 = vpop.f32.mrb[0].mxu0
  %1049 = vmatprep.mubr.bf16.mxu0 0
  %1050 = vmatmul.mubr.bf16.gmra.mrb[0].mxu0 %v869
  %v1051 = vpop.f32.mrb[0].mxu0
  %v1052 = vadd.f32 %v664, %v1051
  %v1053 = vpop.f32.mrb[0].mxu0
  %v1054 = vpop.f32.mrb[0].mxu0
  %v1055 = vadd.f32 %v667, %v1054
  %v1056 = vpop.f32.mrb[0].mxu0
  %1057 = vmatprep.mubr.bf16.mxu0 0
  %1058 = vmatmul.mubr.bf16.gmra.mrb[0].mxu0 %v872
  %v1059 = vpop.f32.mrb[0].mxu0
  %v1060 = vadd.f32 %v672, %v1059
  %v1061 = vpop.f32.mrb[0].mxu0
  %v1062 = vpop.f32.mrb[0].mxu0
  %v1063 = vadd.f32 %v675, %v1062
  %v1064 = vpop.f32.mrb[0].mxu0
  %1065 = vmatprep.mubr.bf16.mxu0 0
  %1066 = vmatmul.mubr.bf16.gmra.mrb[0].mxu0 %v875
  %v1067 = vpop.f32.mrb[0].mxu0
  %v1068 = vadd.f32 %v680, %v1067
  %v1069 = vpop.f32.mrb[0].mxu0
  %v1070 = vpop.f32.mrb[0].mxu0
  %v1071 = vadd.f32 %v683, %v1070
  %v1072 = vpop.f32.mrb[0].mxu0
  %1073 = vmatprep.mubr.bf16.mxu0 0
  %1074 = vmatmul.mubr.bf16.gmra.mrb[0].mxu0 %v878
  %v1075 = vpop.f32.mrb[0].mxu0
  %v1076 = vadd.f32 %v688, %v1075
  %v1077 = vpop.f32.mrb[0].mxu0
  %v1078 = vpop.f32.mrb[0].mxu0
  %v1079 = vadd.f32 %v691, %v1078
  %v1080 = vpop.f32.mrb[0].mxu0
  %1081 = vmatprep.mubr.bf16.mxu0 0
  %1082 = vmatmul.mubr.bf16.gmra.mrb[0].mxu0 %v881
  %v1083 = vpop.f32.mrb[0].mxu0
  %v1084 = vadd.f32 %v696, %v1083
  %v1085 = vpop.f32.mrb[0].mxu0
  %v1086 = vpop.f32.mrb[0].mxu0
  %v1087 = vadd.f32 %v699, %v1086
  %v1088 = vpop.f32.mrb[0].mxu0
  %1089 = vmatprep.mubr.bf16.mxu0 0
  %1090 = vmatmul.mubr.bf16.gmra.mrb[0].mxu0 %v884
  %v1091 = vpop.f32.mrb[0].mxu0
  %v1092 = vadd.f32 %v704, %v1091
  %v1093 = vpop.f32.mrb[0].mxu0
  %v1094 = vpop.f32.mrb[0].mxu0
  %v1095 = vadd.f32 %v707, %v1094
  %v1096 = vpop.f32.mrb[0].mxu0
  %1097 = vmatprep.mubr.bf16.mxu0 0
  %1098 = vmatmul.mubr.bf16.gmra.mrb[0].mxu0 %v887
  %v1099 = vpop.f32.mrb[0].mxu0
  %v1100 = vadd.f32 %v712, %v1099
  %v1101 = vpop.f32.mrb[0].mxu0
  %v1102 = vpop.f32.mrb[0].mxu0
  %v1103 = vadd.f32 %v715, %v1102
  %v1104 = vpop.f32.mrb[0].mxu0
  %1105 = vmatprep.mubr.bf16.mxu0 0
  %1106 = vmatmul.mubr.bf16.gmra.mrb[0].mxu0 %v890
  %v1107 = vpop.f32.mrb[0].mxu0
  %v1108 = vadd.f32 %v720, %v1107
  %v1109 = vpop.f32.mrb[0].mxu0
  %v1110 = vpop.f32.mrb[0].mxu0
  %v1111 = vadd.f32 %v723, %v1110
  %v1112 = vpop.f32.mrb[0].mxu0
  %1113 = vmatprep.mubr.bf16.mxu0 0
  %1114 = vmatmul.mubr.bf16.gmra.mrb[0].mxu0 %v893
  %v1115 = vpop.f32.mrb[0].mxu0
  %v1116 = vadd.f32 %v728, %v1115
  %v1117 = vpop.f32.mrb[0].mxu0
  %v1118 = vpop.f32.mrb[0].mxu0
  %v1119 = vadd.f32 %v731, %v1118
  %v1120 = vpop.f32.mrb[0].mxu0
  %1121 = vmatprep.mubr.bf16.mxu0 0
  %1122 = vmatmul.mubr.bf16.gmra.mrb[0].mxu0 %v896
  %v1123 = vpop.f32.mrb[0].mxu0
  %v1124 = vadd.f32 %v736, %v1123
  %v1125 = vpop.f32.mrb[0].mxu0
  %v1126 = vpop.f32.mrb[0].mxu0
  %v1127 = vadd.f32 %v739, %v1126
  %v1128 = vpop.f32.mrb[0].mxu0
  %1129 = vmatprep.mubr.bf16.mxu0 0
  %1130 = vmatmul.mubr.bf16.gmra.mrb[0].mxu0 %v899
  %v1131 = vpop.f32.mrb[0].mxu0
  %v1132 = vadd.f32 %v744, %v1131
  %v1133 = vpop.f32.mrb[0].mxu0
  %v1134 = vpop.f32.mrb[0].mxu0
  %v1135 = vadd.f32 %v747, %v1134
  %v1136 = vpop.f32.mrb[0].mxu0
  %1137 = vmatprep.mubr.bf16.mxu0 0
  %1138 = vmatmul.mubr.bf16.gmra.mrb[0].mxu0 %v902
  %v1139 = vpop.f32.mrb[0].mxu0
  %v1140 = vadd.f32 %v752, %v1139
  %v1141 = vpop.f32.mrb[0].mxu0
  %v1142 = vpop.f32.mrb[0].mxu0
  %v1143 = vadd.f32 %v755, %v1142
  %v1144 = vpop.f32.mrb[0].mxu0
  %1145 = vmatprep.mubr.bf16.mxu0 0
  %1146 = vmatmul.mubr.bf16.gmra.mrb[0].mxu0 %v905
  %v1147 = vpop.f32.mrb[0].mxu0
  %v1148 = vadd.f32 %v760, %v1147
  %v1149 = vpop.f32.mrb[0].mxu0
  %v1150 = vpop.f32.mrb[0].mxu0
  %v1151 = vadd.f32 %v763, %v1150
  %v1152 = vpop.f32.mrb[0].mxu0
  %1153 = vmatprep.mubr.bf16.mxu0 0
  %1154 = vmatmul.mubr.bf16.gmra.mrb[0].mxu0 %v908
  %v1155 = vpop.f32.mrb[0].mxu0
  %v1156 = vadd.f32 %v768, %v1155
  %v1157 = vpop.f32.mrb[0].mxu0
  %v1158 = vpop.f32.mrb[0].mxu0
  %v1159 = vadd.f32 %v771, %v1158
  %v1160 = vpop.f32.mrb[0].mxu0
  %1161 = vmatprep.mubr.bf16.mxu0 0
  %1162 = vmatmul.mubr.bf16.gmra.mrb[0].mxu0 %v911
  %v1163 = vpop.f32.mrb[0].mxu0
  %v1164 = vadd.f32 %v776, %v1163
  %v1165 = vpop.f32.mrb[0].mxu0
  %v1166 = vpop.f32.mrb[0].mxu0
  %v1167 = vadd.f32 %v779, %v1166
  %v1168 = vpop.f32.mrb[0].mxu0
  %1169 = vmatprep.mubr.bf16.mxu0 0
  %1170 = vmatmul.mubr.bf16.gmra.mrb[0].mxu0 %v914
  %v1171 = vpop.f32.mrb[0].mxu0
  %v1172 = vadd.f32 %v784, %v1171
  %v1173 = vpop.f32.mrb[0].mxu0
  %v1174 = vpop.f32.mrb[0].mxu0
  %v1175 = vadd.f32 %v787, %v1174
  %v1176 = vpop.f32.mrb[0].mxu0
  %1177 = vmatprep.mubr.bf16.mxu0 0
  %1178 = vmatmul.mubr.bf16.gmra.mrb[0].mxu0 %v917
  %v1179 = vpop.f32.mrb[0].mxu0
  %v1180 = vadd.f32 %v792, %v1179
  %v1181 = vpop.f32.mrb[0].mxu0
  %v1182 = vpop.f32.mrb[0].mxu0
  %v1183 = vadd.f32 %v795, %v1182
  %v1184 = vpop.f32.mrb[0].mxu0
  %1185 = vmatprep.mubr.bf16.mxu0 0
  %1186 = vmatmul.mubr.bf16.gmra.mrb[0].mxu0 %v920
  %v1187 = vpop.f32.mrb[0].mxu0
  %v1188 = vadd.f32 %v800, %v1187
  %v1189 = vpop.f32.mrb[0].mxu0
  %v1190 = vpop.f32.mrb[0].mxu0
  %v1191 = vadd.f32 %v803, %v1190
  %v1192 = vpop.f32.mrb[0].mxu0
  %1193 = vmatprep.mubr.bf16.mxu0 0
  %1194 = vmatmul.mubr.bf16.gmra.mrb[0].mxu0 %v923
  %v1195 = vpop.f32.mrb[0].mxu0
  %v1196 = vadd.f32 %v808, %v1195
  %v1197 = vpop.f32.mrb[0].mxu0
  %v1198 = vpop.f32.mrb[0].mxu0
  %v1199 = vadd.f32 %v811, %v1198
  %v1200 = vpop.f32.mrb[0].mxu0
  %1201 = vmatprep.mubr.bf16.mxu0 0
  %1202 = vmatmul.mubr.bf16.gmra.mrb[0].mxu0 %v926
  %v1203 = vpop.f32.mrb[0].mxu0
  %v1204 = vadd.f32 %v816, %v1203
  %v1205 = vpop.f32.mrb[0].mxu0
  %v1206 = vpop.f32.mrb[0].mxu0
  %v1207 = vadd.f32 %v819, %v1206
  %v1208 = vpop.f32.mrb[0].mxu0
  %1209 = vmatprep.mubr.bf16.mxu0 0
  %1210 = vmatmul.mubr.bf16.gmra.mrb[0].mxu0 %v929
  %v1211 = vpop.f32.mrb[0].mxu0
  %v1212 = vadd.f32 %v824, %v1211
  %v1213 = vpop.f32.mrb[0].mxu0
  %v1214 = vpop.f32.mrb[0].mxu0
  %v1215 = vadd.f32 %v827, %v1214
  %v1216 = vpop.f32.mrb[0].mxu0
  %1217 = vmatprep.mubr.bf16.mxu0 0
  %1218 = vmatmul.mubr.bf16.gmra.mrb[0].mxu0 %v932
  %v1219 = vpop.f32.mrb[0].mxu0
  %v1220 = vadd.f32 %v832, %v1219
  %v1221 = vpop.f32.mrb[0].mxu0
  %v1222 = vpop.f32.mrb[0].mxu0
  %v1223 = vadd.f32 %v835, %v1222
  %v1224 = vpop.f32.mrb[0].mxu0
  %1225 = vdwg.mxu0
  %v1226 = vld [vmem:[#allocation2 + $0x2] sm:$0xff]
  %v1227 = vld [vmem:[#allocation2 + $0xa] sm:$0xff]
  %v1228 = vld [vmem:[#allocation2 + $0x1a] sm:$0xff]
  %v1229 = vld [vmem:[#allocation2 + $0x22] sm:$0xff]
  %v1230 = vld [vmem:[#allocation2 + $0x32] sm:$0xff]
  %v1231 = vld [vmem:[#allocation2 + $0x3a] sm:$0xff]
  %v1232 = vld [vmem:[#allocation2 + $0x4a] sm:$0xff]
  %v1233 = vld [vmem:[#allocation2 + $0x52] sm:$0xff]
  %v1234 = vld [vmem:[#allocation2 + $0x62] sm:$0xff]
  %v1235 = vld [vmem:[#allocation2 + $0x6a] sm:$0xff]
  %v1236 = vld [vmem:[#allocation2 + $0x7a] sm:$0xff]
  %v1237 = vld [vmem:[#allocation2 + $0x82] sm:$0xff]
  %v1238 = vld [vmem:[#allocation2 + $0x92] sm:$0xff]
  %v1239 = vld [vmem:[#allocation2 + $0x9a] sm:$0xff]
  %v1240 = vld [vmem:[#allocation2 + $0xaa] sm:$0xff]
  %v1241 = vld [vmem:[#allocation2 + $0xb2] sm:$0xff]
  %v1242 = vld [vmem:[#allocation2 + $0xc2] sm:$0xff]
  %v1243 = vld [vmem:[#allocation2 + $0xca] sm:$0xff]
  %v1244 = vld [vmem:[#allocation2 + $0xda] sm:$0xff]
  %v1245 = vld [vmem:[#allocation2 + $0xe2] sm:$0xff]
  %v1246 = vld [vmem:[#allocation2 + $0xf2] sm:$0xff]
  %v1247 = vld [vmem:[#allocation2 + $0xfa] sm:$0xff]
  %v1248 = vld [vmem:[#allocation2 + $0x10a] sm:$0xff]
  %v1249 = vld [vmem:[#allocation2 + $0x112] sm:$0xff]
  %v1250 = vld [vmem:[#allocation2 + $0x122] sm:$0xff]
  %v1251 = vld [vmem:[#allocation2 + $0x12a] sm:$0xff]
  %v1252 = vld [vmem:[#allocation2 + $0x13a] sm:$0xff]
  %v1253 = vld [vmem:[#allocation2 + $0x142] sm:$0xff]
  %v1254 = vld [vmem:[#allocation2 + $0x152] sm:$0xff]
  %v1255 = vld [vmem:[#allocation2 + $0x15a] sm:$0xff]
  %v1256 = vld [vmem:[#allocation2 + $0x16a] sm:$0xff]
  %v1257 = vld [vmem:[#allocation2 + $0x172] sm:$0xff]
  %v1258 = vld [vmem:[#allocation2 + $0x1b2] sm:$0xff]
  %v1259 = vld [vmem:[#allocation2 + $0x1ba] sm:$0xff]
  %v1260 = vld [vmem:[#allocation2 + $0x1ca] sm:$0xff]
  %v1261 = vld [vmem:[#allocation2 + $0x1d2] sm:$0xff]
  %v1262 = vld [vmem:[#allocation2 + $0x1e2] sm:$0xff]
  %v1263 = vld [vmem:[#allocation2 + $0x1ea] sm:$0xff]
  %v1264 = vld [vmem:[#allocation2 + $0x1fa] sm:$0xff]
  %v1265 = vld [vmem:[#allocation2 + $0x202] sm:$0xff]
  %v1266 = vld [vmem:[#allocation2 + $0x212] sm:$0xff]
  %v1267 = vld [vmem:[#allocation2 + $0x21a] sm:$0xff]
  %v1268 = vld [vmem:[#allocation2 + $0x22a] sm:$0xff]
  %v1269 = vld [vmem:[#allocation2 + $0x232] sm:$0xff]
  %v1270 = vld [vmem:[#allocation2 + $0x242] sm:$0xff]
  %v1271 = vld [vmem:[#allocation2 + $0x24a] sm:$0xff]
  %v1272 = vld [vmem:[#allocation2 + $0x25a] sm:$0xff]
  %v1273 = vld [vmem:[#allocation2 + $0x262] sm:$0xff]
  %v1274 = vld [vmem:[#allocation2 + $0x272] sm:$0xff]
  %v1275 = vld [vmem:[#allocation2 + $0x27a] sm:$0xff]
  %v1276 = vld [vmem:[#allocation2 + $0x28a] sm:$0xff]
  %v1277 = vld [vmem:[#allocation2 + $0x292] sm:$0xff]
  %v1278 = vld [vmem:[#allocation2 + $0x2a2] sm:$0xff]
  %v1279 = vld [vmem:[#allocation2 + $0x2aa] sm:$0xff]
  %v1280 = vld [vmem:[#allocation2 + $0x2ba] sm:$0xff]
  %v1281 = vld [vmem:[#allocation2 + $0x2c2] sm:$0xff]
  %v1282 = vld [vmem:[#allocation2 + $0x2d2] sm:$0xff]
  %v1283 = vld [vmem:[#allocation2 + $0x2da] sm:$0xff]
  %v1284 = vld [vmem:[#allocation2 + $0x2ea] sm:$0xff]
  %v1285 = vld [vmem:[#allocation2 + $0x2f2] sm:$0xff]
  %v1286 = vld [vmem:[#allocation2 + $0x302] sm:$0xff]
  %v1287 = vld [vmem:[#allocation2 + $0x30a] sm:$0xff]
  %v1288 = vld [vmem:[#allocation2 + $0x31a] sm:$0xff]
  %v1289 = vld [vmem:[#allocation2 + $0x322] sm:$0xff]
  %v1290 = vpack.c.bf16 %v1227, %v1226
  %v1291 = vpack.c.bf16 %v1229, %v1228
  %v1292 = vpack.c.bf16 %v1231, %v1230
  %v1293 = vpack.c.bf16 %v1233, %v1232
  %v1294 = vpack.c.bf16 %v1235, %v1234
  %v1295 = vpack.c.bf16 %v1237, %v1236
  %v1296 = vpack.c.bf16 %v1239, %v1238
  %v1297 = vpack.c.bf16 %v1241, %v1240
  %v1298 = vpack.c.bf16 %v1243, %v1242
  %v1299 = vpack.c.bf16 %v1245, %v1244
  %v1300 = vpack.c.bf16 %v1247, %v1246
  %v1301 = vpack.c.bf16 %v1249, %v1248
  %v1302 = vpack.c.bf16 %v1251, %v1250
  %v1303 = vpack.c.bf16 %v1253, %v1252
  %v1304 = vpack.c.bf16 %v1255, %v1254
  %v1305 = vpack.c.bf16 %v1257, %v1256
  %v1306 = vpack.c.bf16 %v1259, %v1258
  %v1307 = vpack.c.bf16 %v1261, %v1260
  %v1308 = vpack.c.bf16 %v1263, %v1262
  %v1309 = vpack.c.bf16 %v1265, %v1264
  %v1310 = vpack.c.bf16 %v1267, %v1266
  %v1311 = vpack.c.bf16 %v1269, %v1268
  %v1312 = vpack.c.bf16 %v1271, %v1270
  %v1313 = vpack.c.bf16 %v1273, %v1272
  %v1314 = vpack.c.bf16 %v1275, %v1274
  %v1315 = vpack.c.bf16 %v1277, %v1276
  %v1316 = vpack.c.bf16 %v1279, %v1278
  %v1317 = vpack.c.bf16 %v1281, %v1280
  %v1318 = vpack.c.bf16 %v1283, %v1282
  %v1319 = vpack.c.bf16 %v1285, %v1284
  %v1320 = vpack.c.bf16 %v1287, %v1286
  %v1321 = vpack.c.bf16 %v1289, %v1288
  %s1322 = scalar_lea.vmem %s1, 4
  %v1323 = vld [vmem:[%s1322] sm:$0x3]
  %v1325 = vsel %vm15, %v1290, 0
  %v1328 = vsel %vm15, %v1291, 0
  %v1331 = vsel %vm15, %v1292, 0
  %v1334 = vsel %vm15, %v1293, 0
  %v1337 = vsel %vm15, %v1294, 0
  %v1340 = vsel %vm15, %v1295, 0
  %v1343 = vsel %vm15, %v1296, 0
  %v1346 = vsel %vm15, %v1297, 0
  %v1349 = vsel %vm15, %v1298, 0
  %v1352 = vsel %vm15, %v1299, 0
  %v1355 = vsel %vm15, %v1300, 0
  %v1358 = vsel %vm15, %v1301, 0
  %v1361 = vsel %vm15, %v1302, 0
  %v1364 = vsel %vm15, %v1303, 0
  %v1367 = vsel %vm15, %v1304, 0
  %v1370 = vsel %vm15, %v1305, 0
  %v1373 = vsel %vm15, %v1306, 0
  %v1376 = vsel %vm15, %v1307, 0
  %v1379 = vsel %vm15, %v1308, 0
  %v1382 = vsel %vm15, %v1309, 0
  %v1385 = vsel %vm15, %v1310, 0
  %v1388 = vsel %vm15, %v1311, 0
  %v1391 = vsel %vm15, %v1312, 0
  %v1394 = vsel %vm15, %v1313, 0
  %v1397 = vsel %vm15, %v1314, 0
  %v1400 = vsel %vm15, %v1315, 0
  %v1403 = vsel %vm15, %v1316, 0
  %v1406 = vsel %vm15, %v1317, 0
  %v1409 = vsel %vm15, %v1318, 0
  %v1412 = vsel %vm15, %v1319, 0
  %v1415 = vsel %vm15, %v1320, 0
  %v1418 = vsel %vm15, %v1321, 0
  %v1421 = vsel %vm545, %v1323, 0
  %1423 = vmatprep.subr.bf16.mxu0 0
  %1424 = vmatpush1.bf16.msra.mxu0 %v1421
  %1425 = vmatprep.subr.bf16.mxu0 0
  %1426 = vmatpush1.bf16.msra.mxu0 0
  %1427 = vmatprep.subr.bf16.mxu0 0
  %1428 = vmatpush1.bf16.msra.mxu0 0
  %1429 = vmatprep.subr.bf16.mxu0 0
  %1430 = vmatpush1.bf16.msra.mxu0 0
  %1431 = vmatprep.subr.bf16.mxu0 0
  %1432 = vmatpush1.bf16.msra.mxu0 0
  %1433 = vmatprep.subr.bf16.mxu0 0
  %1434 = vmatpush1.bf16.msra.mxu0 0
  %1435 = vmatprep.subr.bf16.mxu0 0
  %1436 = vmatpush1.bf16.msra.mxu0 0
  %1437 = vmatprep.subr.bf16.mxu0 0
  %1438 = vmatpush1.bf16.msra.mxu0 0
  %1439 = vmatprep.subr.bf16.mxu0 0
  %1440 = vmatpush1.bf16.msra.mxu0 0
  %1441 = vmatprep.subr.bf16.mxu0 0
  %1442 = vmatpush1.bf16.msra.mxu0 0
  %1443 = vmatprep.subr.bf16.mxu0 0
  %1444 = vmatpush1.bf16.msra.mxu0 0
  %1445 = vmatprep.subr.bf16.mxu0 0
  %1446 = vmatpush1.bf16.msra.mxu0 0
  %1447 = vmatprep.subr.bf16.mxu0 0
  %1448 = vmatpush1.bf16.msra.mxu0 0
  %1449 = vmatprep.subr.bf16.mxu0 0
  %1450 = vmatpush1.bf16.msra.mxu0 0
  %1451 = vmatprep.subr.bf16.mxu0 0
  %1452 = vmatpush1.bf16.msra.mxu0 0
  %1453 = vmatprep.subr.bf16.mxu0 0
  %1454 = vmatpush1.bf16.msra.mxu0 0
  %1455 = vmatprep.mubr.bf16.mxu0 0
  %1456 = vmatmul.mubr.bf16.gmra.mrb[0].mxu0 %v1325
  %v1457 = vpop.f32.mrb[0].mxu0
  %v1458 = vadd.f32 0.0, %v1457
  %v1459 = vpop.f32.mrb[0].mxu0
  %v1460 = vpop.f32.mrb[0].mxu0
  %v1461 = vadd.f32 0.0, %v1460
  %v1462 = vpop.f32.mrb[0].mxu0
  %1463 = vmatprep.mubr.bf16.mxu0 0
  %1464 = vmatmul.mubr.bf16.gmra.mrb[0].mxu0 %v1328
  %v1465 = vpop.f32.mrb[0].mxu0
  %v1466 = vadd.f32 0.0, %v1465
  %v1467 = vpop.f32.mrb[0].mxu0
  %v1468 = vpop.f32.mrb[0].mxu0
  %v1469 = vadd.f32 0.0, %v1468
  %v1470 = vpop.f32.mrb[0].mxu0
  %1471 = vmatprep.mubr.bf16.mxu0 0
  %1472 = vmatmul.mubr.bf16.gmra.mrb[0].mxu0 %v1331
  %v1473 = vpop.f32.mrb[0].mxu0
  %v1474 = vadd.f32 0.0, %v1473
  %v1475 = vpop.f32.mrb[0].mxu0
  %v1476 = vpop.f32.mrb[0].mxu0
  %v1477 = vadd.f32 0.0, %v1476
  %v1478 = vpop.f32.mrb[0].mxu0
  %1479 = vmatprep.mubr.bf16.mxu0 0
  %1480 = vmatmul.mubr.bf16.gmra.mrb[0].mxu0 %v1334
  %v1481 = vpop.f32.mrb[0].mxu0
  %v1482 = vadd.f32 0.0, %v1481
  %v1483 = vpop.f32.mrb[0].mxu0
  %v1484 = vpop.f32.mrb[0].mxu0
  %v1485 = vadd.f32 0.0, %v1484
  %v1486 = vpop.f32.mrb[0].mxu0
  %1487 = vmatprep.mubr.bf16.mxu0 0
  %1488 = vmatmul.mubr.bf16.gmra.mrb[0].mxu0 %v1337
  %v1489 = vpop.f32.mrb[0].mxu0
  %v1490 = vadd.f32 0.0, %v1489
  %v1491 = vpop.f32.mrb[0].mxu0
  %v1492 = vpop.f32.mrb[0].mxu0
  %v1493 = vadd.f32 0.0, %v1492
  %v1494 = vpop.f32.mrb[0].mxu0
  %1495 = vmatprep.mubr.bf16.mxu0 0
  %1496 = vmatmul.mubr.bf16.gmra.mrb[0].mxu0 %v1340
  %v1497 = vpop.f32.mrb[0].mxu0
  %v1498 = vadd.f32 0.0, %v1497
  %v1499 = vpop.f32.mrb[0].mxu0
  %v1500 = vpop.f32.mrb[0].mxu0
  %v1501 = vadd.f32 0.0, %v1500
  %v1502 = vpop.f32.mrb[0].mxu0
  %1503 = vmatprep.mubr.bf16.mxu0 0
  %1504 = vmatmul.mubr.bf16.gmra.mrb[0].mxu0 %v1343
  %v1505 = vpop.f32.mrb[0].mxu0
  %v1506 = vadd.f32 0.0, %v1505
  %v1507 = vpop.f32.mrb[0].mxu0
  %v1508 = vpop.f32.mrb[0].mxu0
  %v1509 = vadd.f32 0.0, %v1508
  %v1510 = vpop.f32.mrb[0].mxu0
  %1511 = vmatprep.mubr.bf16.mxu0 0
  %1512 = vmatmul.mubr.bf16.gmra.mrb[0].mxu0 %v1346
  %v1513 = vpop.f32.mrb[0].mxu0
  %v1514 = vadd.f32 0.0, %v1513
  %v1515 = vpop.f32.mrb[0].mxu0
  %v1516 = vpop.f32.mrb[0].mxu0
  %v1517 = vadd.f32 0.0, %v1516
  %v1518 = vpop.f32.mrb[0].mxu0
  %1519 = vmatprep.mubr.bf16.mxu0 0
  %1520 = vmatmul.mubr.bf16.gmra.mrb[0].mxu0 %v1349
  %v1521 = vpop.f32.mrb[0].mxu0
  %v1522 = vadd.f32 0.0, %v1521
  %v1523 = vpop.f32.mrb[0].mxu0
  %v1524 = vpop.f32.mrb[0].mxu0
  %v1525 = vadd.f32 0.0, %v1524
  %v1526 = vpop.f32.mrb[0].mxu0
  %1527 = vmatprep.mubr.bf16.mxu0 0
  %1528 = vmatmul.mubr.bf16.gmra.mrb[0].mxu0 %v1352
  %v1529 = vpop.f32.mrb[0].mxu0
  %v1530 = vadd.f32 0.0, %v1529
  %v1531 = vpop.f32.mrb[0].mxu0
  %v1532 = vpop.f32.mrb[0].mxu0
  %v1533 = vadd.f32 0.0, %v1532
  %v1534 = vpop.f32.mrb[0].mxu0
  %1535 = vmatprep.mubr.bf16.mxu0 0
  %1536 = vmatmul.mubr.bf16.gmra.mrb[0].mxu0 %v1355
  %v1537 = vpop.f32.mrb[0].mxu0
  %v1538 = vadd.f32 0.0, %v1537
  %v1539 = vpop.f32.mrb[0].mxu0
  %v1540 = vpop.f32.mrb[0].mxu0
  %v1541 = vadd.f32 0.0, %v1540
  %v1542 = vpop.f32.mrb[0].mxu0
  %1543 = vmatprep.mubr.bf16.mxu0 0
  %1544 = vmatmul.mubr.bf16.gmra.mrb[0].mxu0 %v1358
  %v1545 = vpop.f32.mrb[0].mxu0
  %v1546 = vadd.f32 0.0, %v1545
  %v1547 = vpop.f32.mrb[0].mxu0
  %v1548 = vpop.f32.mrb[0].mxu0
  %v1549 = vadd.f32 0.0, %v1548
  %v1550 = vpop.f32.mrb[0].mxu0
  %1551 = vmatprep.mubr.bf16.mxu0 0
  %1552 = vmatmul.mubr.bf16.gmra.mrb[0].mxu0 %v1361
  %v1553 = vpop.f32.mrb[0].mxu0
  %v1554 = vadd.f32 0.0, %v1553
  %v1555 = vpop.f32.mrb[0].mxu0
  %v1556 = vpop.f32.mrb[0].mxu0
  %v1557 = vadd.f32 0.0, %v1556
  %v1558 = vpop.f32.mrb[0].mxu0
  %1559 = vmatprep.mubr.bf16.mxu0 0
  %1560 = vmatmul.mubr.bf16.gmra.mrb[0].mxu0 %v1364
  %v1561 = vpop.f32.mrb[0].mxu0
  %v1562 = vadd.f32 0.0, %v1561
  %v1563 = vpop.f32.mrb[0].mxu0
  %v1564 = vpop.f32.mrb[0].mxu0
  %v1565 = vadd.f32 0.0, %v1564
  %v1566 = vpop.f32.mrb[0].mxu0
  %1567 = vmatprep.mubr.bf16.mxu0 0
  %1568 = vmatmul.mubr.bf16.gmra.mrb[0].mxu0 %v1367
  %v1569 = vpop.f32.mrb[0].mxu0
  %v1570 = vadd.f32 0.0, %v1569
  %v1571 = vpop.f32.mrb[0].mxu0
  %v1572 = vpop.f32.mrb[0].mxu0
  %v1573 = vadd.f32 0.0, %v1572
  %v1574 = vpop.f32.mrb[0].mxu0
  %1575 = vmatprep.mubr.bf16.mxu0 0
  %1576 = vmatmul.mubr.bf16.gmra.mrb[0].mxu0 %v1370
  %v1577 = vpop.f32.mrb[0].mxu0
  %v1578 = vadd.f32 0.0, %v1577
  %v1579 = vpop.f32.mrb[0].mxu0
  %v1580 = vpop.f32.mrb[0].mxu0
  %v1581 = vadd.f32 0.0, %v1580
  %v1582 = vpop.f32.mrb[0].mxu0
  %1583 = vmatprep.mubr.bf16.mxu0 0
  %1584 = vmatmul.mubr.bf16.gmra.mrb[0].mxu0 %v1373
  %v1585 = vpop.f32.mrb[0].mxu0
  %v1586 = vadd.f32 0.0, %v1585
  %v1587 = vpop.f32.mrb[0].mxu0
  %v1588 = vpop.f32.mrb[0].mxu0
  %v1589 = vadd.f32 0.0, %v1588
  %v1590 = vpop.f32.mrb[0].mxu0
  %1591 = vmatprep.mubr.bf16.mxu0 0
  %1592 = vmatmul.mubr.bf16.gmra.mrb[0].mxu0 %v1376
  %v1593 = vpop.f32.mrb[0].mxu0
  %v1594 = vadd.f32 0.0, %v1593
  %v1595 = vpop.f32.mrb[0].mxu0
  %v1596 = vpop.f32.mrb[0].mxu0
  %v1597 = vadd.f32 0.0, %v1596
  %v1598 = vpop.f32.mrb[0].mxu0
  %1599 = vmatprep.mubr.bf16.mxu0 0
  %1600 = vmatmul.mubr.bf16.gmra.mrb[0].mxu0 %v1379
  %v1601 = vpop.f32.mrb[0].mxu0
  %v1602 = vadd.f32 0.0, %v1601
  %v1603 = vpop.f32.mrb[0].mxu0
  %v1604 = vpop.f32.mrb[0].mxu0
  %v1605 = vadd.f32 0.0, %v1604
  %v1606 = vpop.f32.mrb[0].mxu0
  %1607 = vmatprep.mubr.bf16.mxu0 0
  %1608 = vmatmul.mubr.bf16.gmra.mrb[0].mxu0 %v1382
  %v1609 = vpop.f32.mrb[0].mxu0
  %v1610 = vadd.f32 0.0, %v1609
  %v1611 = vpop.f32.mrb[0].mxu0
  %v1612 = vpop.f32.mrb[0].mxu0
  %v1613 = vadd.f32 0.0, %v1612
  %v1614 = vpop.f32.mrb[0].mxu0
  %1615 = vmatprep.mubr.bf16.mxu0 0
  %1616 = vmatmul.mubr.bf16.gmra.mrb[0].mxu0 %v1385
  %v1617 = vpop.f32.mrb[0].mxu0
  %v1618 = vadd.f32 0.0, %v1617
  %v1619 = vpop.f32.mrb[0].mxu0
  %v1620 = vpop.f32.mrb[0].mxu0
  %v1621 = vadd.f32 0.0, %v1620
  %v1622 = vpop.f32.mrb[0].mxu0
  %1623 = vmatprep.mubr.bf16.mxu0 0
  %1624 = vmatmul.mubr.bf16.gmra.mrb[0].mxu0 %v1388
  %v1625 = vpop.f32.mrb[0].mxu0
  %v1626 = vadd.f32 0.0, %v1625
  %v1627 = vpop.f32.mrb[0].mxu0
  %v1628 = vpop.f32.mrb[0].mxu0
  %v1629 = vadd.f32 0.0, %v1628
  %v1630 = vpop.f32.mrb[0].mxu0
  %1631 = vmatprep.mubr.bf16.mxu0 0
  %1632 = vmatmul.mubr.bf16.gmra.mrb[0].mxu0 %v1391
  %v1633 = vpop.f32.mrb[0].mxu0
  %v1634 = vadd.f32 0.0, %v1633
  %v1635 = vpop.f32.mrb[0].mxu0
  %v1636 = vpop.f32.mrb[0].mxu0
  %v1637 = vadd.f32 0.0, %v1636
  %v1638 = vpop.f32.mrb[0].mxu0
  %1639 = vmatprep.mubr.bf16.mxu0 0
  %1640 = vmatmul.mubr.bf16.gmra.mrb[0].mxu0 %v1394
  %v1641 = vpop.f32.mrb[0].mxu0
  %v1642 = vadd.f32 0.0, %v1641
  %v1643 = vpop.f32.mrb[0].mxu0
  %v1644 = vpop.f32.mrb[0].mxu0
  %v1645 = vadd.f32 0.0, %v1644
  %v1646 = vpop.f32.mrb[0].mxu0
  %1647 = vmatprep.mubr.bf16.mxu0 0
  %1648 = vmatmul.mubr.bf16.gmra.mrb[0].mxu0 %v1397
  %v1649 = vpop.f32.mrb[0].mxu0
  %v1650 = vadd.f32 0.0, %v1649
  %v1651 = vpop.f32.mrb[0].mxu0
  %v1652 = vpop.f32.mrb[0].mxu0
  %v1653 = vadd.f32 0.0, %v1652
  %v1654 = vpop.f32.mrb[0].mxu0
  %1655 = vmatprep.mubr.bf16.mxu0 0
  %1656 = vmatmul.mubr.bf16.gmra.mrb[0].mxu0 %v1400
  %v1657 = vpop.f32.mrb[0].mxu0
  %v1658 = vadd.f32 0.0, %v1657
  %v1659 = vpop.f32.mrb[0].mxu0
  %v1660 = vpop.f32.mrb[0].mxu0
  %v1661 = vadd.f32 0.0, %v1660
  %v1662 = vpop.f32.mrb[0].mxu0
  %1663 = vmatprep.mubr.bf16.mxu0 0
  %1664 = vmatmul.mubr.bf16.gmra.mrb[0].mxu0 %v1403
  %v1665 = vpop.f32.mrb[0].mxu0
  %v1666 = vadd.f32 0.0, %v1665
  %v1667 = vpop.f32.mrb[0].mxu0
  %v1668 = vpop.f32.mrb[0].mxu0
  %v1669 = vadd.f32 0.0, %v1668
  %v1670 = vpop.f32.mrb[0].mxu0
  %1671 = vmatprep.mubr.bf16.mxu0 0
  %1672 = vmatmul.mubr.bf16.gmra.mrb[0].mxu0 %v1406
  %v1673 = vpop.f32.mrb[0].mxu0
  %v1674 = vadd.f32 0.0, %v1673
  %v1675 = vpop.f32.mrb[0].mxu0
  %v1676 = vpop.f32.mrb[0].mxu0
  %v1677 = vadd.f32 0.0, %v1676
  %v1678 = vpop.f32.mrb[0].mxu0
  %1679 = vmatprep.mubr.bf16.mxu0 0
  %1680 = vmatmul.mubr.bf16.gmra.mrb[0].mxu0 %v1409
  %v1681 = vpop.f32.mrb[0].mxu0
  %v1682 = vadd.f32 0.0, %v1681
  %v1683 = vpop.f32.mrb[0].mxu0
  %v1684 = vpop.f32.mrb[0].mxu0
  %v1685 = vadd.f32 0.0, %v1684
  %v1686 = vpop.f32.mrb[0].mxu0
  %1687 = vmatprep.mubr.bf16.mxu0 0
  %1688 = vmatmul.mubr.bf16.gmra.mrb[0].mxu0 %v1412
  %v1689 = vpop.f32.mrb[0].mxu0
  %v1690 = vadd.f32 0.0, %v1689
  %v1691 = vpop.f32.mrb[0].mxu0
  %v1692 = vpop.f32.mrb[0].mxu0
  %v1693 = vadd.f32 0.0, %v1692
  %v1694 = vpop.f32.mrb[0].mxu0
  %1695 = vmatprep.mubr.bf16.mxu0 0
  %1696 = vmatmul.mubr.bf16.gmra.mrb[0].mxu0 %v1415
  %v1697 = vpop.f32.mrb[0].mxu0
  %v1698 = vadd.f32 0.0, %v1697
  %v1699 = vpop.f32.mrb[0].mxu0
  %v1700 = vpop.f32.mrb[0].mxu0
  %v1701 = vadd.f32 0.0, %v1700
  %v1702 = vpop.f32.mrb[0].mxu0
  %1703 = vmatprep.mubr.bf16.mxu0 0
  %1704 = vmatmul.mubr.bf16.gmra.mrb[0].mxu0 %v1418
  %v1705 = vpop.f32.mrb[0].mxu0
  %v1706 = vadd.f32 0.0, %v1705
  %v1707 = vpop.f32.mrb[0].mxu0
  %v1708 = vpop.f32.mrb[0].mxu0
  %v1709 = vadd.f32 0.0, %v1708
  %v1710 = vpop.f32.mrb[0].mxu0
  %1711 = vdwg.mxu0
  %v1712 = vadd.f32 %v972, %v1458
  %v1713 = vadd.f32 %v975, %v1461
  %v1714 = vadd.f32 %v980, %v1466
  %v1715 = vadd.f32 %v983, %v1469
  %v1716 = vadd.f32 %v988, %v1474
  %v1717 = vadd.f32 %v991, %v1477
  %v1718 = vadd.f32 %v996, %v1482
  %v1719 = vadd.f32 %v999, %v1485
  %v1720 = vadd.f32 %v1004, %v1490
  %v1721 = vadd.f32 %v1007, %v1493
  %v1722 = vadd.f32 %v1012, %v1498
  %v1723 = vadd.f32 %v1015, %v1501
  %v1724 = vadd.f32 %v1020, %v1506
  %v1725 = vadd.f32 %v1023, %v1509
  %v1726 = vadd.f32 %v1028, %v1514
  %v1727 = vadd.f32 %v1031, %v1517
  %v1728 = vadd.f32 %v1036, %v1522
  %v1729 = vadd.f32 %v1039, %v1525
  %v1730 = vadd.f32 %v1044, %v1530
  %v1731 = vadd.f32 %v1047, %v1533
  %v1732 = vadd.f32 %v1052, %v1538
  %v1733 = vadd.f32 %v1055, %v1541
  %v1734 = vadd.f32 %v1060, %v1546
  %v1735 = vadd.f32 %v1063, %v1549
  %v1736 = vadd.f32 %v1068, %v1554
  %v1737 = vadd.f32 %v1071, %v1557
  %v1738 = vadd.f32 %v1076, %v1562
  %v1739 = vadd.f32 %v1079, %v1565
  %v1740 = vadd.f32 %v1084, %v1570
  %v1741 = vadd.f32 %v1087, %v1573
  %v1742 = vadd.f32 %v1092, %v1578
  %v1743 = vadd.f32 %v1095, %v1581
  %v1744 = vadd.f32 %v1100, %v1586
  %v1745 = vadd.f32 %v1103, %v1589
  %v1746 = vadd.f32 %v1108, %v1594
  %v1747 = vadd.f32 %v1111, %v1597
  %v1748 = vadd.f32 %v1116, %v1602
  %v1749 = vadd.f32 %v1119, %v1605
  %v1750 = vadd.f32 %v1124, %v1610
  %v1751 = vadd.f32 %v1127, %v1613
  %v1752 = vadd.f32 %v1132, %v1618
  %v1753 = vadd.f32 %v1135, %v1621
  %v1754 = vadd.f32 %v1140, %v1626
  %v1755 = vadd.f32 %v1143, %v1629
  %v1756 = vadd.f32 %v1148, %v1634
  %v1757 = vadd.f32 %v1151, %v1637
  %v1758 = vadd.f32 %v1156, %v1642
  %v1759 = vadd.f32 %v1159, %v1645
  %v1760 = vadd.f32 %v1164, %v1650
  %v1761 = vadd.f32 %v1167, %v1653
  %v1762 = vadd.f32 %v1172, %v1658
  %v1763 = vadd.f32 %v1175, %v1661
  %v1764 = vadd.f32 %v1180, %v1666
  %v1765 = vadd.f32 %v1183, %v1669
  %v1766 = vadd.f32 %v1188, %v1674
  %v1767 = vadd.f32 %v1191, %v1677
  %v1768 = vadd.f32 %v1196, %v1682
  %v1769 = vadd.f32 %v1199, %v1685
  %v1770 = vadd.f32 %v1204, %v1690
  %v1771 = vadd.f32 %v1207, %v1693
  %v1772 = vadd.f32 %v1212, %v1698
  %v1773 = vadd.f32 %v1215, %v1701
  %v1774 = vadd.f32 %v1220, %v1706
  %v1775 = vadd.f32 %v1223, %v1709
  %v1776 = vld [vmem:[%s189] sm:$0xff]
  %v1777 = vld [vmem:[%s189 + $0x8] sm:$0xff]
  %v1778 = vld [vmem:[%s189 + $0x18] sm:$0xff]
  %v1779 = vld [vmem:[%s189 + $0x20] sm:$0xff]
  %v1780 = vld [vmem:[%s189 + $0x30] sm:$0xff]
  %v1781 = vld [vmem:[%s189 + $0x38] sm:$0xff]
  %v1782 = vld [vmem:[%s189 + $0x48] sm:$0xff]
  %v1783 = vld [vmem:[%s189 + $0x50] sm:$0xff]
  %v1784 = vld [vmem:[%s189 + $0x60] sm:$0xff]
  %v1785 = vld [vmem:[%s189 + $0x68] sm:$0xff]
  %v1786 = vld [vmem:[%s189 + $0x78] sm:$0xff]
  %v1787 = vld [vmem:[%s189 + $0x80] sm:$0xff]
  %v1788 = vld [vmem:[%s189 + $0x90] sm:$0xff]
  %v1789 = vld [vmem:[%s189 + $0x98] sm:$0xff]
  %v1790 = vld [vmem:[%s189 + $0xa8] sm:$0xff]
  %v1791 = vld [vmem:[%s189 + $0xb0] sm:$0xff]
  %v1792 = vld [vmem:[%s189 + $0xc0] sm:$0xff]
  %v1793 = vld [vmem:[%s189 + $0xc8] sm:$0xff]
  %v1794 = vld [vmem:[%s189 + $0xd8] sm:$0xff]
  %v1795 = vld [vmem:[%s189 + $0xe0] sm:$0xff]
  %v1796 = vld [vmem:[%s189 + $0xf0] sm:$0xff]
  %v1797 = vld [vmem:[%s189 + $0xf8] sm:$0xff]
  %v1798 = vld [vmem:[%s189 + $0x108] sm:$0xff]
  %v1799 = vld [vmem:[%s189 + $0x110] sm:$0xff]
  %v1800 = vld [vmem:[%s189 + $0x120] sm:$0xff]
  %v1801 = vld [vmem:[%s189 + $0x128] sm:$0xff]
  %v1802 = vld [vmem:[%s189 + $0x138] sm:$0xff]
  %v1803 = vld [vmem:[%s189 + $0x140] sm:$0xff]
  %v1804 = vld [vmem:[%s189 + $0x150] sm:$0xff]
  %v1805 = vld [vmem:[%s189 + $0x158] sm:$0xff]
  %v1806 = vld [vmem:[%s189 + $0x168] sm:$0xff]
  %v1807 = vld [vmem:[%s189 + $0x170] sm:$0xff]
  %v1808 = vld [vmem:[%s189 + $0x1b0] sm:$0xff]
  %v1809 = vld [vmem:[%s189 + $0x1b8] sm:$0xff]
  %v1810 = vld [vmem:[%s189 + $0x1c8] sm:$0xff]
  %v1811 = vld [vmem:[%s189 + $0x1d0] sm:$0xff]
  %v1812 = vld [vmem:[%s189 + $0x1e0] sm:$0xff]
  %v1813 = vld [vmem:[%s189 + $0x1e8] sm:$0xff]
  %v1814 = vld [vmem:[%s189 + $0x1f8] sm:$0xff]
  %v1815 = vld [vmem:[%s189 + $0x200] sm:$0xff]
  %v1816 = vld [vmem:[%s189 + $0x210] sm:$0xff]
  %v1817 = vld [vmem:[%s189 + $0x218] sm:$0xff]
  %v1818 = vld [vmem:[%s189 + $0x228] sm:$0xff]
  %v1819 = vld [vmem:[%s189 + $0x230] sm:$0xff]
  %v1820 = vld [vmem:[%s189 + $0x240] sm:$0xff]
  %v1821 = vld [vmem:[%s189 + $0x248] sm:$0xff]
  %v1822 = vld [vmem:[%s189 + $0x258] sm:$0xff]
  %v1823 = vld [vmem:[%s189 + $0x260] sm:$0xff]
  %v1824 = vld [vmem:[%s189 + $0x270] sm:$0xff]
  %v1825 = vld [vmem:[%s189 + $0x278] sm:$0xff]
  %v1826 = vld [vmem:[%s189 + $0x288] sm:$0xff]
  %v1827 = vld [vmem:[%s189 + $0x290] sm:$0xff]
  %v1828 = vld [vmem:[%s189 + $0x2a0] sm:$0xff]
  %v1829 = vld [vmem:[%s189 + $0x2a8] sm:$0xff]
  %v1830 = vld [vmem:[%s189 + $0x2b8] sm:$0xff]
  %v1831 = vld [vmem:[%s189 + $0x2c0] sm:$0xff]
  %v1832 = vld [vmem:[%s189 + $0x2d0] sm:$0xff]
  %v1833 = vld [vmem:[%s189 + $0x2d8] sm:$0xff]
  %v1834 = vld [vmem:[%s189 + $0x2e8] sm:$0xff]
  %v1835 = vld [vmem:[%s189 + $0x2f0] sm:$0xff]
  %v1836 = vld [vmem:[%s189 + $0x300] sm:$0xff]
  %v1837 = vld [vmem:[%s189 + $0x308] sm:$0xff]
  %v1838 = vld [vmem:[%s189 + $0x318] sm:$0xff]
  %v1839 = vld [vmem:[%s189 + $0x320] sm:$0xff]
  %v1840 = vpack.c.bf16 %v1777, %v1776
  %v1841 = vpack.c.bf16 %v1779, %v1778
  %v1842 = vpack.c.bf16 %v1781, %v1780
  %v1843 = vpack.c.bf16 %v1783, %v1782
  %v1844 = vpack.c.bf16 %v1785, %v1784
  %v1845 = vpack.c.bf16 %v1787, %v1786
  %v1846 = vpack.c.bf16 %v1789, %v1788
  %v1847 = vpack.c.bf16 %v1791, %v1790
  %v1848 = vpack.c.bf16 %v1793, %v1792
  %v1849 = vpack.c.bf16 %v1795, %v1794
  %v1850 = vpack.c.bf16 %v1797, %v1796
  %v1851 = vpack.c.bf16 %v1799, %v1798
  %v1852 = vpack.c.bf16 %v1801, %v1800
  %v1853 = vpack.c.bf16 %v1803, %v1802
  %v1854 = vpack.c.bf16 %v1805, %v1804
  %v1855 = vpack.c.bf16 %v1807, %v1806
  %v1856 = vpack.c.bf16 %v1809, %v1808
  %v1857 = vpack.c.bf16 %v1811, %v1810
  %v1858 = vpack.c.bf16 %v1813, %v1812
  %v1859 = vpack.c.bf16 %v1815, %v1814
  %v1860 = vpack.c.bf16 %v1817, %v1816
  %v1861 = vpack.c.bf16 %v1819, %v1818
  %v1862 = vpack.c.bf16 %v1821, %v1820
  %v1863 = vpack.c.bf16 %v1823, %v1822
  %v1864 = vpack.c.bf16 %v1825, %v1824
  %v1865 = vpack.c.bf16 %v1827, %v1826
  %v1866 = vpack.c.bf16 %v1829, %v1828
  %v1867 = vpack.c.bf16 %v1831, %v1830
  %v1868 = vpack.c.bf16 %v1833, %v1832
  %v1869 = vpack.c.bf16 %v1835, %v1834
  %v1870 = vpack.c.bf16 %v1837, %v1836
  %v1871 = vpack.c.bf16 %v1839, %v1838
  %s1872 = scalar_lea.vmem %s1, 6
  %v1873 = vld [vmem:[%s1872] sm:$0x3]
  %v1875 = vsel %vm15, %v1840, 0
  %v1878 = vsel %vm15, %v1841, 0
  %v1881 = vsel %vm15, %v1842, 0
  %v1884 = vsel %vm15, %v1843, 0
  %v1887 = vsel %vm15, %v1844, 0
  %v1890 = vsel %vm15, %v1845, 0
  %v1893 = vsel %vm15, %v1846, 0
  %v1896 = vsel %vm15, %v1847, 0
  %v1899 = vsel %vm15, %v1848, 0
  %v1902 = vsel %vm15, %v1849, 0
  %v1905 = vsel %vm15, %v1850, 0
  %v1908 = vsel %vm15, %v1851, 0
  %v1911 = vsel %vm15, %v1852, 0
  %v1914 = vsel %vm15, %v1853, 0
  %v1917 = vsel %vm15, %v1854, 0
  %v1920 = vsel %vm15, %v1855, 0
  %v1923 = vsel %vm15, %v1856, 0
  %v1926 = vsel %vm15, %v1857, 0
  %v1929 = vsel %vm15, %v1858, 0
  %v1932 = vsel %vm15, %v1859, 0
  %v1935 = vsel %vm15, %v1860, 0
  %v1938 = vsel %vm15, %v1861, 0
  %v1941 = vsel %vm15, %v1862, 0
  %v1944 = vsel %vm15, %v1863, 0
  %v1947 = vsel %vm15, %v1864, 0
  %v1950 = vsel %vm15, %v1865, 0
  %v1953 = vsel %vm15, %v1866, 0
  %v1956 = vsel %vm15, %v1867, 0
  %v1959 = vsel %vm15, %v1868, 0
  %v1962 = vsel %vm15, %v1869, 0
  %v1965 = vsel %vm15, %v1870, 0
  %v1968 = vsel %vm15, %v1871, 0
  %v1971 = vsel %vm545, %v1873, 0
  %1973 = vmatprep.subr.bf16.mxu0 0
  %1974 = vmatpush1.bf16.msra.mxu0 %v1971
  %1975 = vmatprep.subr.bf16.mxu0 0
  %1976 = vmatpush1.bf16.msra.mxu0 0
  %1977 = vmatprep.subr.bf16.mxu0 0
  %1978 = vmatpush1.bf16.msra.mxu0 0
  %1979 = vmatprep.subr.bf16.mxu0 0
  %1980 = vmatpush1.bf16.msra.mxu0 0
  %1981 = vmatprep.subr.bf16.mxu0 0
  %1982 = vmatpush1.bf16.msra.mxu0 0
  %1983 = vmatprep.subr.bf16.mxu0 0
  %1984 = vmatpush1.bf16.msra.mxu0 0
  %1985 = vmatprep.subr.bf16.mxu0 0
  %1986 = vmatpush1.bf16.msra.mxu0 0
  %1987 = vmatprep.subr.bf16.mxu0 0
  %1988 = vmatpush1.bf16.msra.mxu0 0
  %1989 = vmatprep.subr.bf16.mxu0 0
  %1990 = vmatpush1.bf16.msra.mxu0 0
  %1991 = vmatprep.subr.bf16.mxu0 0
  %1992 = vmatpush1.bf16.msra.mxu0 0
  %1993 = vmatprep.subr.bf16.mxu0 0
  %1994 = vmatpush1.bf16.msra.mxu0 0
  %1995 = vmatprep.subr.bf16.mxu0 0
  %1996 = vmatpush1.bf16.msra.mxu0 0
  %1997 = vmatprep.subr.bf16.mxu0 0
  %1998 = vmatpush1.bf16.msra.mxu0 0
  %1999 = vmatprep.subr.bf16.mxu0 0
  %2000 = vmatpush1.bf16.msra.mxu0 0
  %2001 = vmatprep.subr.bf16.mxu0 0
  %2002 = vmatpush1.bf16.msra.mxu0 0
  %2003 = vmatprep.subr.bf16.mxu0 0
  %2004 = vmatpush1.bf16.msra.mxu0 0
  %2005 = vmatprep.mubr.bf16.mxu0 0
  %2006 = vmatmul.mubr.bf16.gmra.mrb[0].mxu0 %v1875
  %v2007 = vpop.f32.mrb[0].mxu0
  %v2008 = vadd.f32 0.0, %v2007
  %v2009 = vpop.f32.mrb[0].mxu0
  %v2010 = vpop.f32.mrb[0].mxu0
  %v2011 = vadd.f32 0.0, %v2010
  %v2012 = vpop.f32.mrb[0].mxu0
  %2013 = vmatprep.mubr.bf16.mxu0 0
  %2014 = vmatmul.mubr.bf16.gmra.mrb[0].mxu0 %v1878
  %v2015 = vpop.f32.mrb[0].mxu0
  %v2016 = vadd.f32 0.0, %v2015
  %v2017 = vpop.f32.mrb[0].mxu0
  %v2018 = vpop.f32.mrb[0].mxu0
  %v2019 = vadd.f32 0.0, %v2018
  %v2020 = vpop.f32.mrb[0].mxu0
  %2021 = vmatprep.mubr.bf16.mxu0 0
  %2022 = vmatmul.mubr.bf16.gmra.mrb[0].mxu0 %v1881
  %v2023 = vpop.f32.mrb[0].mxu0
  %v2024 = vadd.f32 0.0, %v2023
  %v2025 = vpop.f32.mrb[0].mxu0
  %v2026 = vpop.f32.mrb[0].mxu0
  %v2027 = vadd.f32 0.0, %v2026
  %v2028 = vpop.f32.mrb[0].mxu0
  %2029 = vmatprep.mubr.bf16.mxu0 0
  %2030 = vmatmul.mubr.bf16.gmra.mrb[0].mxu0 %v1884
  %v2031 = vpop.f32.mrb[0].mxu0
  %v2032 = vadd.f32 0.0, %v2031
  %v2033 = vpop.f32.mrb[0].mxu0
  %v2034 = vpop.f32.mrb[0].mxu0
  %v2035 = vadd.f32 0.0, %v2034
  %v2036 = vpop.f32.mrb[0].mxu0
  %2037 = vmatprep.mubr.bf16.mxu0 0
  %2038 = vmatmul.mubr.bf16.gmra.mrb[0].mxu0 %v1887
  %v2039 = vpop.f32.mrb[0].mxu0
  %v2040 = vadd.f32 0.0, %v2039
  %v2041 = vpop.f32.mrb[0].mxu0
  %v2042 = vpop.f32.mrb[0].mxu0
  %v2043 = vadd.f32 0.0, %v2042
  %v2044 = vpop.f32.mrb[0].mxu0
  %2045 = vmatprep.mubr.bf16.mxu0 0
  %2046 = vmatmul.mubr.bf16.gmra.mrb[0].mxu0 %v1890
  %v2047 = vpop.f32.mrb[0].mxu0
  %v2048 = vadd.f32 0.0, %v2047
  %v2049 = vpop.f32.mrb[0].mxu0
  %v2050 = vpop.f32.mrb[0].mxu0
  %v2051 = vadd.f32 0.0, %v2050
  %v2052 = vpop.f32.mrb[0].mxu0
  %2053 = vmatprep.mubr.bf16.mxu0 0
  %2054 = vmatmul.mubr.bf16.gmra.mrb[0].mxu0 %v1893
  %v2055 = vpop.f32.mrb[0].mxu0
  %v2056 = vadd.f32 0.0, %v2055
  %v2057 = vpop.f32.mrb[0].mxu0
  %v2058 = vpop.f32.mrb[0].mxu0
  %v2059 = vadd.f32 0.0, %v2058
  %v2060 = vpop.f32.mrb[0].mxu0
  %2061 = vmatprep.mubr.bf16.mxu0 0
  %2062 = vmatmul.mubr.bf16.gmra.mrb[0].mxu0 %v1896
  %v2063 = vpop.f32.mrb[0].mxu0
  %v2064 = vadd.f32 0.0, %v2063
  %v2065 = vpop.f32.mrb[0].mxu0
  %v2066 = vpop.f32.mrb[0].mxu0
  %v2067 = vadd.f32 0.0, %v2066
  %v2068 = vpop.f32.mrb[0].mxu0
  %2069 = vmatprep.mubr.bf16.mxu0 0
  %2070 = vmatmul.mubr.bf16.gmra.mrb[0].mxu0 %v1899
  %v2071 = vpop.f32.mrb[0].mxu0
  %v2072 = vadd.f32 0.0, %v2071
  %v2073 = vpop.f32.mrb[0].mxu0
  %v2074 = vpop.f32.mrb[0].mxu0
  %v2075 = vadd.f32 0.0, %v2074
  %v2076 = vpop.f32.mrb[0].mxu0
  %2077 = vmatprep.mubr.bf16.mxu0 0
  %2078 = vmatmul.mubr.bf16.gmra.mrb[0].mxu0 %v1902
  %v2079 = vpop.f32.mrb[0].mxu0
  %v2080 = vadd.f32 0.0, %v2079
  %v2081 = vpop.f32.mrb[0].mxu0
  %v2082 = vpop.f32.mrb[0].mxu0
  %v2083 = vadd.f32 0.0, %v2082
  %v2084 = vpop.f32.mrb[0].mxu0
  %2085 = vmatprep.mubr.bf16.mxu0 0
  %2086 = vmatmul.mubr.bf16.gmra.mrb[0].mxu0 %v1905
  %v2087 = vpop.f32.mrb[0].mxu0
  %v2088 = vadd.f32 0.0, %v2087
  %v2089 = vpop.f32.mrb[0].mxu0
  %v2090 = vpop.f32.mrb[0].mxu0
  %v2091 = vadd.f32 0.0, %v2090
  %v2092 = vpop.f32.mrb[0].mxu0
  %2093 = vmatprep.mubr.bf16.mxu0 0
  %2094 = vmatmul.mubr.bf16.gmra.mrb[0].mxu0 %v1908
  %v2095 = vpop.f32.mrb[0].mxu0
  %v2096 = vadd.f32 0.0, %v2095
  %v2097 = vpop.f32.mrb[0].mxu0
  %v2098 = vpop.f32.mrb[0].mxu0
  %v2099 = vadd.f32 0.0, %v2098
  %v2100 = vpop.f32.mrb[0].mxu0
  %2101 = vmatprep.mubr.bf16.mxu0 0
  %2102 = vmatmul.mubr.bf16.gmra.mrb[0].mxu0 %v1911
  %v2103 = vpop.f32.mrb[0].mxu0
  %v2104 = vadd.f32 0.0, %v2103
  %v2105 = vpop.f32.mrb[0].mxu0
  %v2106 = vpop.f32.mrb[0].mxu0
  %v2107 = vadd.f32 0.0, %v2106
  %v2108 = vpop.f32.mrb[0].mxu0
  %2109 = vmatprep.mubr.bf16.mxu0 0
  %2110 = vmatmul.mubr.bf16.gmra.mrb[0].mxu0 %v1914
  %v2111 = vpop.f32.mrb[0].mxu0
  %v2112 = vadd.f32 0.0, %v2111
  %v2113 = vpop.f32.mrb[0].mxu0
  %v2114 = vpop.f32.mrb[0].mxu0
  %v2115 = vadd.f32 0.0, %v2114
  %v2116 = vpop.f32.mrb[0].mxu0
  %2117 = vmatprep.mubr.bf16.mxu0 0
  %2118 = vmatmul.mubr.bf16.gmra.mrb[0].mxu0 %v1917
  %v2119 = vpop.f32.mrb[0].mxu0
  %v2120 = vadd.f32 0.0, %v2119
  %v2121 = vpop.f32.mrb[0].mxu0
  %v2122 = vpop.f32.mrb[0].mxu0
  %v2123 = vadd.f32 0.0, %v2122
  %v2124 = vpop.f32.mrb[0].mxu0
  %2125 = vmatprep.mubr.bf16.mxu0 0
  %2126 = vmatmul.mubr.bf16.gmra.mrb[0].mxu0 %v1920
  %v2127 = vpop.f32.mrb[0].mxu0
  %v2128 = vadd.f32 0.0, %v2127
  %v2129 = vpop.f32.mrb[0].mxu0
  %v2130 = vpop.f32.mrb[0].mxu0
  %v2131 = vadd.f32 0.0, %v2130
  %v2132 = vpop.f32.mrb[0].mxu0
  %2133 = vmatprep.mubr.bf16.mxu0 0
  %2134 = vmatmul.mubr.bf16.gmra.mrb[0].mxu0 %v1923
  %v2135 = vpop.f32.mrb[0].mxu0
  %v2136 = vadd.f32 0.0, %v2135
  %v2137 = vpop.f32.mrb[0].mxu0
  %v2138 = vpop.f32.mrb[0].mxu0
  %v2139 = vadd.f32 0.0, %v2138
  %v2140 = vpop.f32.mrb[0].mxu0
  %2141 = vmatprep.mubr.bf16.mxu0 0
  %2142 = vmatmul.mubr.bf16.gmra.mrb[0].mxu0 %v1926
  %v2143 = vpop.f32.mrb[0].mxu0
  %v2144 = vadd.f32 0.0, %v2143
  %v2145 = vpop.f32.mrb[0].mxu0
  %v2146 = vpop.f32.mrb[0].mxu0
  %v2147 = vadd.f32 0.0, %v2146
  %v2148 = vpop.f32.mrb[0].mxu0
  %2149 = vmatprep.mubr.bf16.mxu0 0
  %2150 = vmatmul.mubr.bf16.gmra.mrb[0].mxu0 %v1929
  %v2151 = vpop.f32.mrb[0].mxu0
  %v2152 = vadd.f32 0.0, %v2151
  %v2153 = vpop.f32.mrb[0].mxu0
  %v2154 = vpop.f32.mrb[0].mxu0
  %v2155 = vadd.f32 0.0, %v2154
  %v2156 = vpop.f32.mrb[0].mxu0
  %2157 = vmatprep.mubr.bf16.mxu0 0
  %2158 = vmatmul.mubr.bf16.gmra.mrb[0].mxu0 %v1932
  %v2159 = vpop.f32.mrb[0].mxu0
  %v2160 = vadd.f32 0.0, %v2159
  %v2161 = vpop.f32.mrb[0].mxu0
  %v2162 = vpop.f32.mrb[0].mxu0
  %v2163 = vadd.f32 0.0, %v2162
  %v2164 = vpop.f32.mrb[0].mxu0
  %2165 = vmatprep.mubr.bf16.mxu0 0
  %2166 = vmatmul.mubr.bf16.gmra.mrb[0].mxu0 %v1935
  %v2167 = vpop.f32.mrb[0].mxu0
  %v2168 = vadd.f32 0.0, %v2167
  %v2169 = vpop.f32.mrb[0].mxu0
  %v2170 = vpop.f32.mrb[0].mxu0
  %v2171 = vadd.f32 0.0, %v2170
  %v2172 = vpop.f32.mrb[0].mxu0
  %2173 = vmatprep.mubr.bf16.mxu0 0
  %2174 = vmatmul.mubr.bf16.gmra.mrb[0].mxu0 %v1938
  %v2175 = vpop.f32.mrb[0].mxu0
  %v2176 = vadd.f32 0.0, %v2175
  %v2177 = vpop.f32.mrb[0].mxu0
  %v2178 = vpop.f32.mrb[0].mxu0
  %v2179 = vadd.f32 0.0, %v2178
  %v2180 = vpop.f32.mrb[0].mxu0
  %2181 = vmatprep.mubr.bf16.mxu0 0
  %2182 = vmatmul.mubr.bf16.gmra.mrb[0].mxu0 %v1941
  %v2183 = vpop.f32.mrb[0].mxu0
  %v2184 = vadd.f32 0.0, %v2183
  %v2185 = vpop.f32.mrb[0].mxu0
  %v2186 = vpop.f32.mrb[0].mxu0
  %v2187 = vadd.f32 0.0, %v2186
  %v2188 = vpop.f32.mrb[0].mxu0
  %2189 = vmatprep.mubr.bf16.mxu0 0
  %2190 = vmatmul.mubr.bf16.gmra.mrb[0].mxu0 %v1944
  %v2191 = vpop.f32.mrb[0].mxu0
  %v2192 = vadd.f32 0.0, %v2191
  %v2193 = vpop.f32.mrb[0].mxu0
  %v2194 = vpop.f32.mrb[0].mxu0
  %v2195 = vadd.f32 0.0, %v2194
  %v2196 = vpop.f32.mrb[0].mxu0
  %2197 = vmatprep.mubr.bf16.mxu0 0
  %2198 = vmatmul.mubr.bf16.gmra.mrb[0].mxu0 %v1947
  %v2199 = vpop.f32.mrb[0].mxu0
  %v2200 = vadd.f32 0.0, %v2199
  %v2201 = vpop.f32.mrb[0].mxu0
  %v2202 = vpop.f32.mrb[0].mxu0
  %v2203 = vadd.f32 0.0, %v2202
  %v2204 = vpop.f32.mrb[0].mxu0
  %2205 = vmatprep.mubr.bf16.mxu0 0
  %2206 = vmatmul.mubr.bf16.gmra.mrb[0].mxu0 %v1950
  %v2207 = vpop.f32.mrb[0].mxu0
  %v2208 = vadd.f32 0.0, %v2207
  %v2209 = vpop.f32.mrb[0].mxu0
  %v2210 = vpop.f32.mrb[0].mxu0
  %v2211 = vadd.f32 0.0, %v2210
  %v2212 = vpop.f32.mrb[0].mxu0
  %2213 = vmatprep.mubr.bf16.mxu0 0
  %2214 = vmatmul.mubr.bf16.gmra.mrb[0].mxu0 %v1953
  %v2215 = vpop.f32.mrb[0].mxu0
  %v2216 = vadd.f32 0.0, %v2215
  %v2217 = vpop.f32.mrb[0].mxu0
  %v2218 = vpop.f32.mrb[0].mxu0
  %v2219 = vadd.f32 0.0, %v2218
  %v2220 = vpop.f32.mrb[0].mxu0
  %2221 = vmatprep.mubr.bf16.mxu0 0
  %2222 = vmatmul.mubr.bf16.gmra.mrb[0].mxu0 %v1956
  %v2223 = vpop.f32.mrb[0].mxu0
  %v2224 = vadd.f32 0.0, %v2223
  %v2225 = vpop.f32.mrb[0].mxu0
  %v2226 = vpop.f32.mrb[0].mxu0
  %v2227 = vadd.f32 0.0, %v2226
  %v2228 = vpop.f32.mrb[0].mxu0
  %2229 = vmatprep.mubr.bf16.mxu0 0
  %2230 = vmatmul.mubr.bf16.gmra.mrb[0].mxu0 %v1959
  %v2231 = vpop.f32.mrb[0].mxu0
  %v2232 = vadd.f32 0.0, %v2231
  %v2233 = vpop.f32.mrb[0].mxu0
  %v2234 = vpop.f32.mrb[0].mxu0
  %v2235 = vadd.f32 0.0, %v2234
  %v2236 = vpop.f32.mrb[0].mxu0
  %2237 = vmatprep.mubr.bf16.mxu0 0
  %2238 = vmatmul.mubr.bf16.gmra.mrb[0].mxu0 %v1962
  %v2239 = vpop.f32.mrb[0].mxu0
  %v2240 = vadd.f32 0.0, %v2239
  %v2241 = vpop.f32.mrb[0].mxu0
  %v2242 = vpop.f32.mrb[0].mxu0
  %v2243 = vadd.f32 0.0, %v2242
  %v2244 = vpop.f32.mrb[0].mxu0
  %2245 = vmatprep.mubr.bf16.mxu0 0
  %2246 = vmatmul.mubr.bf16.gmra.mrb[0].mxu0 %v1965
  %v2247 = vpop.f32.mrb[0].mxu0
  %v2248 = vadd.f32 0.0, %v2247
  %v2249 = vpop.f32.mrb[0].mxu0
  %v2250 = vpop.f32.mrb[0].mxu0
  %v2251 = vadd.f32 0.0, %v2250
  %v2252 = vpop.f32.mrb[0].mxu0
  %2253 = vmatprep.mubr.bf16.mxu0 0
  %2254 = vmatmul.mubr.bf16.gmra.mrb[0].mxu0 %v1968
  %v2255 = vpop.f32.mrb[0].mxu0
  %v2256 = vadd.f32 0.0, %v2255
  %v2257 = vpop.f32.mrb[0].mxu0
  %v2258 = vpop.f32.mrb[0].mxu0
  %v2259 = vadd.f32 0.0, %v2258
  %v2260 = vpop.f32.mrb[0].mxu0
  %2261 = vdwg.mxu0
  %v2262 = vadd.f32 %v1712, %v2008
  %v2263 = vadd.f32 %v1713, %v2011
  %v2264 = vadd.f32 %v1714, %v2016
  %v2265 = vadd.f32 %v1715, %v2019
  %v2266 = vadd.f32 %v1716, %v2024
  %v2267 = vadd.f32 %v1717, %v2027
  %v2268 = vadd.f32 %v1718, %v2032
  %v2269 = vadd.f32 %v1719, %v2035
  %v2270 = vadd.f32 %v1720, %v2040
  %v2271 = vadd.f32 %v1721, %v2043
  %v2272 = vadd.f32 %v1722, %v2048
  %v2273 = vadd.f32 %v1723, %v2051
  %v2274 = vadd.f32 %v1724, %v2056
  %v2275 = vadd.f32 %v1725, %v2059
  %v2276 = vadd.f32 %v1726, %v2064
  %v2277 = vadd.f32 %v1727, %v2067
  %v2278 = vadd.f32 %v1728, %v2072
  %v2279 = vadd.f32 %v1729, %v2075
  %v2280 = vadd.f32 %v1730, %v2080
  %v2281 = vadd.f32 %v1731, %v2083
  %v2282 = vadd.f32 %v1732, %v2088
  %v2283 = vadd.f32 %v1733, %v2091
  %v2284 = vadd.f32 %v1734, %v2096
  %v2285 = vadd.f32 %v1735, %v2099
  %v2286 = vadd.f32 %v1736, %v2104
  %v2287 = vadd.f32 %v1737, %v2107
  %v2288 = vadd.f32 %v1738, %v2112
  %v2289 = vadd.f32 %v1739, %v2115
  %v2290 = vadd.f32 %v1740, %v2120
  %v2291 = vadd.f32 %v1741, %v2123
  %v2292 = vadd.f32 %v1742, %v2128
  %v2293 = vadd.f32 %v1743, %v2131
  %v2294 = vadd.f32 %v1744, %v2136
  %v2295 = vadd.f32 %v1745, %v2139
  %v2296 = vadd.f32 %v1746, %v2144
  %v2297 = vadd.f32 %v1747, %v2147
  %v2298 = vadd.f32 %v1748, %v2152
  %v2299 = vadd.f32 %v1749, %v2155
  %v2300 = vadd.f32 %v1750, %v2160
  %v2301 = vadd.f32 %v1751, %v2163
  %v2302 = vadd.f32 %v1752, %v2168
  %v2303 = vadd.f32 %v1753, %v2171
  %v2304 = vadd.f32 %v1754, %v2176
  %v2305 = vadd.f32 %v1755, %v2179
  %v2306 = vadd.f32 %v1756, %v2184
  %v2307 = vadd.f32 %v1757, %v2187
  %v2308 = vadd.f32 %v1758, %v2192
  %v2309 = vadd.f32 %v1759, %v2195
  %v2310 = vadd.f32 %v1760, %v2200
  %v2311 = vadd.f32 %v1761, %v2203
  %v2312 = vadd.f32 %v1762, %v2208
  %v2313 = vadd.f32 %v1763, %v2211
  %v2314 = vadd.f32 %v1764, %v2216
  %v2315 = vadd.f32 %v1765, %v2219
  %v2316 = vadd.f32 %v1766, %v2224
  %v2317 = vadd.f32 %v1767, %v2227
  %v2318 = vadd.f32 %v1768, %v2232
  %v2319 = vadd.f32 %v1769, %v2235
  %v2320 = vadd.f32 %v1770, %v2240
  %v2321 = vadd.f32 %v1771, %v2243
  %v2322 = vadd.f32 %v1772, %v2248
  %v2323 = vadd.f32 %v1773, %v2251
  %v2324 = vadd.f32 %v1774, %v2256
  %v2325 = vadd.f32 %v1775, %v2259
  %v2326 = vld [vmem:[%s189 + $0x1] sm:$0xff]
  %v2327 = vld [vmem:[%s189 + $0x9] sm:$0xff]
  %v2328 = vld [vmem:[%s189 + $0x19] sm:$0xff]
  %v2329 = vld [vmem:[%s189 + $0x21] sm:$0xff]
  %v2330 = vld [vmem:[%s189 + $0x31] sm:$0xff]
  %v2331 = vld [vmem:[%s189 + $0x39] sm:$0xff]
  %v2332 = vld [vmem:[%s189 + $0x49] sm:$0xff]
  %v2333 = vld [vmem:[%s189 + $0x51] sm:$0xff]
  %v2334 = vld [vmem:[%s189 + $0x61] sm:$0xff]
  %v2335 = vld [vmem:[%s189 + $0x69] sm:$0xff]
  %v2336 = vld [vmem:[%s189 + $0x79] sm:$0xff]
  %v2337 = vld [vmem:[%s189 + $0x81] sm:$0xff]
  %v2338 = vld [vmem:[%s189 + $0x91] sm:$0xff]
  %v2339 = vld [vmem:[%s189 + $0x99] sm:$0xff]
  %v2340 = vld [vmem:[%s189 + $0xa9] sm:$0xff]
  %v2341 = vld [vmem:[%s189 + $0xb1] sm:$0xff]
  %v2342 = vld [vmem:[%s189 + $0xc1] sm:$0xff]
  %v2343 = vld [vmem:[%s189 + $0xc9] sm:$0xff]
  %v2344 = vld [vmem:[%s189 + $0xd9] sm:$0xff]
  %v2345 = vld [vmem:[%s189 + $0xe1] sm:$0xff]
  %v2346 = vld [vmem:[%s189 + $0xf1] sm:$0xff]
  %v2347 = vld [vmem:[%s189 + $0xf9] sm:$0xff]
  %v2348 = vld [vmem:[%s189 + $0x109] sm:$0xff]
  %v2349 = vld [vmem:[%s189 + $0x111] sm:$0xff]
  %v2350 = vld [vmem:[%s189 + $0x121] sm:$0xff]
  %v2351 = vld [vmem:[%s189 + $0x129] sm:$0xff]
  %v2352 = vld [vmem:[%s189 + $0x139] sm:$0xff]
  %v2353 = vld [vmem:[%s189 + $0x141] sm:$0xff]
  %v2354 = vld [vmem:[%s189 + $0x151] sm:$0xff]
  %v2355 = vld [vmem:[%s189 + $0x159] sm:$0xff]
  %v2356 = vld [vmem:[%s189 + $0x169] sm:$0xff]
  %v2357 = vld [vmem:[%s189 + $0x171] sm:$0xff]
  %v2358 = vld [vmem:[%s189 + $0x1b1] sm:$0xff]
  %v2359 = vld [vmem:[%s189 + $0x1b9] sm:$0xff]
  %v2360 = vld [vmem:[%s189 + $0x1c9] sm:$0xff]
  %v2361 = vld [vmem:[%s189 + $0x1d1] sm:$0xff]
  %v2362 = vld [vmem:[%s189 + $0x1e1] sm:$0xff]
  %v2363 = vld [vmem:[%s189 + $0x1e9] sm:$0xff]
  %v2364 = vld [vmem:[%s189 + $0x1f9] sm:$0xff]
  %v2365 = vld [vmem:[%s189 + $0x201] sm:$0xff]
  %v2366 = vld [vmem:[%s189 + $0x211] sm:$0xff]
  %v2367 = vld [vmem:[%s189 + $0x219] sm:$0xff]
  %v2368 = vld [vmem:[%s189 + $0x229] sm:$0xff]
  %v2369 = vld [vmem:[%s189 + $0x231] sm:$0xff]
  %v2370 = vld [vmem:[%s189 + $0x241] sm:$0xff]
  %v2371 = vld [vmem:[%s189 + $0x249] sm:$0xff]
  %v2372 = vld [vmem:[%s189 + $0x259] sm:$0xff]
  %v2373 = vld [vmem:[%s189 + $0x261] sm:$0xff]
  %v2374 = vld [vmem:[%s189 + $0x271] sm:$0xff]
  %v2375 = vld [vmem:[%s189 + $0x279] sm:$0xff]
  %v2376 = vld [vmem:[%s189 + $0x289] sm:$0xff]
  %v2377 = vld [vmem:[%s189 + $0x291] sm:$0xff]
  %v2378 = vld [vmem:[%s189 + $0x2a1] sm:$0xff]
  %v2379 = vld [vmem:[%s189 + $0x2a9] sm:$0xff]
  %v2380 = vld [vmem:[%s189 + $0x2b9] sm:$0xff]
  %v2381 = vld [vmem:[%s189 + $0x2c1] sm:$0xff]
  %v2382 = vld [vmem:[%s189 + $0x2d1] sm:$0xff]
  %v2383 = vld [vmem:[%s189 + $0x2d9] sm:$0xff]
  %v2384 = vld [vmem:[%s189 + $0x2e9] sm:$0xff]
  %v2385 = vld [vmem:[%s189 + $0x2f1] sm:$0xff]
  %v2386 = vld [vmem:[%s189 + $0x301] sm:$0xff]
  %v2387 = vld [vmem:[%s189 + $0x309] sm:$0xff]
  %v2388 = vld [vmem:[%s189 + $0x319] sm:$0xff]
  %v2389 = vld [vmem:[%s189 + $0x321] sm:$0xff]
  %v2390 = vpack.c.bf16 %v2327, %v2326
  %v2391 = vpack.c.bf16 %v2329, %v2328
  %v2392 = vpack.c.bf16 %v2331, %v2330
  %v2393 = vpack.c.bf16 %v2333, %v2332
  %v2394 = vpack.c.bf16 %v2335, %v2334
  %v2395 = vpack.c.bf16 %v2337, %v2336
  %v2396 = vpack.c.bf16 %v2339, %v2338
  %v2397 = vpack.c.bf16 %v2341, %v2340
  %v2398 = vpack.c.bf16 %v2343, %v2342
  %v2399 = vpack.c.bf16 %v2345, %v2344
  %v2400 = vpack.c.bf16 %v2347, %v2346
  %v2401 = vpack.c.bf16 %v2349, %v2348
  %v2402 = vpack.c.bf16 %v2351, %v2350
  %v2403 = vpack.c.bf16 %v2353, %v2352
  %v2404 = vpack.c.bf16 %v2355, %v2354
  %v2405 = vpack.c.bf16 %v2357, %v2356
  %v2406 = vpack.c.bf16 %v2359, %v2358
  %v2407 = vpack.c.bf16 %v2361, %v2360
  %v2408 = vpack.c.bf16 %v2363, %v2362
  %v2409 = vpack.c.bf16 %v2365, %v2364
  %v2410 = vpack.c.bf16 %v2367, %v2366
  %v2411 = vpack.c.bf16 %v2369, %v2368
  %v2412 = vpack.c.bf16 %v2371, %v2370
  %v2413 = vpack.c.bf16 %v2373, %v2372
  %v2414 = vpack.c.bf16 %v2375, %v2374
  %v2415 = vpack.c.bf16 %v2377, %v2376
  %v2416 = vpack.c.bf16 %v2379, %v2378
  %v2417 = vpack.c.bf16 %v2381, %v2380
  %v2418 = vpack.c.bf16 %v2383, %v2382
  %v2419 = vpack.c.bf16 %v2385, %v2384
  %v2420 = vpack.c.bf16 %v2387, %v2386
  %v2421 = vpack.c.bf16 %v2389, %v2388
  %s2422 = scalar_lea.vmem %s1, 8
  %v2423 = vld [vmem:[%s2422] sm:$0x3]
  %v2425 = vsel %vm15, %v2390, 0
  %v2428 = vsel %vm15, %v2391, 0
  %v2431 = vsel %vm15, %v2392, 0
  %v2434 = vsel %vm15, %v2393, 0
  %v2437 = vsel %vm15, %v2394, 0
  %v2440 = vsel %vm15, %v2395, 0
  %v2443 = vsel %vm15, %v2396, 0
  %v2446 = vsel %vm15, %v2397, 0
  %v2449 = vsel %vm15, %v2398, 0
  %v2452 = vsel %vm15, %v2399, 0
  %v2455 = vsel %vm15, %v2400, 0
  %v2458 = vsel %vm15, %v2401, 0
  %v2461 = vsel %vm15, %v2402, 0
  %v2464 = vsel %vm15, %v2403, 0
  %v2467 = vsel %vm15, %v2404, 0
  %v2470 = vsel %vm15, %v2405, 0
  %v2473 = vsel %vm15, %v2406, 0
  %v2476 = vsel %vm15, %v2407, 0
  %v2479 = vsel %vm15, %v2408, 0
  %v2482 = vsel %vm15, %v2409, 0
  %v2485 = vsel %vm15, %v2410, 0
  %v2488 = vsel %vm15, %v2411, 0
  %v2491 = vsel %vm15, %v2412, 0
  %v2494 = vsel %vm15, %v2413, 0
  %v2497 = vsel %vm15, %v2414, 0
  %v2500 = vsel %vm15, %v2415, 0
  %v2503 = vsel %vm15, %v2416, 0
  %v2506 = vsel %vm15, %v2417, 0
  %v2509 = vsel %vm15, %v2418, 0
  %v2512 = vsel %vm15, %v2419, 0
  %v2515 = vsel %vm15, %v2420, 0
  %v2518 = vsel %vm15, %v2421, 0
  %v2521 = vsel %vm545, %v2423, 0
  %2523 = vmatprep.subr.bf16.mxu0 0
  %2524 = vmatpush1.bf16.msra.mxu0 %v2521
  %2525 = vmatprep.subr.bf16.mxu0 0
  %2526 = vmatpush1.bf16.msra.mxu0 0
  %2527 = vmatprep.subr.bf16.mxu0 0
  %2528 = vmatpush1.bf16.msra.mxu0 0
  %2529 = vmatprep.subr.bf16.mxu0 0
  %2530 = vmatpush1.bf16.msra.mxu0 0
  %2531 = vmatprep.subr.bf16.mxu0 0
  %2532 = vmatpush1.bf16.msra.mxu0 0
  %2533 = vmatprep.subr.bf16.mxu0 0
  %2534 = vmatpush1.bf16.msra.mxu0 0
  %2535 = vmatprep.subr.bf16.mxu0 0
  %2536 = vmatpush1.bf16.msra.mxu0 0
  %2537 = vmatprep.subr.bf16.mxu0 0
  %2538 = vmatpush1.bf16.msra.mxu0 0
  %2539 = vmatprep.subr.bf16.mxu0 0
  %2540 = vmatpush1.bf16.msra.mxu0 0
  %2541 = vmatprep.subr.bf16.mxu0 0
  %2542 = vmatpush1.bf16.msra.mxu0 0
  %2543 = vmatprep.subr.bf16.mxu0 0
  %2544 = vmatpush1.bf16.msra.mxu0 0
  %2545 = vmatprep.subr.bf16.mxu0 0
  %2546 = vmatpush1.bf16.msra.mxu0 0
  %2547 = vmatprep.subr.bf16.mxu0 0
  %2548 = vmatpush1.bf16.msra.mxu0 0
  %2549 = vmatprep.subr.bf16.mxu0 0
  %2550 = vmatpush1.bf16.msra.mxu0 0
  %2551 = vmatprep.subr.bf16.mxu0 0
  %2552 = vmatpush1.bf16.msra.mxu0 0
  %2553 = vmatprep.subr.bf16.mxu0 0
  %2554 = vmatpush1.bf16.msra.mxu0 0
  %2555 = vmatprep.mubr.bf16.mxu0 0
  %2556 = vmatmul.mubr.bf16.gmra.mrb[0].mxu0 %v2425
  %v2557 = vpop.f32.mrb[0].mxu0
  %v2558 = vadd.f32 0.0, %v2557
  %v2559 = vpop.f32.mrb[0].mxu0
  %v2560 = vpop.f32.mrb[0].mxu0
  %v2561 = vadd.f32 0.0, %v2560
  %v2562 = vpop.f32.mrb[0].mxu0
  %2563 = vmatprep.mubr.bf16.mxu0 0
  %2564 = vmatmul.mubr.bf16.gmra.mrb[0].mxu0 %v2428
  %v2565 = vpop.f32.mrb[0].mxu0
  %v2566 = vadd.f32 0.0, %v2565
  %v2567 = vpop.f32.mrb[0].mxu0
  %v2568 = vpop.f32.mrb[0].mxu0
  %v2569 = vadd.f32 0.0, %v2568
  %v2570 = vpop.f32.mrb[0].mxu0
  %2571 = vmatprep.mubr.bf16.mxu0 0
  %2572 = vmatmul.mubr.bf16.gmra.mrb[0].mxu0 %v2431
  %v2573 = vpop.f32.mrb[0].mxu0
  %v2574 = vadd.f32 0.0, %v2573
  %v2575 = vpop.f32.mrb[0].mxu0
  %v2576 = vpop.f32.mrb[0].mxu0
  %v2577 = vadd.f32 0.0, %v2576
  %v2578 = vpop.f32.mrb[0].mxu0
  %2579 = vmatprep.mubr.bf16.mxu0 0
  %2580 = vmatmul.mubr.bf16.gmra.mrb[0].mxu0 %v2434
  %v2581 = vpop.f32.mrb[0].mxu0
  %v2582 = vadd.f32 0.0, %v2581
  %v2583 = vpop.f32.mrb[0].mxu0
  %v2584 = vpop.f32.mrb[0].mxu0
  %v2585 = vadd.f32 0.0, %v2584
  %v2586 = vpop.f32.mrb[0].mxu0
  %2587 = vmatprep.mubr.bf16.mxu0 0
  %2588 = vmatmul.mubr.bf16.gmra.mrb[0].mxu0 %v2437
  %v2589 = vpop.f32.mrb[0].mxu0
  %v2590 = vadd.f32 0.0, %v2589
  %v2591 = vpop.f32.mrb[0].mxu0
  %v2592 = vpop.f32.mrb[0].mxu0
  %v2593 = vadd.f32 0.0, %v2592
  %v2594 = vpop.f32.mrb[0].mxu0
  %2595 = vmatprep.mubr.bf16.mxu0 0
  %2596 = vmatmul.mubr.bf16.gmra.mrb[0].mxu0 %v2440
  %v2597 = vpop.f32.mrb[0].mxu0
  %v2598 = vadd.f32 0.0, %v2597
  %v2599 = vpop.f32.mrb[0].mxu0
  %v2600 = vpop.f32.mrb[0].mxu0
  %v2601 = vadd.f32 0.0, %v2600
  %v2602 = vpop.f32.mrb[0].mxu0
  %2603 = vmatprep.mubr.bf16.mxu0 0
  %2604 = vmatmul.mubr.bf16.gmra.mrb[0].mxu0 %v2443
  %v2605 = vpop.f32.mrb[0].mxu0
  %v2606 = vadd.f32 0.0, %v2605
  %v2607 = vpop.f32.mrb[0].mxu0
  %v2608 = vpop.f32.mrb[0].mxu0
  %v2609 = vadd.f32 0.0, %v2608
  %v2610 = vpop.f32.mrb[0].mxu0
  %2611 = vmatprep.mubr.bf16.mxu0 0
  %2612 = vmatmul.mubr.bf16.gmra.mrb[0].mxu0 %v2446
  %v2613 = vpop.f32.mrb[0].mxu0
  %v2614 = vadd.f32 0.0, %v2613
  %v2615 = vpop.f32.mrb[0].mxu0
  %v2616 = vpop.f32.mrb[0].mxu0
  %v2617 = vadd.f32 0.0, %v2616
  %v2618 = vpop.f32.mrb[0].mxu0
  %2619 = vmatprep.mubr.bf16.mxu0 0
  %2620 = vmatmul.mubr.bf16.gmra.mrb[0].mxu0 %v2449
  %v2621 = vpop.f32.mrb[0].mxu0
  %v2622 = vadd.f32 0.0, %v2621
  %v2623 = vpop.f32.mrb[0].mxu0
  %v2624 = vpop.f32.mrb[0].mxu0
  %v2625 = vadd.f32 0.0, %v2624
  %v2626 = vpop.f32.mrb[0].mxu0
  %2627 = vmatprep.mubr.bf16.mxu0 0
  %2628 = vmatmul.mubr.bf16.gmra.mrb[0].mxu0 %v2452
  %v2629 = vpop.f32.mrb[0].mxu0
  %v2630 = vadd.f32 0.0, %v2629
  %v2631 = vpop.f32.mrb[0].mxu0
  %v2632 = vpop.f32.mrb[0].mxu0
  %v2633 = vadd.f32 0.0, %v2632
  %v2634 = vpop.f32.mrb[0].mxu0
  %2635 = vmatprep.mubr.bf16.mxu0 0
  %2636 = vmatmul.mubr.bf16.gmra.mrb[0].mxu0 %v2455
  %v2637 = vpop.f32.mrb[0].mxu0
  %v2638 = vadd.f32 0.0, %v2637
  %v2639 = vpop.f32.mrb[0].mxu0
  %v2640 = vpop.f32.mrb[0].mxu0
  %v2641 = vadd.f32 0.0, %v2640
  %v2642 = vpop.f32.mrb[0].mxu0
  %2643 = vmatprep.mubr.bf16.mxu0 0
  %2644 = vmatmul.mubr.bf16.gmra.mrb[0].mxu0 %v2458
  %v2645 = vpop.f32.mrb[0].mxu0
  %v2646 = vadd.f32 0.0, %v2645
  %v2647 = vpop.f32.mrb[0].mxu0
  %v2648 = vpop.f32.mrb[0].mxu0
  %v2649 = vadd.f32 0.0, %v2648
  %v2650 = vpop.f32.mrb[0].mxu0
  %2651 = vmatprep.mubr.bf16.mxu0 0
  %2652 = vmatmul.mubr.bf16.gmra.mrb[0].mxu0 %v2461
  %v2653 = vpop.f32.mrb[0].mxu0
  %v2654 = vadd.f32 0.0, %v2653
  %v2655 = vpop.f32.mrb[0].mxu0
  %v2656 = vpop.f32.mrb[0].mxu0
  %v2657 = vadd.f32 0.0, %v2656
  %v2658 = vpop.f32.mrb[0].mxu0
  %2659 = vmatprep.mubr.bf16.mxu0 0
  %2660 = vmatmul.mubr.bf16.gmra.mrb[0].mxu0 %v2464
  %v2661 = vpop.f32.mrb[0].mxu0
  %v2662 = vadd.f32 0.0, %v2661
  %v2663 = vpop.f32.mrb[0].mxu0
  %v2664 = vpop.f32.mrb[0].mxu0
  %v2665 = vadd.f32 0.0, %v2664
  %v2666 = vpop.f32.mrb[0].mxu0
  %2667 = vmatprep.mubr.bf16.mxu0 0
  %2668 = vmatmul.mubr.bf16.gmra.mrb[0].mxu0 %v2467
  %v2669 = vpop.f32.mrb[0].mxu0
  %v2670 = vadd.f32 0.0, %v2669
  %v2671 = vpop.f32.mrb[0].mxu0
  %v2672 = vpop.f32.mrb[0].mxu0
  %v2673 = vadd.f32 0.0, %v2672
  %v2674 = vpop.f32.mrb[0].mxu0
  %2675 = vmatprep.mubr.bf16.mxu0 0
  %2676 = vmatmul.mubr.bf16.gmra.mrb[0].mxu0 %v2470
  %v2677 = vpop.f32.mrb[0].mxu0
  %v2678 = vadd.f32 0.0, %v2677
  %v2679 = vpop.f32.mrb[0].mxu0
  %v2680 = vpop.f32.mrb[0].mxu0
  %v2681 = vadd.f32 0.0, %v2680
  %v2682 = vpop.f32.mrb[0].mxu0
  %2683 = vmatprep.mubr.bf16.mxu0 0
  %2684 = vmatmul.mubr.bf16.gmra.mrb[0].mxu0 %v2473
  %v2685 = vpop.f32.mrb[0].mxu0
  %v2686 = vadd.f32 0.0, %v2685
  %v2687 = vpop.f32.mrb[0].mxu0
  %v2688 = vpop.f32.mrb[0].mxu0
  %v2689 = vadd.f32 0.0, %v2688
  %v2690 = vpop.f32.mrb[0].mxu0
  %2691 = vmatprep.mubr.bf16.mxu0 0
  %2692 = vmatmul.mubr.bf16.gmra.mrb[0].mxu0 %v2476
  %v2693 = vpop.f32.mrb[0].mxu0
  %v2694 = vadd.f32 0.0, %v2693
  %v2695 = vpop.f32.mrb[0].mxu0
  %v2696 = vpop.f32.mrb[0].mxu0
  %v2697 = vadd.f32 0.0, %v2696
  %v2698 = vpop.f32.mrb[0].mxu0
  %2699 = vmatprep.mubr.bf16.mxu0 0
  %2700 = vmatmul.mubr.bf16.gmra.mrb[0].mxu0 %v2479
  %v2701 = vpop.f32.mrb[0].mxu0
  %v2702 = vadd.f32 0.0, %v2701
  %v2703 = vpop.f32.mrb[0].mxu0
  %v2704 = vpop.f32.mrb[0].mxu0
  %v2705 = vadd.f32 0.0, %v2704
  %v2706 = vpop.f32.mrb[0].mxu0
  %2707 = vmatprep.mubr.bf16.mxu0 0
  %2708 = vmatmul.mubr.bf16.gmra.mrb[0].mxu0 %v2482
  %v2709 = vpop.f32.mrb[0].mxu0
  %v2710 = vadd.f32 0.0, %v2709
  %v2711 = vpop.f32.mrb[0].mxu0
  %v2712 = vpop.f32.mrb[0].mxu0
  %v2713 = vadd.f32 0.0, %v2712
  %v2714 = vpop.f32.mrb[0].mxu0
  %2715 = vmatprep.mubr.bf16.mxu0 0
  %2716 = vmatmul.mubr.bf16.gmra.mrb[0].mxu0 %v2485
  %v2717 = vpop.f32.mrb[0].mxu0
  %v2718 = vadd.f32 0.0, %v2717
  %v2719 = vpop.f32.mrb[0].mxu0
  %v2720 = vpop.f32.mrb[0].mxu0
  %v2721 = vadd.f32 0.0, %v2720
  %v2722 = vpop.f32.mrb[0].mxu0
  %2723 = vmatprep.mubr.bf16.mxu0 0
  %2724 = vmatmul.mubr.bf16.gmra.mrb[0].mxu0 %v2488
  %v2725 = vpop.f32.mrb[0].mxu0
  %v2726 = vadd.f32 0.0, %v2725
  %v2727 = vpop.f32.mrb[0].mxu0
  %v2728 = vpop.f32.mrb[0].mxu0
  %v2729 = vadd.f32 0.0, %v2728
  %v2730 = vpop.f32.mrb[0].mxu0
  %2731 = vmatprep.mubr.bf16.mxu0 0
  %2732 = vmatmul.mubr.bf16.gmra.mrb[0].mxu0 %v2491
  %v2733 = vpop.f32.mrb[0].mxu0
  %v2734 = vadd.f32 0.0, %v2733
  %v2735 = vpop.f32.mrb[0].mxu0
  %v2736 = vpop.f32.mrb[0].mxu0
  %v2737 = vadd.f32 0.0, %v2736
  %v2738 = vpop.f32.mrb[0].mxu0
  %2739 = vmatprep.mubr.bf16.mxu0 0
  %2740 = vmatmul.mubr.bf16.gmra.mrb[0].mxu0 %v2494
  %v2741 = vpop.f32.mrb[0].mxu0
  %v2742 = vadd.f32 0.0, %v2741
  %v2743 = vpop.f32.mrb[0].mxu0
  %v2744 = vpop.f32.mrb[0].mxu0
  %v2745 = vadd.f32 0.0, %v2744
  %v2746 = vpop.f32.mrb[0].mxu0
  %2747 = vmatprep.mubr.bf16.mxu0 0
  %2748 = vmatmul.mubr.bf16.gmra.mrb[0].mxu0 %v2497
  %v2749 = vpop.f32.mrb[0].mxu0
  %v2750 = vadd.f32 0.0, %v2749
  %v2751 = vpop.f32.mrb[0].mxu0
  %v2752 = vpop.f32.mrb[0].mxu0
  %v2753 = vadd.f32 0.0, %v2752
  %v2754 = vpop.f32.mrb[0].mxu0
  %2755 = vmatprep.mubr.bf16.mxu0 0
  %2756 = vmatmul.mubr.bf16.gmra.mrb[0].mxu0 %v2500
  %v2757 = vpop.f32.mrb[0].mxu0
  %v2758 = vadd.f32 0.0, %v2757
  %v2759 = vpop.f32.mrb[0].mxu0
  %v2760 = vpop.f32.mrb[0].mxu0
  %v2761 = vadd.f32 0.0, %v2760
  %v2762 = vpop.f32.mrb[0].mxu0
  %2763 = vmatprep.mubr.bf16.mxu0 0
  %2764 = vmatmul.mubr.bf16.gmra.mrb[0].mxu0 %v2503
  %v2765 = vpop.f32.mrb[0].mxu0
  %v2766 = vadd.f32 0.0, %v2765
  %v2767 = vpop.f32.mrb[0].mxu0
  %v2768 = vpop.f32.mrb[0].mxu0
  %v2769 = vadd.f32 0.0, %v2768
  %v2770 = vpop.f32.mrb[0].mxu0
  %2771 = vmatprep.mubr.bf16.mxu0 0
  %2772 = vmatmul.mubr.bf16.gmra.mrb[0].mxu0 %v2506
  %v2773 = vpop.f32.mrb[0].mxu0
  %v2774 = vadd.f32 0.0, %v2773
  %v2775 = vpop.f32.mrb[0].mxu0
  %v2776 = vpop.f32.mrb[0].mxu0
  %v2777 = vadd.f32 0.0, %v2776
  %v2778 = vpop.f32.mrb[0].mxu0
  %2779 = vmatprep.mubr.bf16.mxu0 0
  %2780 = vmatmul.mubr.bf16.gmra.mrb[0].mxu0 %v2509
  %v2781 = vpop.f32.mrb[0].mxu0
  %v2782 = vadd.f32 0.0, %v2781
  %v2783 = vpop.f32.mrb[0].mxu0
  %v2784 = vpop.f32.mrb[0].mxu0
  %v2785 = vadd.f32 0.0, %v2784
  %v2786 = vpop.f32.mrb[0].mxu0
  %2787 = vmatprep.mubr.bf16.mxu0 0
  %2788 = vmatmul.mubr.bf16.gmra.mrb[0].mxu0 %v2512
  %v2789 = vpop.f32.mrb[0].mxu0
  %v2790 = vadd.f32 0.0, %v2789
  %v2791 = vpop.f32.mrb[0].mxu0
  %v2792 = vpop.f32.mrb[0].mxu0
  %v2793 = vadd.f32 0.0, %v2792
  %v2794 = vpop.f32.mrb[0].mxu0
  %2795 = vmatprep.mubr.bf16.mxu0 0
  %2796 = vmatmul.mubr.bf16.gmra.mrb[0].mxu0 %v2515
  %v2797 = vpop.f32.mrb[0].mxu0
  %v2798 = vadd.f32 0.0, %v2797
  %v2799 = vpop.f32.mrb[0].mxu0
  %v2800 = vpop.f32.mrb[0].mxu0
  %v2801 = vadd.f32 0.0, %v2800
  %v2802 = vpop.f32.mrb[0].mxu0
  %2803 = vmatprep.mubr.bf16.mxu0 0
  %2804 = vmatmul.mubr.bf16.gmra.mrb[0].mxu0 %v2518
  %v2805 = vpop.f32.mrb[0].mxu0
  %v2806 = vadd.f32 0.0, %v2805
  %v2807 = vpop.f32.mrb[0].mxu0
  %v2808 = vpop.f32.mrb[0].mxu0
  %v2809 = vadd.f32 0.0, %v2808
  %v2810 = vpop.f32.mrb[0].mxu0
  %2811 = vdwg.mxu0
  %v2812 = vadd.f32 %v2262, %v2558
  %v2813 = vadd.f32 %v2263, %v2561
  %v2814 = vadd.f32 %v2264, %v2566
  %v2815 = vadd.f32 %v2265, %v2569
  %v2816 = vadd.f32 %v2266, %v2574
  %v2817 = vadd.f32 %v2267, %v2577
  %v2818 = vadd.f32 %v2268, %v2582
  %v2819 = vadd.f32 %v2269, %v2585
  %v2820 = vadd.f32 %v2270, %v2590
  %v2821 = vadd.f32 %v2271, %v2593
  %v2822 = vadd.f32 %v2272, %v2598
  %v2823 = vadd.f32 %v2273, %v2601
  %v2824 = vadd.f32 %v2274, %v2606
  %v2825 = vadd.f32 %v2275, %v2609
  %v2826 = vadd.f32 %v2276, %v2614
  %v2827 = vadd.f32 %v2277, %v2617
  %v2828 = vadd.f32 %v2278, %v2622
  %v2829 = vadd.f32 %v2279, %v2625
  %v2830 = vadd.f32 %v2280, %v2630
  %v2831 = vadd.f32 %v2281, %v2633
  %v2832 = vadd.f32 %v2282, %v2638
  %v2833 = vadd.f32 %v2283, %v2641
  %v2834 = vadd.f32 %v2284, %v2646
  %v2835 = vadd.f32 %v2285, %v2649
  %v2836 = vadd.f32 %v2286, %v2654
  %v2837 = vadd.f32 %v2287, %v2657
  %v2838 = vadd.f32 %v2288, %v2662
  %v2839 = vadd.f32 %v2289, %v2665
  %v2840 = vadd.f32 %v2290, %v2670
  %v2841 = vadd.f32 %v2291, %v2673
  %v2842 = vadd.f32 %v2292, %v2678
  %v2843 = vadd.f32 %v2293, %v2681
  %v2844 = vadd.f32 %v2294, %v2686
  %v2845 = vadd.f32 %v2295, %v2689
  %v2846 = vadd.f32 %v2296, %v2694
  %v2847 = vadd.f32 %v2297, %v2697
  %v2848 = vadd.f32 %v2298, %v2702
  %v2849 = vadd.f32 %v2299, %v2705
  %v2850 = vadd.f32 %v2300, %v2710
  %v2851 = vadd.f32 %v2301, %v2713
  %v2852 = vadd.f32 %v2302, %v2718
  %v2853 = vadd.f32 %v2303, %v2721
  %v2854 = vadd.f32 %v2304, %v2726
  %v2855 = vadd.f32 %v2305, %v2729
  %v2856 = vadd.f32 %v2306, %v2734
  %v2857 = vadd.f32 %v2307, %v2737
  %v2858 = vadd.f32 %v2308, %v2742
  %v2859 = vadd.f32 %v2309, %v2745
  %v2860 = vadd.f32 %v2310, %v2750
  %v2861 = vadd.f32 %v2311, %v2753
  %v2862 = vadd.f32 %v2312, %v2758
  %v2863 = vadd.f32 %v2313, %v2761
  %v2864 = vadd.f32 %v2314, %v2766
  %v2865 = vadd.f32 %v2315, %v2769
  %v2866 = vadd.f32 %v2316, %v2774
  %v2867 = vadd.f32 %v2317, %v2777
  %v2868 = vadd.f32 %v2318, %v2782
  %v2869 = vadd.f32 %v2319, %v2785
  %v2870 = vadd.f32 %v2320, %v2790
  %v2871 = vadd.f32 %v2321, %v2793
  %v2872 = vadd.f32 %v2322, %v2798
  %v2873 = vadd.f32 %v2323, %v2801
  %v2874 = vadd.f32 %v2324, %v2806
  %v2875 = vadd.f32 %v2325, %v2809
  %v2876 = vld [vmem:[%s189 + $0x2] sm:$0xff]
  %v2877 = vld [vmem:[%s189 + $0xa] sm:$0xff]
  %v2878 = vld [vmem:[%s189 + $0x1a] sm:$0xff]
  %v2879 = vld [vmem:[%s189 + $0x22] sm:$0xff]
  %v2880 = vld [vmem:[%s189 + $0x32] sm:$0xff]
  %v2881 = vld [vmem:[%s189 + $0x3a] sm:$0xff]
  %v2882 = vld [vmem:[%s189 + $0x4a] sm:$0xff]
  %v2883 = vld [vmem:[%s189 + $0x52] sm:$0xff]
  %v2884 = vld [vmem:[%s189 + $0x62] sm:$0xff]
  %v2885 = vld [vmem:[%s189 + $0x6a] sm:$0xff]
  %v2886 = vld [vmem:[%s189 + $0x7a] sm:$0xff]
  %v2887 = vld [vmem:[%s189 + $0x82] sm:$0xff]
  %v2888 = vld [vmem:[%s189 + $0x92] sm:$0xff]
  %v2889 = vld [vmem:[%s189 + $0x9a] sm:$0xff]
  %v2890 = vld [vmem:[%s189 + $0xaa] sm:$0xff]
  %v2891 = vld [vmem:[%s189 + $0xb2] sm:$0xff]
  %v2892 = vld [vmem:[%s189 + $0xc2] sm:$0xff]
  %v2893 = vld [vmem:[%s189 + $0xca] sm:$0xff]
  %v2894 = vld [vmem:[%s189 + $0xda] sm:$0xff]
  %v2895 = vld [vmem:[%s189 + $0xe2] sm:$0xff]
  %v2896 = vld [vmem:[%s189 + $0xf2] sm:$0xff]
  %v2897 = vld [vmem:[%s189 + $0xfa] sm:$0xff]
  %v2898 = vld [vmem:[%s189 + $0x10a] sm:$0xff]
  %v2899 = vld [vmem:[%s189 + $0x112] sm:$0xff]
  %v2900 = vld [vmem:[%s189 + $0x122] sm:$0xff]
  %v2901 = vld [vmem:[%s189 + $0x12a] sm:$0xff]
  %v2902 = vld [vmem:[%s189 + $0x13a] sm:$0xff]
  %v2903 = vld [vmem:[%s189 + $0x142] sm:$0xff]
  %v2904 = vld [vmem:[%s189 + $0x152] sm:$0xff]
  %v2905 = vld [vmem:[%s189 + $0x15a] sm:$0xff]
  %v2906 = vld [vmem:[%s189 + $0x16a] sm:$0xff]
  %v2907 = vld [vmem:[%s189 + $0x172] sm:$0xff]
  %v2908 = vld [vmem:[%s189 + $0x1b2] sm:$0xff]
  %v2909 = vld [vmem:[%s189 + $0x1ba] sm:$0xff]
  %v2910 = vld [vmem:[%s189 + $0x1ca] sm:$0xff]
  %v2911 = vld [vmem:[%s189 + $0x1d2] sm:$0xff]
  %v2912 = vld [vmem:[%s189 + $0x1e2] sm:$0xff]
  %v2913 = vld [vmem:[%s189 + $0x1ea] sm:$0xff]
  %v2914 = vld [vmem:[%s189 + $0x1fa] sm:$0xff]
  %v2915 = vld [vmem:[%s189 + $0x202] sm:$0xff]
  %v2916 = vld [vmem:[%s189 + $0x212] sm:$0xff]
  %v2917 = vld [vmem:[%s189 + $0x21a] sm:$0xff]
  %v2918 = vld [vmem:[%s189 + $0x22a] sm:$0xff]
  %v2919 = vld [vmem:[%s189 + $0x232] sm:$0xff]
  %v2920 = vld [vmem:[%s189 + $0x242] sm:$0xff]
  %v2921 = vld [vmem:[%s189 + $0x24a] sm:$0xff]
  %v2922 = vld [vmem:[%s189 + $0x25a] sm:$0xff]
  %v2923 = vld [vmem:[%s189 + $0x262] sm:$0xff]
  %v2924 = vld [vmem:[%s189 + $0x272] sm:$0xff]
  %v2925 = vld [vmem:[%s189 + $0x27a] sm:$0xff]
  %v2926 = vld [vmem:[%s189 + $0x28a] sm:$0xff]
  %v2927 = vld [vmem:[%s189 + $0x292] sm:$0xff]
  %v2928 = vld [vmem:[%s189 + $0x2a2] sm:$0xff]
  %v2929 = vld [vmem:[%s189 + $0x2aa] sm:$0xff]
  %v2930 = vld [vmem:[%s189 + $0x2ba] sm:$0xff]
  %v2931 = vld [vmem:[%s189 + $0x2c2] sm:$0xff]
  %v2932 = vld [vmem:[%s189 + $0x2d2] sm:$0xff]
  %v2933 = vld [vmem:[%s189 + $0x2da] sm:$0xff]
  %v2934 = vld [vmem:[%s189 + $0x2ea] sm:$0xff]
  %v2935 = vld [vmem:[%s189 + $0x2f2] sm:$0xff]
  %v2936 = vld [vmem:[%s189 + $0x302] sm:$0xff]
  %v2937 = vld [vmem:[%s189 + $0x30a] sm:$0xff]
  %v2938 = vld [vmem:[%s189 + $0x31a] sm:$0xff]
  %v2939 = vld [vmem:[%s189 + $0x322] sm:$0xff]
  %v2940 = vpack.c.bf16 %v2877, %v2876
  %v2941 = vpack.c.bf16 %v2879, %v2878
  %v2942 = vpack.c.bf16 %v2881, %v2880
  %v2943 = vpack.c.bf16 %v2883, %v2882
  %v2944 = vpack.c.bf16 %v2885, %v2884
  %v2945 = vpack.c.bf16 %v2887, %v2886
  %v2946 = vpack.c.bf16 %v2889, %v2888
  %v2947 = vpack.c.bf16 %v2891, %v2890
  %v2948 = vpack.c.bf16 %v2893, %v2892
  %v2949 = vpack.c.bf16 %v2895, %v2894
  %v2950 = vpack.c.bf16 %v2897, %v2896
  %v2951 = vpack.c.bf16 %v2899, %v2898
  %v2952 = vpack.c.bf16 %v2901, %v2900
  %v2953 = vpack.c.bf16 %v2903, %v2902
  %v2954 = vpack.c.bf16 %v2905, %v2904
  %v2955 = vpack.c.bf16 %v2907, %v2906
  %v2956 = vpack.c.bf16 %v2909, %v2908
  %v2957 = vpack.c.bf16 %v2911, %v2910
  %v2958 = vpack.c.bf16 %v2913, %v2912
  %v2959 = vpack.c.bf16 %v2915, %v2914
  %v2960 = vpack.c.bf16 %v2917, %v2916
  %v2961 = vpack.c.bf16 %v2919, %v2918
  %v2962 = vpack.c.bf16 %v2921, %v2920
  %v2963 = vpack.c.bf16 %v2923, %v2922
  %v2964 = vpack.c.bf16 %v2925, %v2924
  %v2965 = vpack.c.bf16 %v2927, %v2926
  %v2966 = vpack.c.bf16 %v2929, %v2928
  %v2967 = vpack.c.bf16 %v2931, %v2930
  %v2968 = vpack.c.bf16 %v2933, %v2932
  %v2969 = vpack.c.bf16 %v2935, %v2934
  %v2970 = vpack.c.bf16 %v2937, %v2936
  %v2971 = vpack.c.bf16 %v2939, %v2938
  %s2972 = scalar_lea.vmem %s1, 10
  %v2973 = vld [vmem:[%s2972] sm:$0x3]
  %v2975 = vsel %vm15, %v2940, 0
  %v2978 = vsel %vm15, %v2941, 0
  %v2981 = vsel %vm15, %v2942, 0
  %v2984 = vsel %vm15, %v2943, 0
  %v2987 = vsel %vm15, %v2944, 0
  %v2990 = vsel %vm15, %v2945, 0
  %v2993 = vsel %vm15, %v2946, 0
  %v2996 = vsel %vm15, %v2947, 0
  %v2999 = vsel %vm15, %v2948, 0
  %v3002 = vsel %vm15, %v2949, 0
  %v3005 = vsel %vm15, %v2950, 0
  %v3008 = vsel %vm15, %v2951, 0
  %v3011 = vsel %vm15, %v2952, 0
  %v3014 = vsel %vm15, %v2953, 0
  %v3017 = vsel %vm15, %v2954, 0
  %v3020 = vsel %vm15, %v2955, 0
  %v3023 = vsel %vm15, %v2956, 0
  %v3026 = vsel %vm15, %v2957, 0
  %v3029 = vsel %vm15, %v2958, 0
  %v3032 = vsel %vm15, %v2959, 0
  %v3035 = vsel %vm15, %v2960, 0
  %v3038 = vsel %vm15, %v2961, 0
  %v3041 = vsel %vm15, %v2962, 0
  %v3044 = vsel %vm15, %v2963, 0
  %v3047 = vsel %vm15, %v2964, 0
  %v3050 = vsel %vm15, %v2965, 0
  %v3053 = vsel %vm15, %v2966, 0
  %v3056 = vsel %vm15, %v2967, 0
  %v3059 = vsel %vm15, %v2968, 0
  %v3062 = vsel %vm15, %v2969, 0
  %v3065 = vsel %vm15, %v2970, 0
  %v3068 = vsel %vm15, %v2971, 0
  %v3071 = vsel %vm545, %v2973, 0
  %3073 = vmatprep.subr.bf16.mxu0 0
  %3074 = vmatpush1.bf16.msra.mxu0 %v3071
  %3075 = vmatprep.subr.bf16.mxu0 0
  %3076 = vmatpush1.bf16.msra.mxu0 0
  %3077 = vmatprep.subr.bf16.mxu0 0
  %3078 = vmatpush1.bf16.msra.mxu0 0
  %3079 = vmatprep.subr.bf16.mxu0 0
  %3080 = vmatpush1.bf16.msra.mxu0 0
  %3081 = vmatprep.subr.bf16.mxu0 0
  %3082 = vmatpush1.bf16.msra.mxu0 0
  %3083 = vmatprep.subr.bf16.mxu0 0
  %3084 = vmatpush1.bf16.msra.mxu0 0
  %3085 = vmatprep.subr.bf16.mxu0 0
  %3086 = vmatpush1.bf16.msra.mxu0 0
  %3087 = vmatprep.subr.bf16.mxu0 0
  %3088 = vmatpush1.bf16.msra.mxu0 0
  %3089 = vmatprep.subr.bf16.mxu0 0
  %3090 = vmatpush1.bf16.msra.mxu0 0
  %3091 = vmatprep.subr.bf16.mxu0 0
  %3092 = vmatpush1.bf16.msra.mxu0 0
  %3093 = vmatprep.subr.bf16.mxu0 0
  %3094 = vmatpush1.bf16.msra.mxu0 0
  %3095 = vmatprep.subr.bf16.mxu0 0
  %3096 = vmatpush1.bf16.msra.mxu0 0
  %3097 = vmatprep.subr.bf16.mxu0 0
  %3098 = vmatpush1.bf16.msra.mxu0 0
  %3099 = vmatprep.subr.bf16.mxu0 0
  %3100 = vmatpush1.bf16.msra.mxu0 0
  %3101 = vmatprep.subr.bf16.mxu0 0
  %3102 = vmatpush1.bf16.msra.mxu0 0
  %3103 = vmatprep.subr.bf16.mxu0 0
  %3104 = vmatpush1.bf16.msra.mxu0 0
  %3105 = vmatprep.mubr.bf16.mxu0 0
  %3106 = vmatmul.mubr.bf16.gmra.mrb[0].mxu0 %v2975
  %v3107 = vpop.f32.mrb[0].mxu0
  %v3108 = vadd.f32 0.0, %v3107
  %v3109 = vpop.f32.mrb[0].mxu0
  %v3110 = vpop.f32.mrb[0].mxu0
  %v3111 = vadd.f32 0.0, %v3110
  %v3112 = vpop.f32.mrb[0].mxu0
  %3113 = vmatprep.mubr.bf16.mxu0 0
  %3114 = vmatmul.mubr.bf16.gmra.mrb[0].mxu0 %v2978
  %v3115 = vpop.f32.mrb[0].mxu0
  %v3116 = vadd.f32 0.0, %v3115
  %v3117 = vpop.f32.mrb[0].mxu0
  %v3118 = vpop.f32.mrb[0].mxu0
  %v3119 = vadd.f32 0.0, %v3118
  %v3120 = vpop.f32.mrb[0].mxu0
  %3121 = vmatprep.mubr.bf16.mxu0 0
  %3122 = vmatmul.mubr.bf16.gmra.mrb[0].mxu0 %v2981
  %v3123 = vpop.f32.mrb[0].mxu0
  %v3124 = vadd.f32 0.0, %v3123
  %v3125 = vpop.f32.mrb[0].mxu0
  %v3126 = vpop.f32.mrb[0].mxu0
  %v3127 = vadd.f32 0.0, %v3126
  %v3128 = vpop.f32.mrb[0].mxu0
  %3129 = vmatprep.mubr.bf16.mxu0 0
  %3130 = vmatmul.mubr.bf16.gmra.mrb[0].mxu0 %v2984
  %v3131 = vpop.f32.mrb[0].mxu0
  %v3132 = vadd.f32 0.0, %v3131
  %v3133 = vpop.f32.mrb[0].mxu0
  %v3134 = vpop.f32.mrb[0].mxu0
  %v3135 = vadd.f32 0.0, %v3134
  %v3136 = vpop.f32.mrb[0].mxu0
  %3137 = vmatprep.mubr.bf16.mxu0 0
  %3138 = vmatmul.mubr.bf16.gmra.mrb[0].mxu0 %v2987
  %v3139 = vpop.f32.mrb[0].mxu0
  %v3140 = vadd.f32 0.0, %v3139
  %v3141 = vpop.f32.mrb[0].mxu0
  %v3142 = vpop.f32.mrb[0].mxu0
  %v3143 = vadd.f32 0.0, %v3142
  %v3144 = vpop.f32.mrb[0].mxu0
  %3145 = vmatprep.mubr.bf16.mxu0 0
  %3146 = vmatmul.mubr.bf16.gmra.mrb[0].mxu0 %v2990
  %v3147 = vpop.f32.mrb[0].mxu0
  %v3148 = vadd.f32 0.0, %v3147
  %v3149 = vpop.f32.mrb[0].mxu0
  %v3150 = vpop.f32.mrb[0].mxu0
  %v3151 = vadd.f32 0.0, %v3150
  %v3152 = vpop.f32.mrb[0].mxu0
  %3153 = vmatprep.mubr.bf16.mxu0 0
  %3154 = vmatmul.mubr.bf16.gmra.mrb[0].mxu0 %v2993
  %v3155 = vpop.f32.mrb[0].mxu0
  %v3156 = vadd.f32 0.0, %v3155
  %v3157 = vpop.f32.mrb[0].mxu0
  %v3158 = vpop.f32.mrb[0].mxu0
  %v3159 = vadd.f32 0.0, %v3158
  %v3160 = vpop.f32.mrb[0].mxu0
  %3161 = vmatprep.mubr.bf16.mxu0 0
  %3162 = vmatmul.mubr.bf16.gmra.mrb[0].mxu0 %v2996
  %v3163 = vpop.f32.mrb[0].mxu0
  %v3164 = vadd.f32 0.0, %v3163
  %v3165 = vpop.f32.mrb[0].mxu0
  %v3166 = vpop.f32.mrb[0].mxu0
  %v3167 = vadd.f32 0.0, %v3166
  %v3168 = vpop.f32.mrb[0].mxu0
  %3169 = vmatprep.mubr.bf16.mxu0 0
  %3170 = vmatmul.mubr.bf16.gmra.mrb[0].mxu0 %v2999
  %v3171 = vpop.f32.mrb[0].mxu0
  %v3172 = vadd.f32 0.0, %v3171
  %v3173 = vpop.f32.mrb[0].mxu0
  %v3174 = vpop.f32.mrb[0].mxu0
  %v3175 = vadd.f32 0.0, %v3174
  %v3176 = vpop.f32.mrb[0].mxu0
  %3177 = vmatprep.mubr.bf16.mxu0 0
  %3178 = vmatmul.mubr.bf16.gmra.mrb[0].mxu0 %v3002
  %v3179 = vpop.f32.mrb[0].mxu0
  %v3180 = vadd.f32 0.0, %v3179
  %v3181 = vpop.f32.mrb[0].mxu0
  %v3182 = vpop.f32.mrb[0].mxu0
  %v3183 = vadd.f32 0.0, %v3182
  %v3184 = vpop.f32.mrb[0].mxu0
  %3185 = vmatprep.mubr.bf16.mxu0 0
  %3186 = vmatmul.mubr.bf16.gmra.mrb[0].mxu0 %v3005
  %v3187 = vpop.f32.mrb[0].mxu0
  %v3188 = vadd.f32 0.0, %v3187
  %v3189 = vpop.f32.mrb[0].mxu0
  %v3190 = vpop.f32.mrb[0].mxu0
  %v3191 = vadd.f32 0.0, %v3190
  %v3192 = vpop.f32.mrb[0].mxu0
  %3193 = vmatprep.mubr.bf16.mxu0 0
  %3194 = vmatmul.mubr.bf16.gmra.mrb[0].mxu0 %v3008
  %v3195 = vpop.f32.mrb[0].mxu0
  %v3196 = vadd.f32 0.0, %v3195
  %v3197 = vpop.f32.mrb[0].mxu0
  %v3198 = vpop.f32.mrb[0].mxu0
  %v3199 = vadd.f32 0.0, %v3198
  %v3200 = vpop.f32.mrb[0].mxu0
  %3201 = vmatprep.mubr.bf16.mxu0 0
  %3202 = vmatmul.mubr.bf16.gmra.mrb[0].mxu0 %v3011
  %v3203 = vpop.f32.mrb[0].mxu0
  %v3204 = vadd.f32 0.0, %v3203
  %v3205 = vpop.f32.mrb[0].mxu0
  %v3206 = vpop.f32.mrb[0].mxu0
  %v3207 = vadd.f32 0.0, %v3206
  %v3208 = vpop.f32.mrb[0].mxu0
  %3209 = vmatprep.mubr.bf16.mxu0 0
  %3210 = vmatmul.mubr.bf16.gmra.mrb[0].mxu0 %v3014
  %v3211 = vpop.f32.mrb[0].mxu0
  %v3212 = vadd.f32 0.0, %v3211
  %v3213 = vpop.f32.mrb[0].mxu0
  %v3214 = vpop.f32.mrb[0].mxu0
  %v3215 = vadd.f32 0.0, %v3214
  %v3216 = vpop.f32.mrb[0].mxu0
  %3217 = vmatprep.mubr.bf16.mxu0 0
  %3218 = vmatmul.mubr.bf16.gmra.mrb[0].mxu0 %v3017
  %v3219 = vpop.f32.mrb[0].mxu0
  %v3220 = vadd.f32 0.0, %v3219
  %v3221 = vpop.f32.mrb[0].mxu0
  %v3222 = vpop.f32.mrb[0].mxu0
  %v3223 = vadd.f32 0.0, %v3222
  %v3224 = vpop.f32.mrb[0].mxu0
  %3225 = vmatprep.mubr.bf16.mxu0 0
  %3226 = vmatmul.mubr.bf16.gmra.mrb[0].mxu0 %v3020
  %v3227 = vpop.f32.mrb[0].mxu0
  %v3228 = vadd.f32 0.0, %v3227
  %v3229 = vpop.f32.mrb[0].mxu0
  %v3230 = vpop.f32.mrb[0].mxu0
  %v3231 = vadd.f32 0.0, %v3230
  %v3232 = vpop.f32.mrb[0].mxu0
  %3233 = vmatprep.mubr.bf16.mxu0 0
  %3234 = vmatmul.mubr.bf16.gmra.mrb[0].mxu0 %v3023
  %v3235 = vpop.f32.mrb[0].mxu0
  %v3236 = vadd.f32 0.0, %v3235
  %v3237 = vpop.f32.mrb[0].mxu0
  %v3238 = vpop.f32.mrb[0].mxu0
  %v3239 = vadd.f32 0.0, %v3238
  %v3240 = vpop.f32.mrb[0].mxu0
  %3241 = vmatprep.mubr.bf16.mxu0 0
  %3242 = vmatmul.mubr.bf16.gmra.mrb[0].mxu0 %v3026
  %v3243 = vpop.f32.mrb[0].mxu0
  %v3244 = vadd.f32 0.0, %v3243
  %v3245 = vpop.f32.mrb[0].mxu0
  %v3246 = vpop.f32.mrb[0].mxu0
  %v3247 = vadd.f32 0.0, %v3246
  %v3248 = vpop.f32.mrb[0].mxu0
  %3249 = vmatprep.mubr.bf16.mxu0 0
  %3250 = vmatmul.mubr.bf16.gmra.mrb[0].mxu0 %v3029
  %v3251 = vpop.f32.mrb[0].mxu0
  %v3252 = vadd.f32 0.0, %v3251
  %v3253 = vpop.f32.mrb[0].mxu0
  %v3254 = vpop.f32.mrb[0].mxu0
  %v3255 = vadd.f32 0.0, %v3254
  %v3256 = vpop.f32.mrb[0].mxu0
  %3257 = vmatprep.mubr.bf16.mxu0 0
  %3258 = vmatmul.mubr.bf16.gmra.mrb[0].mxu0 %v3032
  %v3259 = vpop.f32.mrb[0].mxu0
  %v3260 = vadd.f32 0.0, %v3259
  %v3261 = vpop.f32.mrb[0].mxu0
  %v3262 = vpop.f32.mrb[0].mxu0
  %v3263 = vadd.f32 0.0, %v3262
  %v3264 = vpop.f32.mrb[0].mxu0
  %3265 = vmatprep.mubr.bf16.mxu0 0
  %3266 = vmatmul.mubr.bf16.gmra.mrb[0].mxu0 %v3035
  %v3267 = vpop.f32.mrb[0].mxu0
  %v3268 = vadd.f32 0.0, %v3267
  %v3269 = vpop.f32.mrb[0].mxu0
  %v3270 = vpop.f32.mrb[0].mxu0
  %v3271 = vadd.f32 0.0, %v3270
  %v3272 = vpop.f32.mrb[0].mxu0
  %3273 = vmatprep.mubr.bf16.mxu0 0
  %3274 = vmatmul.mubr.bf16.gmra.mrb[0].mxu0 %v3038
  %v3275 = vpop.f32.mrb[0].mxu0
  %v3276 = vadd.f32 0.0, %v3275
  %v3277 = vpop.f32.mrb[0].mxu0
  %v3278 = vpop.f32.mrb[0].mxu0
  %v3279 = vadd.f32 0.0, %v3278
  %v3280 = vpop.f32.mrb[0].mxu0
  %3281 = vmatprep.mubr.bf16.mxu0 0
  %3282 = vmatmul.mubr.bf16.gmra.mrb[0].mxu0 %v3041
  %v3283 = vpop.f32.mrb[0].mxu0
  %v3284 = vadd.f32 0.0, %v3283
  %v3285 = vpop.f32.mrb[0].mxu0
  %v3286 = vpop.f32.mrb[0].mxu0
  %v3287 = vadd.f32 0.0, %v3286
  %v3288 = vpop.f32.mrb[0].mxu0
  %3289 = vmatprep.mubr.bf16.mxu0 0
  %3290 = vmatmul.mubr.bf16.gmra.mrb[0].mxu0 %v3044
  %v3291 = vpop.f32.mrb[0].mxu0
  %v3292 = vadd.f32 0.0, %v3291
  %v3293 = vpop.f32.mrb[0].mxu0
  %v3294 = vpop.f32.mrb[0].mxu0
  %v3295 = vadd.f32 0.0, %v3294
  %v3296 = vpop.f32.mrb[0].mxu0
  %3297 = vmatprep.mubr.bf16.mxu0 0
  %3298 = vmatmul.mubr.bf16.gmra.mrb[0].mxu0 %v3047
  %v3299 = vpop.f32.mrb[0].mxu0
  %v3300 = vadd.f32 0.0, %v3299
  %v3301 = vpop.f32.mrb[0].mxu0
  %v3302 = vpop.f32.mrb[0].mxu0
  %v3303 = vadd.f32 0.0, %v3302
  %v3304 = vpop.f32.mrb[0].mxu0
  %3305 = vmatprep.mubr.bf16.mxu0 0
  %3306 = vmatmul.mubr.bf16.gmra.mrb[0].mxu0 %v3050
  %v3307 = vpop.f32.mrb[0].mxu0
  %v3308 = vadd.f32 0.0, %v3307
  %v3309 = vpop.f32.mrb[0].mxu0
  %v3310 = vpop.f32.mrb[0].mxu0
  %v3311 = vadd.f32 0.0, %v3310
  %v3312 = vpop.f32.mrb[0].mxu0
  %3313 = vmatprep.mubr.bf16.mxu0 0
  %3314 = vmatmul.mubr.bf16.gmra.mrb[0].mxu0 %v3053
  %v3315 = vpop.f32.mrb[0].mxu0
  %v3316 = vadd.f32 0.0, %v3315
  %v3317 = vpop.f32.mrb[0].mxu0
  %v3318 = vpop.f32.mrb[0].mxu0
  %v3319 = vadd.f32 0.0, %v3318
  %v3320 = vpop.f32.mrb[0].mxu0
  %3321 = vmatprep.mubr.bf16.mxu0 0
  %3322 = vmatmul.mubr.bf16.gmra.mrb[0].mxu0 %v3056
  %v3323 = vpop.f32.mrb[0].mxu0
  %v3324 = vadd.f32 0.0, %v3323
  %v3325 = vpop.f32.mrb[0].mxu0
  %v3326 = vpop.f32.mrb[0].mxu0
  %v3327 = vadd.f32 0.0, %v3326
  %v3328 = vpop.f32.mrb[0].mxu0
  %3329 = vmatprep.mubr.bf16.mxu0 0
  %3330 = vmatmul.mubr.bf16.gmra.mrb[0].mxu0 %v3059
  %v3331 = vpop.f32.mrb[0].mxu0
  %v3332 = vadd.f32 0.0, %v3331
  %v3333 = vpop.f32.mrb[0].mxu0
  %v3334 = vpop.f32.mrb[0].mxu0
  %v3335 = vadd.f32 0.0, %v3334
  %v3336 = vpop.f32.mrb[0].mxu0
  %3337 = vmatprep.mubr.bf16.mxu0 0
  %3338 = vmatmul.mubr.bf16.gmra.mrb[0].mxu0 %v3062
  %v3339 = vpop.f32.mrb[0].mxu0
  %v3340 = vadd.f32 0.0, %v3339
  %v3341 = vpop.f32.mrb[0].mxu0
  %v3342 = vpop.f32.mrb[0].mxu0
  %v3343 = vadd.f32 0.0, %v3342
  %v3344 = vpop.f32.mrb[0].mxu0
  %3345 = vmatprep.mubr.bf16.mxu0 0
  %3346 = vmatmul.mubr.bf16.gmra.mrb[0].mxu0 %v3065
  %v3347 = vpop.f32.mrb[0].mxu0
  %v3348 = vadd.f32 0.0, %v3347
  %v3349 = vpop.f32.mrb[0].mxu0
  %v3350 = vpop.f32.mrb[0].mxu0
  %v3351 = vadd.f32 0.0, %v3350
  %v3352 = vpop.f32.mrb[0].mxu0
  %3353 = vmatprep.mubr.bf16.mxu0 0
  %3354 = vmatmul.mubr.bf16.gmra.mrb[0].mxu0 %v3068
  %v3355 = vpop.f32.mrb[0].mxu0
  %v3356 = vadd.f32 0.0, %v3355
  %v3357 = vpop.f32.mrb[0].mxu0
  %v3358 = vpop.f32.mrb[0].mxu0
  %v3359 = vadd.f32 0.0, %v3358
  %v3360 = vpop.f32.mrb[0].mxu0
  %3361 = vdwg.mxu0
  %v3362 = vadd.f32 %v2812, %v3108
  %v3363 = vadd.f32 %v2813, %v3111
  %v3364 = vadd.f32 %v2814, %v3116
  %v3365 = vadd.f32 %v2815, %v3119
  %v3366 = vadd.f32 %v2816, %v3124
  %v3367 = vadd.f32 %v2817, %v3127
  %v3368 = vadd.f32 %v2818, %v3132
  %v3369 = vadd.f32 %v2819, %v3135
  %v3370 = vadd.f32 %v2820, %v3140
  %v3371 = vadd.f32 %v2821, %v3143
  %v3372 = vadd.f32 %v2822, %v3148
  %v3373 = vadd.f32 %v2823, %v3151
  %v3374 = vadd.f32 %v2824, %v3156
  %v3375 = vadd.f32 %v2825, %v3159
  %v3376 = vadd.f32 %v2826, %v3164
  %v3377 = vadd.f32 %v2827, %v3167
  %v3378 = vadd.f32 %v2828, %v3172
  %v3379 = vadd.f32 %v2829, %v3175
  %v3380 = vadd.f32 %v2830, %v3180
  %v3381 = vadd.f32 %v2831, %v3183
  %v3382 = vadd.f32 %v2832, %v3188
  %v3383 = vadd.f32 %v2833, %v3191
  %v3384 = vadd.f32 %v2834, %v3196
  %v3385 = vadd.f32 %v2835, %v3199
  %v3386 = vadd.f32 %v2836, %v3204
  %v3387 = vadd.f32 %v2837, %v3207
  %v3388 = vadd.f32 %v2838, %v3212
  %v3389 = vadd.f32 %v2839, %v3215
  %v3390 = vadd.f32 %v2840, %v3220
  %v3391 = vadd.f32 %v2841, %v3223
  %v3392 = vadd.f32 %v2842, %v3228
  %v3393 = vadd.f32 %v2843, %v3231
  %v3394 = vadd.f32 %v2844, %v3236
  %v3395 = vadd.f32 %v2845, %v3239
  %v3396 = vadd.f32 %v2846, %v3244
  %v3397 = vadd.f32 %v2847, %v3247
  %v3398 = vadd.f32 %v2848, %v3252
  %v3399 = vadd.f32 %v2849, %v3255
  %v3400 = vadd.f32 %v2850, %v3260
  %v3401 = vadd.f32 %v2851, %v3263
  %v3402 = vadd.f32 %v2852, %v3268
  %v3403 = vadd.f32 %v2853, %v3271
  %v3404 = vadd.f32 %v2854, %v3276
  %v3405 = vadd.f32 %v2855, %v3279
  %v3406 = vadd.f32 %v2856, %v3284
  %v3407 = vadd.f32 %v2857, %v3287
  %v3408 = vadd.f32 %v2858, %v3292
  %v3409 = vadd.f32 %v2859, %v3295
  %v3410 = vadd.f32 %v2860, %v3300
  %v3411 = vadd.f32 %v2861, %v3303
  %v3412 = vadd.f32 %v2862, %v3308
  %v3413 = vadd.f32 %v2863, %v3311
  %v3414 = vadd.f32 %v2864, %v3316
  %v3415 = vadd.f32 %v2865, %v3319
  %v3416 = vadd.f32 %v2866, %v3324
  %v3417 = vadd.f32 %v2867, %v3327
  %v3418 = vadd.f32 %v2868, %v3332
  %v3419 = vadd.f32 %v2869, %v3335
  %v3420 = vadd.f32 %v2870, %v3340
  %v3421 = vadd.f32 %v2871, %v3343
  %v3422 = vadd.f32 %v2872, %v3348
  %v3423 = vadd.f32 %v2873, %v3351
  %v3424 = vadd.f32 %v2874, %v3356
  %v3425 = vadd.f32 %v2875, %v3359
  %s3426 = scalar_lea.vmem [#allocation2], 48
  %v3427 = vld [vmem:[%s3426] sm:$0xff]
  %v3428 = vld [vmem:[%s3426 + $0x8] sm:$0xff]
  %v3429 = vld [vmem:[%s3426 + $0x18] sm:$0xff]
  %v3430 = vld [vmem:[%s3426 + $0x20] sm:$0xff]
  %v3431 = vld [vmem:[%s3426 + $0x30] sm:$0xff]
  %v3432 = vld [vmem:[%s3426 + $0x38] sm:$0xff]
  %v3433 = vld [vmem:[%s3426 + $0x48] sm:$0xff]
  %v3434 = vld [vmem:[%s3426 + $0x50] sm:$0xff]
  %v3435 = vld [vmem:[%s3426 + $0x60] sm:$0xff]
  %v3436 = vld [vmem:[%s3426 + $0x68] sm:$0xff]
  %v3437 = vld [vmem:[%s3426 + $0x78] sm:$0xff]
  %v3438 = vld [vmem:[%s3426 + $0x80] sm:$0xff]
  %v3439 = vld [vmem:[%s3426 + $0x90] sm:$0xff]
  %v3440 = vld [vmem:[%s3426 + $0x98] sm:$0xff]
  %v3441 = vld [vmem:[%s3426 + $0xa8] sm:$0xff]
  %v3442 = vld [vmem:[%s3426 + $0xb0] sm:$0xff]
  %v3443 = vld [vmem:[%s3426 + $0xc0] sm:$0xff]
  %v3444 = vld [vmem:[%s3426 + $0xc8] sm:$0xff]
  %v3445 = vld [vmem:[%s3426 + $0xd8] sm:$0xff]
  %v3446 = vld [vmem:[%s3426 + $0xe0] sm:$0xff]
  %v3447 = vld [vmem:[%s3426 + $0xf0] sm:$0xff]
  %v3448 = vld [vmem:[%s3426 + $0xf8] sm:$0xff]
  %v3449 = vld [vmem:[%s3426 + $0x108] sm:$0xff]
  %v3450 = vld [vmem:[%s3426 + $0x110] sm:$0xff]
  %v3451 = vld [vmem:[%s3426 + $0x120] sm:$0xff]
  %v3452 = vld [vmem:[%s3426 + $0x128] sm:$0xff]
  %v3453 = vld [vmem:[%s3426 + $0x138] sm:$0xff]
  %v3454 = vld [vmem:[%s3426 + $0x140] sm:$0xff]
  %v3455 = vld [vmem:[%s3426 + $0x150] sm:$0xff]
  %v3456 = vld [vmem:[%s3426 + $0x158] sm:$0xff]
  %v3457 = vld [vmem:[%s3426 + $0x168] sm:$0xff]
  %v3458 = vld [vmem:[%s3426 + $0x170] sm:$0xff]
  %v3459 = vld [vmem:[%s3426 + $0x1b0] sm:$0xff]
  %v3460 = vld [vmem:[%s3426 + $0x1b8] sm:$0xff]
  %v3461 = vld [vmem:[%s3426 + $0x1c8] sm:$0xff]
  %v3462 = vld [vmem:[%s3426 + $0x1d0] sm:$0xff]
  %v3463 = vld [vmem:[%s3426 + $0x1e0] sm:$0xff]
  %v3464 = vld [vmem:[%s3426 + $0x1e8] sm:$0xff]
  %v3465 = vld [vmem:[%s3426 + $0x1f8] sm:$0xff]
  %v3466 = vld [vmem:[%s3426 + $0x200] sm:$0xff]
  %v3467 = vld [vmem:[%s3426 + $0x210] sm:$0xff]
  %v3468 = vld [vmem:[%s3426 + $0x218] sm:$0xff]
  %v3469 = vld [vmem:[%s3426 + $0x228] sm:$0xff]
  %v3470 = vld [vmem:[%s3426 + $0x230] sm:$0xff]
  %v3471 = vld [vmem:[%s3426 + $0x240] sm:$0xff]
  %v3472 = vld [vmem:[%s3426 + $0x248] sm:$0xff]
  %v3473 = vld [vmem:[%s3426 + $0x258] sm:$0xff]
  %v3474 = vld [vmem:[%s3426 + $0x260] sm:$0xff]
  %v3475 = vld [vmem:[%s3426 + $0x270] sm:$0xff]
  %v3476 = vld [vmem:[%s3426 + $0x278] sm:$0xff]
  %v3477 = vld [vmem:[%s3426 + $0x288] sm:$0xff]
  %v3478 = vld [vmem:[%s3426 + $0x290] sm:$0xff]
  %v3479 = vld [vmem:[%s3426 + $0x2a0] sm:$0xff]
  %v3480 = vld [vmem:[%s3426 + $0x2a8] sm:$0xff]
  %v3481 = vld [vmem:[%s3426 + $0x2b8] sm:$0xff]
  %v3482 = vld [vmem:[%s3426 + $0x2c0] sm:$0xff]
  %v3483 = vld [vmem:[%s3426 + $0x2d0] sm:$0xff]
  %v3484 = vld [vmem:[%s3426 + $0x2d8] sm:$0xff]
  %v3485 = vld [vmem:[%s3426 + $0x2e8] sm:$0xff]
  %v3486 = vld [vmem:[%s3426 + $0x2f0] sm:$0xff]
  %v3487 = vld [vmem:[%s3426 + $0x300] sm:$0xff]
  %v3488 = vld [vmem:[%s3426 + $0x308] sm:$0xff]
  %v3489 = vld [vmem:[%s3426 + $0x318] sm:$0xff]
  %v3490 = vld [vmem:[%s3426 + $0x320] sm:$0xff]
  %v3491 = vpack.c.bf16 %v3428, %v3427
  %v3492 = vpack.c.bf16 %v3430, %v3429
  %v3493 = vpack.c.bf16 %v3432, %v3431
  %v3494 = vpack.c.bf16 %v3434, %v3433
  %v3495 = vpack.c.bf16 %v3436, %v3435
  %v3496 = vpack.c.bf16 %v3438, %v3437
  %v3497 = vpack.c.bf16 %v3440, %v3439
  %v3498 = vpack.c.bf16 %v3442, %v3441
  %v3499 = vpack.c.bf16 %v3444, %v3443
  %v3500 = vpack.c.bf16 %v3446, %v3445
  %v3501 = vpack.c.bf16 %v3448, %v3447
  %v3502 = vpack.c.bf16 %v3450, %v3449
  %v3503 = vpack.c.bf16 %v3452, %v3451
  %v3504 = vpack.c.bf16 %v3454, %v3453
  %v3505 = vpack.c.bf16 %v3456, %v3455
  %v3506 = vpack.c.bf16 %v3458, %v3457
  %v3507 = vpack.c.bf16 %v3460, %v3459
  %v3508 = vpack.c.bf16 %v3462, %v3461
  %v3509 = vpack.c.bf16 %v3464, %v3463
  %v3510 = vpack.c.bf16 %v3466, %v3465
  %v3511 = vpack.c.bf16 %v3468, %v3467
  %v3512 = vpack.c.bf16 %v3470, %v3469
  %v3513 = vpack.c.bf16 %v3472, %v3471
  %v3514 = vpack.c.bf16 %v3474, %v3473
  %v3515 = vpack.c.bf16 %v3476, %v3475
  %v3516 = vpack.c.bf16 %v3478, %v3477
  %v3517 = vpack.c.bf16 %v3480, %v3479
  %v3518 = vpack.c.bf16 %v3482, %v3481
  %v3519 = vpack.c.bf16 %v3484, %v3483
  %v3520 = vpack.c.bf16 %v3486, %v3485
  %v3521 = vpack.c.bf16 %v3488, %v3487
  %v3522 = vpack.c.bf16 %v3490, %v3489
  %s3523 = scalar_lea.vmem %s1, 12
  %v3524 = vld [vmem:[%s3523] sm:$0x3]
  %v3526 = vsel %vm15, %v3491, 0
  %v3529 = vsel %vm15, %v3492, 0
  %v3532 = vsel %vm15, %v3493, 0
  %v3535 = vsel %vm15, %v3494, 0
  %v3538 = vsel %vm15, %v3495, 0
  %v3541 = vsel %vm15, %v3496, 0
  %v3544 = vsel %vm15, %v3497, 0
  %v3547 = vsel %vm15, %v3498, 0
  %v3550 = vsel %vm15, %v3499, 0
  %v3553 = vsel %vm15, %v3500, 0
  %v3556 = vsel %vm15, %v3501, 0
  %v3559 = vsel %vm15, %v3502, 0
  %v3562 = vsel %vm15, %v3503, 0
  %v3565 = vsel %vm15, %v3504, 0
  %v3568 = vsel %vm15, %v3505, 0
  %v3571 = vsel %vm15, %v3506, 0
  %v3574 = vsel %vm15, %v3507, 0
  %v3577 = vsel %vm15, %v3508, 0
  %v3580 = vsel %vm15, %v3509, 0
  %v3583 = vsel %vm15, %v3510, 0
  %v3586 = vsel %vm15, %v3511, 0
  %v3589 = vsel %vm15, %v3512, 0
  %v3592 = vsel %vm15, %v3513, 0
  %v3595 = vsel %vm15, %v3514, 0
  %v3598 = vsel %vm15, %v3515, 0
  %v3601 = vsel %vm15, %v3516, 0
  %v3604 = vsel %vm15, %v3517, 0
  %v3607 = vsel %vm15, %v3518, 0
  %v3610 = vsel %vm15, %v3519, 0
  %v3613 = vsel %vm15, %v3520, 0
  %v3616 = vsel %vm15, %v3521, 0
  %v3619 = vsel %vm15, %v3522, 0
  %v3622 = vsel %vm545, %v3524, 0
  %3624 = vmatprep.subr.bf16.mxu0 0
  %3625 = vmatpush1.bf16.msra.mxu0 %v3622
  %3626 = vmatprep.subr.bf16.mxu0 0
  %3627 = vmatpush1.bf16.msra.mxu0 0
  %3628 = vmatprep.subr.bf16.mxu0 0
  %3629 = vmatpush1.bf16.msra.mxu0 0
  %3630 = vmatprep.subr.bf16.mxu0 0
  %3631 = vmatpush1.bf16.msra.mxu0 0
  %3632 = vmatprep.subr.bf16.mxu0 0
  %3633 = vmatpush1.bf16.msra.mxu0 0
  %3634 = vmatprep.subr.bf16.mxu0 0
  %3635 = vmatpush1.bf16.msra.mxu0 0
  %3636 = vmatprep.subr.bf16.mxu0 0
  %3637 = vmatpush1.bf16.msra.mxu0 0
  %3638 = vmatprep.subr.bf16.mxu0 0
  %3639 = vmatpush1.bf16.msra.mxu0 0
  %3640 = vmatprep.subr.bf16.mxu0 0
  %3641 = vmatpush1.bf16.msra.mxu0 0
  %3642 = vmatprep.subr.bf16.mxu0 0
  %3643 = vmatpush1.bf16.msra.mxu0 0
  %3644 = vmatprep.subr.bf16.mxu0 0
  %3645 = vmatpush1.bf16.msra.mxu0 0
  %3646 = vmatprep.subr.bf16.mxu0 0
  %3647 = vmatpush1.bf16.msra.mxu0 0
  %3648 = vmatprep.subr.bf16.mxu0 0
  %3649 = vmatpush1.bf16.msra.mxu0 0
  %3650 = vmatprep.subr.bf16.mxu0 0
  %3651 = vmatpush1.bf16.msra.mxu0 0
  %3652 = vmatprep.subr.bf16.mxu0 0
  %3653 = vmatpush1.bf16.msra.mxu0 0
  %3654 = vmatprep.subr.bf16.mxu0 0
  %3655 = vmatpush1.bf16.msra.mxu0 0
  %3656 = vmatprep.mubr.bf16.mxu0 0
  %3657 = vmatmul.mubr.bf16.gmra.mrb[0].mxu0 %v3526
  %v3658 = vpop.f32.mrb[0].mxu0
  %v3659 = vadd.f32 0.0, %v3658
  %v3660 = vpop.f32.mrb[0].mxu0
  %v3661 = vpop.f32.mrb[0].mxu0
  %v3662 = vadd.f32 0.0, %v3661
  %v3663 = vpop.f32.mrb[0].mxu0
  %3664 = vmatprep.mubr.bf16.mxu0 0
  %3665 = vmatmul.mubr.bf16.gmra.mrb[0].mxu0 %v3529
  %v3666 = vpop.f32.mrb[0].mxu0
  %v3667 = vadd.f32 0.0, %v3666
  %v3668 = vpop.f32.mrb[0].mxu0
  %v3669 = vpop.f32.mrb[0].mxu0
  %v3670 = vadd.f32 0.0, %v3669
  %v3671 = vpop.f32.mrb[0].mxu0
  %3672 = vmatprep.mubr.bf16.mxu0 0
  %3673 = vmatmul.mubr.bf16.gmra.mrb[0].mxu0 %v3532
  %v3674 = vpop.f32.mrb[0].mxu0
  %v3675 = vadd.f32 0.0, %v3674
  %v3676 = vpop.f32.mrb[0].mxu0
  %v3677 = vpop.f32.mrb[0].mxu0
  %v3678 = vadd.f32 0.0, %v3677
  %v3679 = vpop.f32.mrb[0].mxu0
  %3680 = vmatprep.mubr.bf16.mxu0 0
  %3681 = vmatmul.mubr.bf16.gmra.mrb[0].mxu0 %v3535
  %v3682 = vpop.f32.mrb[0].mxu0
  %v3683 = vadd.f32 0.0, %v3682
  %v3684 = vpop.f32.mrb[0].mxu0
  %v3685 = vpop.f32.mrb[0].mxu0
  %v3686 = vadd.f32 0.0, %v3685
  %v3687 = vpop.f32.mrb[0].mxu0
  %3688 = vmatprep.mubr.bf16.mxu0 0
  %3689 = vmatmul.mubr.bf16.gmra.mrb[0].mxu0 %v3538
  %v3690 = vpop.f32.mrb[0].mxu0
  %v3691 = vadd.f32 0.0, %v3690
  %v3692 = vpop.f32.mrb[0].mxu0
  %v3693 = vpop.f32.mrb[0].mxu0
  %v3694 = vadd.f32 0.0, %v3693
  %v3695 = vpop.f32.mrb[0].mxu0
  %3696 = vmatprep.mubr.bf16.mxu0 0
  %3697 = vmatmul.mubr.bf16.gmra.mrb[0].mxu0 %v3541
  %v3698 = vpop.f32.mrb[0].mxu0
  %v3699 = vadd.f32 0.0, %v3698
  %v3700 = vpop.f32.mrb[0].mxu0
  %v3701 = vpop.f32.mrb[0].mxu0
  %v3702 = vadd.f32 0.0, %v3701
  %v3703 = vpop.f32.mrb[0].mxu0
  %3704 = vmatprep.mubr.bf16.mxu0 0
  %3705 = vmatmul.mubr.bf16.gmra.mrb[0].mxu0 %v3544
  %v3706 = vpop.f32.mrb[0].mxu0
  %v3707 = vadd.f32 0.0, %v3706
  %v3708 = vpop.f32.mrb[0].mxu0
  %v3709 = vpop.f32.mrb[0].mxu0
  %v3710 = vadd.f32 0.0, %v3709
  %v3711 = vpop.f32.mrb[0].mxu0
  %3712 = vmatprep.mubr.bf16.mxu0 0
  %3713 = vmatmul.mubr.bf16.gmra.mrb[0].mxu0 %v3547
  %v3714 = vpop.f32.mrb[0].mxu0
  %v3715 = vadd.f32 0.0, %v3714
  %v3716 = vpop.f32.mrb[0].mxu0
  %v3717 = vpop.f32.mrb[0].mxu0
  %v3718 = vadd.f32 0.0, %v3717
  %v3719 = vpop.f32.mrb[0].mxu0
  %3720 = vmatprep.mubr.bf16.mxu0 0
  %3721 = vmatmul.mubr.bf16.gmra.mrb[0].mxu0 %v3550
  %v3722 = vpop.f32.mrb[0].mxu0
  %v3723 = vadd.f32 0.0, %v3722
  %v3724 = vpop.f32.mrb[0].mxu0
  %v3725 = vpop.f32.mrb[0].mxu0
  %v3726 = vadd.f32 0.0, %v3725
  %v3727 = vpop.f32.mrb[0].mxu0
  %3728 = vmatprep.mubr.bf16.mxu0 0
  %3729 = vmatmul.mubr.bf16.gmra.mrb[0].mxu0 %v3553
  %v3730 = vpop.f32.mrb[0].mxu0
  %v3731 = vadd.f32 0.0, %v3730
  %v3732 = vpop.f32.mrb[0].mxu0
  %v3733 = vpop.f32.mrb[0].mxu0
  %v3734 = vadd.f32 0.0, %v3733
  %v3735 = vpop.f32.mrb[0].mxu0
  %3736 = vmatprep.mubr.bf16.mxu0 0
  %3737 = vmatmul.mubr.bf16.gmra.mrb[0].mxu0 %v3556
  %v3738 = vpop.f32.mrb[0].mxu0
  %v3739 = vadd.f32 0.0, %v3738
  %v3740 = vpop.f32.mrb[0].mxu0
  %v3741 = vpop.f32.mrb[0].mxu0
  %v3742 = vadd.f32 0.0, %v3741
  %v3743 = vpop.f32.mrb[0].mxu0
  %3744 = vmatprep.mubr.bf16.mxu0 0
  %3745 = vmatmul.mubr.bf16.gmra.mrb[0].mxu0 %v3559
  %v3746 = vpop.f32.mrb[0].mxu0
  %v3747 = vadd.f32 0.0, %v3746
  %v3748 = vpop.f32.mrb[0].mxu0
  %v3749 = vpop.f32.mrb[0].mxu0
  %v3750 = vadd.f32 0.0, %v3749
  %v3751 = vpop.f32.mrb[0].mxu0
  %3752 = vmatprep.mubr.bf16.mxu0 0
  %3753 = vmatmul.mubr.bf16.gmra.mrb[0].mxu0 %v3562
  %v3754 = vpop.f32.mrb[0].mxu0
  %v3755 = vadd.f32 0.0, %v3754
  %v3756 = vpop.f32.mrb[0].mxu0
  %v3757 = vpop.f32.mrb[0].mxu0
  %v3758 = vadd.f32 0.0, %v3757
  %v3759 = vpop.f32.mrb[0].mxu0
  %3760 = vmatprep.mubr.bf16.mxu0 0
  %3761 = vmatmul.mubr.bf16.gmra.mrb[0].mxu0 %v3565
  %v3762 = vpop.f32.mrb[0].mxu0
  %v3763 = vadd.f32 0.0, %v3762
  %v3764 = vpop.f32.mrb[0].mxu0
  %v3765 = vpop.f32.mrb[0].mxu0
  %v3766 = vadd.f32 0.0, %v3765
  %v3767 = vpop.f32.mrb[0].mxu0
  %3768 = vmatprep.mubr.bf16.mxu0 0
  %3769 = vmatmul.mubr.bf16.gmra.mrb[0].mxu0 %v3568
  %v3770 = vpop.f32.mrb[0].mxu0
  %v3771 = vadd.f32 0.0, %v3770
  %v3772 = vpop.f32.mrb[0].mxu0
  %v3773 = vpop.f32.mrb[0].mxu0
  %v3774 = vadd.f32 0.0, %v3773
  %v3775 = vpop.f32.mrb[0].mxu0
  %3776 = vmatprep.mubr.bf16.mxu0 0
  %3777 = vmatmul.mubr.bf16.gmra.mrb[0].mxu0 %v3571
  %v3778 = vpop.f32.mrb[0].mxu0
  %v3779 = vadd.f32 0.0, %v3778
  %v3780 = vpop.f32.mrb[0].mxu0
  %v3781 = vpop.f32.mrb[0].mxu0
  %v3782 = vadd.f32 0.0, %v3781
  %v3783 = vpop.f32.mrb[0].mxu0
  %3784 = vmatprep.mubr.bf16.mxu0 0
  %3785 = vmatmul.mubr.bf16.gmra.mrb[0].mxu0 %v3574
  %v3786 = vpop.f32.mrb[0].mxu0
  %v3787 = vadd.f32 0.0, %v3786
  %v3788 = vpop.f32.mrb[0].mxu0
  %v3789 = vpop.f32.mrb[0].mxu0
  %v3790 = vadd.f32 0.0, %v3789
  %v3791 = vpop.f32.mrb[0].mxu0
  %3792 = vmatprep.mubr.bf16.mxu0 0
  %3793 = vmatmul.mubr.bf16.gmra.mrb[0].mxu0 %v3577
  %v3794 = vpop.f32.mrb[0].mxu0
  %v3795 = vadd.f32 0.0, %v3794
  %v3796 = vpop.f32.mrb[0].mxu0
  %v3797 = vpop.f32.mrb[0].mxu0
  %v3798 = vadd.f32 0.0, %v3797
  %v3799 = vpop.f32.mrb[0].mxu0
  %3800 = vmatprep.mubr.bf16.mxu0 0
  %3801 = vmatmul.mubr.bf16.gmra.mrb[0].mxu0 %v3580
  %v3802 = vpop.f32.mrb[0].mxu0
  %v3803 = vadd.f32 0.0, %v3802
  %v3804 = vpop.f32.mrb[0].mxu0
  %v3805 = vpop.f32.mrb[0].mxu0
  %v3806 = vadd.f32 0.0, %v3805
  %v3807 = vpop.f32.mrb[0].mxu0
  %3808 = vmatprep.mubr.bf16.mxu0 0
  %3809 = vmatmul.mubr.bf16.gmra.mrb[0].mxu0 %v3583
  %v3810 = vpop.f32.mrb[0].mxu0
  %v3811 = vadd.f32 0.0, %v3810
  %v3812 = vpop.f32.mrb[0].mxu0
  %v3813 = vpop.f32.mrb[0].mxu0
  %v3814 = vadd.f32 0.0, %v3813
  %v3815 = vpop.f32.mrb[0].mxu0
  %3816 = vmatprep.mubr.bf16.mxu0 0
  %3817 = vmatmul.mubr.bf16.gmra.mrb[0].mxu0 %v3586
  %v3818 = vpop.f32.mrb[0].mxu0
  %v3819 = vadd.f32 0.0, %v3818
  %v3820 = vpop.f32.mrb[0].mxu0
  %v3821 = vpop.f32.mrb[0].mxu0
  %v3822 = vadd.f32 0.0, %v3821
  %v3823 = vpop.f32.mrb[0].mxu0
  %3824 = vmatprep.mubr.bf16.mxu0 0
  %3825 = vmatmul.mubr.bf16.gmra.mrb[0].mxu0 %v3589
  %v3826 = vpop.f32.mrb[0].mxu0
  %v3827 = vadd.f32 0.0, %v3826
  %v3828 = vpop.f32.mrb[0].mxu0
  %v3829 = vpop.f32.mrb[0].mxu0
  %v3830 = vadd.f32 0.0, %v3829
  %v3831 = vpop.f32.mrb[0].mxu0
  %3832 = vmatprep.mubr.bf16.mxu0 0
  %3833 = vmatmul.mubr.bf16.gmra.mrb[0].mxu0 %v3592
  %v3834 = vpop.f32.mrb[0].mxu0
  %v3835 = vadd.f32 0.0, %v3834
  %v3836 = vpop.f32.mrb[0].mxu0
  %v3837 = vpop.f32.mrb[0].mxu0
  %v3838 = vadd.f32 0.0, %v3837
  %v3839 = vpop.f32.mrb[0].mxu0
  %3840 = vmatprep.mubr.bf16.mxu0 0
  %3841 = vmatmul.mubr.bf16.gmra.mrb[0].mxu0 %v3595
  %v3842 = vpop.f32.mrb[0].mxu0
  %v3843 = vadd.f32 0.0, %v3842
  %v3844 = vpop.f32.mrb[0].mxu0
  %v3845 = vpop.f32.mrb[0].mxu0
  %v3846 = vadd.f32 0.0, %v3845
  %v3847 = vpop.f32.mrb[0].mxu0
  %3848 = vmatprep.mubr.bf16.mxu0 0
  %3849 = vmatmul.mubr.bf16.gmra.mrb[0].mxu0 %v3598
  %v3850 = vpop.f32.mrb[0].mxu0
  %v3851 = vadd.f32 0.0, %v3850
  %v3852 = vpop.f32.mrb[0].mxu0
  %v3853 = vpop.f32.mrb[0].mxu0
  %v3854 = vadd.f32 0.0, %v3853
  %v3855 = vpop.f32.mrb[0].mxu0
  %3856 = vmatprep.mubr.bf16.mxu0 0
  %3857 = vmatmul.mubr.bf16.gmra.mrb[0].mxu0 %v3601
  %v3858 = vpop.f32.mrb[0].mxu0
  %v3859 = vadd.f32 0.0, %v3858
  %v3860 = vpop.f32.mrb[0].mxu0
  %v3861 = vpop.f32.mrb[0].mxu0
  %v3862 = vadd.f32 0.0, %v3861
  %v3863 = vpop.f32.mrb[0].mxu0
  %3864 = vmatprep.mubr.bf16.mxu0 0
  %3865 = vmatmul.mubr.bf16.gmra.mrb[0].mxu0 %v3604
  %v3866 = vpop.f32.mrb[0].mxu0
  %v3867 = vadd.f32 0.0, %v3866
  %v3868 = vpop.f32.mrb[0].mxu0
  %v3869 = vpop.f32.mrb[0].mxu0
  %v3870 = vadd.f32 0.0, %v3869
  %v3871 = vpop.f32.mrb[0].mxu0
  %3872 = vmatprep.mubr.bf16.mxu0 0
  %3873 = vmatmul.mubr.bf16.gmra.mrb[0].mxu0 %v3607
  %v3874 = vpop.f32.mrb[0].mxu0
  %v3875 = vadd.f32 0.0, %v3874
  %v3876 = vpop.f32.mrb[0].mxu0
  %v3877 = vpop.f32.mrb[0].mxu0
  %v3878 = vadd.f32 0.0, %v3877
  %v3879 = vpop.f32.mrb[0].mxu0
  %3880 = vmatprep.mubr.bf16.mxu0 0
  %3881 = vmatmul.mubr.bf16.gmra.mrb[0].mxu0 %v3610
  %v3882 = vpop.f32.mrb[0].mxu0
  %v3883 = vadd.f32 0.0, %v3882
  %v3884 = vpop.f32.mrb[0].mxu0
  %v3885 = vpop.f32.mrb[0].mxu0
  %v3886 = vadd.f32 0.0, %v3885
  %v3887 = vpop.f32.mrb[0].mxu0
  %3888 = vmatprep.mubr.bf16.mxu0 0
  %3889 = vmatmul.mubr.bf16.gmra.mrb[0].mxu0 %v3613
  %v3890 = vpop.f32.mrb[0].mxu0
  %v3891 = vadd.f32 0.0, %v3890
  %v3892 = vpop.f32.mrb[0].mxu0
  %v3893 = vpop.f32.mrb[0].mxu0
  %v3894 = vadd.f32 0.0, %v3893
  %v3895 = vpop.f32.mrb[0].mxu0
  %3896 = vmatprep.mubr.bf16.mxu0 0
  %3897 = vmatmul.mubr.bf16.gmra.mrb[0].mxu0 %v3616
  %v3898 = vpop.f32.mrb[0].mxu0
  %v3899 = vadd.f32 0.0, %v3898
  %v3900 = vpop.f32.mrb[0].mxu0
  %v3901 = vpop.f32.mrb[0].mxu0
  %v3902 = vadd.f32 0.0, %v3901
  %v3903 = vpop.f32.mrb[0].mxu0
  %3904 = vmatprep.mubr.bf16.mxu0 0
  %3905 = vmatmul.mubr.bf16.gmra.mrb[0].mxu0 %v3619
  %v3906 = vpop.f32.mrb[0].mxu0
  %v3907 = vadd.f32 0.0, %v3906
  %v3908 = vpop.f32.mrb[0].mxu0
  %v3909 = vpop.f32.mrb[0].mxu0
  %v3910 = vadd.f32 0.0, %v3909
  %v3911 = vpop.f32.mrb[0].mxu0
  %3912 = vdwg.mxu0
  %v3913 = vadd.f32 %v3362, %v3659
  %v3914 = vadd.f32 %v3363, %v3662
  %v3915 = vadd.f32 %v3364, %v3667
  %v3916 = vadd.f32 %v3365, %v3670
  %v3917 = vadd.f32 %v3366, %v3675
  %v3918 = vadd.f32 %v3367, %v3678
  %v3919 = vadd.f32 %v3368, %v3683
  %v3920 = vadd.f32 %v3369, %v3686
  %v3921 = vadd.f32 %v3370, %v3691
  %v3922 = vadd.f32 %v3371, %v3694
  %v3923 = vadd.f32 %v3372, %v3699
  %v3924 = vadd.f32 %v3373, %v3702
  %v3925 = vadd.f32 %v3374, %v3707
  %v3926 = vadd.f32 %v3375, %v3710
  %v3927 = vadd.f32 %v3376, %v3715
  %v3928 = vadd.f32 %v3377, %v3718
  %v3929 = vadd.f32 %v3378, %v3723
  %v3930 = vadd.f32 %v3379, %v3726
  %v3931 = vadd.f32 %v3380, %v3731
  %v3932 = vadd.f32 %v3381, %v3734
  %v3933 = vadd.f32 %v3382, %v3739
  %v3934 = vadd.f32 %v3383, %v3742
  %v3935 = vadd.f32 %v3384, %v3747
  %v3936 = vadd.f32 %v3385, %v3750
  %v3937 = vadd.f32 %v3386, %v3755
  %v3938 = vadd.f32 %v3387, %v3758
  %v3939 = vadd.f32 %v3388, %v3763
  %v3940 = vadd.f32 %v3389, %v3766
  %v3941 = vadd.f32 %v3390, %v3771
  %v3942 = vadd.f32 %v3391, %v3774
  %v3943 = vadd.f32 %v3392, %v3779
  %v3944 = vadd.f32 %v3393, %v3782
  %v3945 = vadd.f32 %v3394, %v3787
  %v3946 = vadd.f32 %v3395, %v3790
  %v3947 = vadd.f32 %v3396, %v3795
  %v3948 = vadd.f32 %v3397, %v3798
  %v3949 = vadd.f32 %v3398, %v3803
  %v3950 = vadd.f32 %v3399, %v3806
  %v3951 = vadd.f32 %v3400, %v3811
  %v3952 = vadd.f32 %v3401, %v3814
  %v3953 = vadd.f32 %v3402, %v3819
  %v3954 = vadd.f32 %v3403, %v3822
  %v3955 = vadd.f32 %v3404, %v3827
  %v3956 = vadd.f32 %v3405, %v3830
  %v3957 = vadd.f32 %v3406, %v3835
  %v3958 = vadd.f32 %v3407, %v3838
  %v3959 = vadd.f32 %v3408, %v3843
  %v3960 = vadd.f32 %v3409, %v3846
  %v3961 = vadd.f32 %v3410, %v3851
  %v3962 = vadd.f32 %v3411, %v3854
  %v3963 = vadd.f32 %v3412, %v3859
  %v3964 = vadd.f32 %v3413, %v3862
  %v3965 = vadd.f32 %v3414, %v3867
  %v3966 = vadd.f32 %v3415, %v3870
  %v3967 = vadd.f32 %v3416, %v3875
  %v3968 = vadd.f32 %v3417, %v3878
  %v3969 = vadd.f32 %v3418, %v3883
  %v3970 = vadd.f32 %v3419, %v3886
  %v3971 = vadd.f32 %v3420, %v3891
  %v3972 = vadd.f32 %v3421, %v3894
  %v3973 = vadd.f32 %v3422, %v3899
  %v3974 = vadd.f32 %v3423, %v3902
  %v3975 = vadd.f32 %v3424, %v3907
  %v3976 = vadd.f32 %v3425, %v3910
  %v3977 = vld [vmem:[%s3426 + $0x1] sm:$0xff]
  %v3978 = vld [vmem:[%s3426 + $0x9] sm:$0xff]
  %v3979 = vld [vmem:[%s3426 + $0x19] sm:$0xff]
  %v3980 = vld [vmem:[%s3426 + $0x21] sm:$0xff]
  %v3981 = vld [vmem:[%s3426 + $0x31] sm:$0xff]
  %v3982 = vld [vmem:[%s3426 + $0x39] sm:$0xff]
  %v3983 = vld [vmem:[%s3426 + $0x49] sm:$0xff]
  %v3984 = vld [vmem:[%s3426 + $0x51] sm:$0xff]
  %v3985 = vld [vmem:[%s3426 + $0x61] sm:$0xff]
  %v3986 = vld [vmem:[%s3426 + $0x69] sm:$0xff]
  %v3987 = vld [vmem:[%s3426 + $0x79] sm:$0xff]
  %v3988 = vld [vmem:[%s3426 + $0x81] sm:$0xff]
  %v3989 = vld [vmem:[%s3426 + $0x91] sm:$0xff]
  %v3990 = vld [vmem:[%s3426 + $0x99] sm:$0xff]
  %v3991 = vld [vmem:[%s3426 + $0xa9] sm:$0xff]
  %v3992 = vld [vmem:[%s3426 + $0xb1] sm:$0xff]
  %v3993 = vld [vmem:[%s3426 + $0xc1] sm:$0xff]
  %v3994 = vld [vmem:[%s3426 + $0xc9] sm:$0xff]
  %v3995 = vld [vmem:[%s3426 + $0xd9] sm:$0xff]
  %v3996 = vld [vmem:[%s3426 + $0xe1] sm:$0xff]
  %v3997 = vld [vmem:[%s3426 + $0xf1] sm:$0xff]
  %v3998 = vld [vmem:[%s3426 + $0xf9] sm:$0xff]
  %v3999 = vld [vmem:[%s3426 + $0x109] sm:$0xff]
  %v4000 = vld [vmem:[%s3426 + $0x111] sm:$0xff]
  %v4001 = vld [vmem:[%s3426 + $0x121] sm:$0xff]
  %v4002 = vld [vmem:[%s3426 + $0x129] sm:$0xff]
  %v4003 = vld [vmem:[%s3426 + $0x139] sm:$0xff]
  %v4004 = vld [vmem:[%s3426 + $0x141] sm:$0xff]
  %v4005 = vld [vmem:[%s3426 + $0x151] sm:$0xff]
  %v4006 = vld [vmem:[%s3426 + $0x159] sm:$0xff]
  %v4007 = vld [vmem:[%s3426 + $0x169] sm:$0xff]
  %v4008 = vld [vmem:[%s3426 + $0x171] sm:$0xff]
  %v4009 = vld [vmem:[%s3426 + $0x1b1] sm:$0xff]
  %v4010 = vld [vmem:[%s3426 + $0x1b9] sm:$0xff]
  %v4011 = vld [vmem:[%s3426 + $0x1c9] sm:$0xff]
  %v4012 = vld [vmem:[%s3426 + $0x1d1] sm:$0xff]
  %v4013 = vld [vmem:[%s3426 + $0x1e1] sm:$0xff]
  %v4014 = vld [vmem:[%s3426 + $0x1e9] sm:$0xff]
  %v4015 = vld [vmem:[%s3426 + $0x1f9] sm:$0xff]
  %v4016 = vld [vmem:[%s3426 + $0x201] sm:$0xff]
  %v4017 = vld [vmem:[%s3426 + $0x211] sm:$0xff]
  %v4018 = vld [vmem:[%s3426 + $0x219] sm:$0xff]
  %v4019 = vld [vmem:[%s3426 + $0x229] sm:$0xff]
  %v4020 = vld [vmem:[%s3426 + $0x231] sm:$0xff]
  %v4021 = vld [vmem:[%s3426 + $0x241] sm:$0xff]
  %v4022 = vld [vmem:[%s3426 + $0x249] sm:$0xff]
  %v4023 = vld [vmem:[%s3426 + $0x259] sm:$0xff]
  %v4024 = vld [vmem:[%s3426 + $0x261] sm:$0xff]
  %v4025 = vld [vmem:[%s3426 + $0x271] sm:$0xff]
  %v4026 = vld [vmem:[%s3426 + $0x279] sm:$0xff]
  %v4027 = vld [vmem:[%s3426 + $0x289] sm:$0xff]
  %v4028 = vld [vmem:[%s3426 + $0x291] sm:$0xff]
  %v4029 = vld [vmem:[%s3426 + $0x2a1] sm:$0xff]
  %v4030 = vld [vmem:[%s3426 + $0x2a9] sm:$0xff]
  %v4031 = vld [vmem:[%s3426 + $0x2b9] sm:$0xff]
  %v4032 = vld [vmem:[%s3426 + $0x2c1] sm:$0xff]
  %v4033 = vld [vmem:[%s3426 + $0x2d1] sm:$0xff]
  %v4034 = vld [vmem:[%s3426 + $0x2d9] sm:$0xff]
  %v4035 = vld [vmem:[%s3426 + $0x2e9] sm:$0xff]
  %v4036 = vld [vmem:[%s3426 + $0x2f1] sm:$0xff]
  %v4037 = vld [vmem:[%s3426 + $0x301] sm:$0xff]
  %v4038 = vld [vmem:[%s3426 + $0x309] sm:$0xff]
  %v4039 = vld [vmem:[%s3426 + $0x319] sm:$0xff]
  %v4040 = vld [vmem:[%s3426 + $0x321] sm:$0xff]
  %v4041 = vpack.c.bf16 %v3978, %v3977
  %v4042 = vpack.c.bf16 %v3980, %v3979
  %v4043 = vpack.c.bf16 %v3982, %v3981
  %v4044 = vpack.c.bf16 %v3984, %v3983
  %v4045 = vpack.c.bf16 %v3986, %v3985
  %v4046 = vpack.c.bf16 %v3988, %v3987
  %v4047 = vpack.c.bf16 %v3990, %v3989
  %v4048 = vpack.c.bf16 %v3992, %v3991
  %v4049 = vpack.c.bf16 %v3994, %v3993
  %v4050 = vpack.c.bf16 %v3996, %v3995
  %v4051 = vpack.c.bf16 %v3998, %v3997
  %v4052 = vpack.c.bf16 %v4000, %v3999
  %v4053 = vpack.c.bf16 %v4002, %v4001
  %v4054 = vpack.c.bf16 %v4004, %v4003
  %v4055 = vpack.c.bf16 %v4006, %v4005
  %v4056 = vpack.c.bf16 %v4008, %v4007
  %v4057 = vpack.c.bf16 %v4010, %v4009
  %v4058 = vpack.c.bf16 %v4012, %v4011
  %v4059 = vpack.c.bf16 %v4014, %v4013
  %v4060 = vpack.c.bf16 %v4016, %v4015
  %v4061 = vpack.c.bf16 %v4018, %v4017
  %v4062 = vpack.c.bf16 %v4020, %v4019
  %v4063 = vpack.c.bf16 %v4022, %v4021
  %v4064 = vpack.c.bf16 %v4024, %v4023
  %v4065 = vpack.c.bf16 %v4026, %v4025
  %v4066 = vpack.c.bf16 %v4028, %v4027
  %v4067 = vpack.c.bf16 %v4030, %v4029
  %v4068 = vpack.c.bf16 %v4032, %v4031
  %v4069 = vpack.c.bf16 %v4034, %v4033
  %v4070 = vpack.c.bf16 %v4036, %v4035
  %v4071 = vpack.c.bf16 %v4038, %v4037
  %v4072 = vpack.c.bf16 %v4040, %v4039
  %s4073 = scalar_lea.vmem %s1, 14
  %v4074 = vld [vmem:[%s4073] sm:$0x3]
  %v4076 = vsel %vm15, %v4041, 0
  %v4079 = vsel %vm15, %v4042, 0
  %v4082 = vsel %vm15, %v4043, 0
  %v4085 = vsel %vm15, %v4044, 0
  %v4088 = vsel %vm15, %v4045, 0
  %v4091 = vsel %vm15, %v4046, 0
  %v4094 = vsel %vm15, %v4047, 0
  %v4097 = vsel %vm15, %v4048, 0
  %v4100 = vsel %vm15, %v4049, 0
  %v4103 = vsel %vm15, %v4050, 0
  %v4106 = vsel %vm15, %v4051, 0
  %v4109 = vsel %vm15, %v4052, 0
  %v4112 = vsel %vm15, %v4053, 0
  %v4115 = vsel %vm15, %v4054, 0
  %v4118 = vsel %vm15, %v4055, 0
  %v4121 = vsel %vm15, %v4056, 0
  %v4124 = vsel %vm15, %v4057, 0
  %v4127 = vsel %vm15, %v4058, 0
  %v4130 = vsel %vm15, %v4059, 0
  %v4133 = vsel %vm15, %v4060, 0
  %v4136 = vsel %vm15, %v4061, 0
  %v4139 = vsel %vm15, %v4062, 0
  %v4142 = vsel %vm15, %v4063, 0
  %v4145 = vsel %vm15, %v4064, 0
  %v4148 = vsel %vm15, %v4065, 0
  %v4151 = vsel %vm15, %v4066, 0
  %v4154 = vsel %vm15, %v4067, 0
  %v4157 = vsel %vm15, %v4068, 0
  %v4160 = vsel %vm15, %v4069, 0
  %v4163 = vsel %vm15, %v4070, 0
  %v4166 = vsel %vm15, %v4071, 0
  %v4169 = vsel %vm15, %v4072, 0
  %v4172 = vsel %vm545, %v4074, 0
  %4174 = vmatprep.subr.bf16.mxu0 0
  %4175 = vmatpush1.bf16.msra.mxu0 %v4172
  %4176 = vmatprep.subr.bf16.mxu0 0
  %4177 = vmatpush1.bf16.msra.mxu0 0
  %4178 = vmatprep.subr.bf16.mxu0 0
  %4179 = vmatpush1.bf16.msra.mxu0 0
  %4180 = vmatprep.subr.bf16.mxu0 0
  %4181 = vmatpush1.bf16.msra.mxu0 0
  %4182 = vmatprep.subr.bf16.mxu0 0
  %4183 = vmatpush1.bf16.msra.mxu0 0
  %4184 = vmatprep.subr.bf16.mxu0 0
  %4185 = vmatpush1.bf16.msra.mxu0 0
  %4186 = vmatprep.subr.bf16.mxu0 0
  %4187 = vmatpush1.bf16.msra.mxu0 0
  %4188 = vmatprep.subr.bf16.mxu0 0
  %4189 = vmatpush1.bf16.msra.mxu0 0
  %4190 = vmatprep.subr.bf16.mxu0 0
  %4191 = vmatpush1.bf16.msra.mxu0 0
  %4192 = vmatprep.subr.bf16.mxu0 0
  %4193 = vmatpush1.bf16.msra.mxu0 0
  %4194 = vmatprep.subr.bf16.mxu0 0
  %4195 = vmatpush1.bf16.msra.mxu0 0
  %4196 = vmatprep.subr.bf16.mxu0 0
  %4197 = vmatpush1.bf16.msra.mxu0 0
  %4198 = vmatprep.subr.bf16.mxu0 0
  %4199 = vmatpush1.bf16.msra.mxu0 0
  %4200 = vmatprep.subr.bf16.mxu0 0
  %4201 = vmatpush1.bf16.msra.mxu0 0
  %4202 = vmatprep.subr.bf16.mxu0 0
  %4203 = vmatpush1.bf16.msra.mxu0 0
  %4204 = vmatprep.subr.bf16.mxu0 0
  %4205 = vmatpush1.bf16.msra.mxu0 0
  %4206 = vmatprep.mubr.bf16.mxu0 0
  %4207 = vmatmul.mubr.bf16.gmra.mrb[0].mxu0 %v4076
  %v4208 = vpop.f32.mrb[0].mxu0
  %v4209 = vadd.f32 0.0, %v4208
  %v4210 = vpop.f32.mrb[0].mxu0
  %v4211 = vpop.f32.mrb[0].mxu0
  %v4212 = vadd.f32 0.0, %v4211
  %v4213 = vpop.f32.mrb[0].mxu0
  %4214 = vmatprep.mubr.bf16.mxu0 0
  %4215 = vmatmul.mubr.bf16.gmra.mrb[0].mxu0 %v4079
  %v4216 = vpop.f32.mrb[0].mxu0
  %v4217 = vadd.f32 0.0, %v4216
  %v4218 = vpop.f32.mrb[0].mxu0
  %v4219 = vpop.f32.mrb[0].mxu0
  %v4220 = vadd.f32 0.0, %v4219
  %v4221 = vpop.f32.mrb[0].mxu0
  %4222 = vmatprep.mubr.bf16.mxu0 0
  %4223 = vmatmul.mubr.bf16.gmra.mrb[0].mxu0 %v4082
  %v4224 = vpop.f32.mrb[0].mxu0
  %v4225 = vadd.f32 0.0, %v4224
  %v4226 = vpop.f32.mrb[0].mxu0
  %v4227 = vpop.f32.mrb[0].mxu0
  %v4228 = vadd.f32 0.0, %v4227
  %v4229 = vpop.f32.mrb[0].mxu0
  %4230 = vmatprep.mubr.bf16.mxu0 0
  %4231 = vmatmul.mubr.bf16.gmra.mrb[0].mxu0 %v4085
  %v4232 = vpop.f32.mrb[0].mxu0
  %v4233 = vadd.f32 0.0, %v4232
  %v4234 = vpop.f32.mrb[0].mxu0
  %v4235 = vpop.f32.mrb[0].mxu0
  %v4236 = vadd.f32 0.0, %v4235
  %v4237 = vpop.f32.mrb[0].mxu0
  %4238 = vmatprep.mubr.bf16.mxu0 0
  %4239 = vmatmul.mubr.bf16.gmra.mrb[0].mxu0 %v4088
  %v4240 = vpop.f32.mrb[0].mxu0
  %v4241 = vadd.f32 0.0, %v4240
  %v4242 = vpop.f32.mrb[0].mxu0
  %v4243 = vpop.f32.mrb[0].mxu0
  %v4244 = vadd.f32 0.0, %v4243
  %v4245 = vpop.f32.mrb[0].mxu0
  %4246 = vmatprep.mubr.bf16.mxu0 0
  %4247 = vmatmul.mubr.bf16.gmra.mrb[0].mxu0 %v4091
  %v4248 = vpop.f32.mrb[0].mxu0
  %v4249 = vadd.f32 0.0, %v4248
  %v4250 = vpop.f32.mrb[0].mxu0
  %v4251 = vpop.f32.mrb[0].mxu0
  %v4252 = vadd.f32 0.0, %v4251
  %v4253 = vpop.f32.mrb[0].mxu0
  %4254 = vmatprep.mubr.bf16.mxu0 0
  %4255 = vmatmul.mubr.bf16.gmra.mrb[0].mxu0 %v4094
  %v4256 = vpop.f32.mrb[0].mxu0
  %v4257 = vadd.f32 0.0, %v4256
  %v4258 = vpop.f32.mrb[0].mxu0
  %v4259 = vpop.f32.mrb[0].mxu0
  %v4260 = vadd.f32 0.0, %v4259
  %v4261 = vpop.f32.mrb[0].mxu0
  %4262 = vmatprep.mubr.bf16.mxu0 0
  %4263 = vmatmul.mubr.bf16.gmra.mrb[0].mxu0 %v4097
  %v4264 = vpop.f32.mrb[0].mxu0
  %v4265 = vadd.f32 0.0, %v4264
  %v4266 = vpop.f32.mrb[0].mxu0
  %v4267 = vpop.f32.mrb[0].mxu0
  %v4268 = vadd.f32 0.0, %v4267
  %v4269 = vpop.f32.mrb[0].mxu0
  %4270 = vmatprep.mubr.bf16.mxu0 0
  %4271 = vmatmul.mubr.bf16.gmra.mrb[0].mxu0 %v4100
  %v4272 = vpop.f32.mrb[0].mxu0
  %v4273 = vadd.f32 0.0, %v4272
  %v4274 = vpop.f32.mrb[0].mxu0
  %v4275 = vpop.f32.mrb[0].mxu0
  %v4276 = vadd.f32 0.0, %v4275
  %v4277 = vpop.f32.mrb[0].mxu0
  %4278 = vmatprep.mubr.bf16.mxu0 0
  %4279 = vmatmul.mubr.bf16.gmra.mrb[0].mxu0 %v4103
  %v4280 = vpop.f32.mrb[0].mxu0
  %v4281 = vadd.f32 0.0, %v4280
  %v4282 = vpop.f32.mrb[0].mxu0
  %v4283 = vpop.f32.mrb[0].mxu0
  %v4284 = vadd.f32 0.0, %v4283
  %v4285 = vpop.f32.mrb[0].mxu0
  %4286 = vmatprep.mubr.bf16.mxu0 0
  %4287 = vmatmul.mubr.bf16.gmra.mrb[0].mxu0 %v4106
  %v4288 = vpop.f32.mrb[0].mxu0
  %v4289 = vadd.f32 0.0, %v4288
  %v4290 = vpop.f32.mrb[0].mxu0
  %v4291 = vpop.f32.mrb[0].mxu0
  %v4292 = vadd.f32 0.0, %v4291
  %v4293 = vpop.f32.mrb[0].mxu0
  %4294 = vmatprep.mubr.bf16.mxu0 0
  %4295 = vmatmul.mubr.bf16.gmra.mrb[0].mxu0 %v4109
  %v4296 = vpop.f32.mrb[0].mxu0
  %v4297 = vadd.f32 0.0, %v4296
  %v4298 = vpop.f32.mrb[0].mxu0
  %v4299 = vpop.f32.mrb[0].mxu0
  %v4300 = vadd.f32 0.0, %v4299
  %v4301 = vpop.f32.mrb[0].mxu0
  %4302 = vmatprep.mubr.bf16.mxu0 0
  %4303 = vmatmul.mubr.bf16.gmra.mrb[0].mxu0 %v4112
  %v4304 = vpop.f32.mrb[0].mxu0
  %v4305 = vadd.f32 0.0, %v4304
  %v4306 = vpop.f32.mrb[0].mxu0
  %v4307 = vpop.f32.mrb[0].mxu0
  %v4308 = vadd.f32 0.0, %v4307
  %v4309 = vpop.f32.mrb[0].mxu0
  %4310 = vmatprep.mubr.bf16.mxu0 0
  %4311 = vmatmul.mubr.bf16.gmra.mrb[0].mxu0 %v4115
  %v4312 = vpop.f32.mrb[0].mxu0
  %v4313 = vadd.f32 0.0, %v4312
  %v4314 = vpop.f32.mrb[0].mxu0
  %v4315 = vpop.f32.mrb[0].mxu0
  %v4316 = vadd.f32 0.0, %v4315
  %v4317 = vpop.f32.mrb[0].mxu0
  %4318 = vmatprep.mubr.bf16.mxu0 0
  %4319 = vmatmul.mubr.bf16.gmra.mrb[0].mxu0 %v4118
  %v4320 = vpop.f32.mrb[0].mxu0
  %v4321 = vadd.f32 0.0, %v4320
  %v4322 = vpop.f32.mrb[0].mxu0
  %v4323 = vpop.f32.mrb[0].mxu0
  %v4324 = vadd.f32 0.0, %v4323
  %v4325 = vpop.f32.mrb[0].mxu0
  %4326 = vmatprep.mubr.bf16.mxu0 0
  %4327 = vmatmul.mubr.bf16.gmra.mrb[0].mxu0 %v4121
  %v4328 = vpop.f32.mrb[0].mxu0
  %v4329 = vadd.f32 0.0, %v4328
  %v4330 = vpop.f32.mrb[0].mxu0
  %v4331 = vpop.f32.mrb[0].mxu0
  %v4332 = vadd.f32 0.0, %v4331
  %v4333 = vpop.f32.mrb[0].mxu0
  %4334 = vmatprep.mubr.bf16.mxu0 0
  %4335 = vmatmul.mubr.bf16.gmra.mrb[0].mxu0 %v4124
  %v4336 = vpop.f32.mrb[0].mxu0
  %v4337 = vadd.f32 0.0, %v4336
  %v4338 = vpop.f32.mrb[0].mxu0
  %v4339 = vpop.f32.mrb[0].mxu0
  %v4340 = vadd.f32 0.0, %v4339
  %v4341 = vpop.f32.mrb[0].mxu0
  %4342 = vmatprep.mubr.bf16.mxu0 0
  %4343 = vmatmul.mubr.bf16.gmra.mrb[0].mxu0 %v4127
  %v4344 = vpop.f32.mrb[0].mxu0
  %v4345 = vadd.f32 0.0, %v4344
  %v4346 = vpop.f32.mrb[0].mxu0
  %v4347 = vpop.f32.mrb[0].mxu0
  %v4348 = vadd.f32 0.0, %v4347
  %v4349 = vpop.f32.mrb[0].mxu0
  %4350 = vmatprep.mubr.bf16.mxu0 0
  %4351 = vmatmul.mubr.bf16.gmra.mrb[0].mxu0 %v4130
  %v4352 = vpop.f32.mrb[0].mxu0
  %v4353 = vadd.f32 0.0, %v4352
  %v4354 = vpop.f32.mrb[0].mxu0
  %v4355 = vpop.f32.mrb[0].mxu0
  %v4356 = vadd.f32 0.0, %v4355
  %v4357 = vpop.f32.mrb[0].mxu0
  %4358 = vmatprep.mubr.bf16.mxu0 0
  %4359 = vmatmul.mubr.bf16.gmra.mrb[0].mxu0 %v4133
  %v4360 = vpop.f32.mrb[0].mxu0
  %v4361 = vadd.f32 0.0, %v4360
  %v4362 = vpop.f32.mrb[0].mxu0
  %v4363 = vpop.f32.mrb[0].mxu0
  %v4364 = vadd.f32 0.0, %v4363
  %v4365 = vpop.f32.mrb[0].mxu0
  %4366 = vmatprep.mubr.bf16.mxu0 0
  %4367 = vmatmul.mubr.bf16.gmra.mrb[0].mxu0 %v4136
  %v4368 = vpop.f32.mrb[0].mxu0
  %v4369 = vadd.f32 0.0, %v4368
  %v4370 = vpop.f32.mrb[0].mxu0
  %v4371 = vpop.f32.mrb[0].mxu0
  %v4372 = vadd.f32 0.0, %v4371
  %v4373 = vpop.f32.mrb[0].mxu0
  %4374 = vmatprep.mubr.bf16.mxu0 0
  %4375 = vmatmul.mubr.bf16.gmra.mrb[0].mxu0 %v4139
  %v4376 = vpop.f32.mrb[0].mxu0
  %v4377 = vadd.f32 0.0, %v4376
  %v4378 = vpop.f32.mrb[0].mxu0
  %v4379 = vpop.f32.mrb[0].mxu0
  %v4380 = vadd.f32 0.0, %v4379
  %v4381 = vpop.f32.mrb[0].mxu0
  %4382 = vmatprep.mubr.bf16.mxu0 0
  %4383 = vmatmul.mubr.bf16.gmra.mrb[0].mxu0 %v4142
  %v4384 = vpop.f32.mrb[0].mxu0
  %v4385 = vadd.f32 0.0, %v4384
  %v4386 = vpop.f32.mrb[0].mxu0
  %v4387 = vpop.f32.mrb[0].mxu0
  %v4388 = vadd.f32 0.0, %v4387
  %v4389 = vpop.f32.mrb[0].mxu0
  %4390 = vmatprep.mubr.bf16.mxu0 0
  %4391 = vmatmul.mubr.bf16.gmra.mrb[0].mxu0 %v4145
  %v4392 = vpop.f32.mrb[0].mxu0
  %v4393 = vadd.f32 0.0, %v4392
  %v4394 = vpop.f32.mrb[0].mxu0
  %v4395 = vpop.f32.mrb[0].mxu0
  %v4396 = vadd.f32 0.0, %v4395
  %v4397 = vpop.f32.mrb[0].mxu0
  %4398 = vmatprep.mubr.bf16.mxu0 0
  %4399 = vmatmul.mubr.bf16.gmra.mrb[0].mxu0 %v4148
  %v4400 = vpop.f32.mrb[0].mxu0
  %v4401 = vadd.f32 0.0, %v4400
  %v4402 = vpop.f32.mrb[0].mxu0
  %v4403 = vpop.f32.mrb[0].mxu0
  %v4404 = vadd.f32 0.0, %v4403
  %v4405 = vpop.f32.mrb[0].mxu0
  %4406 = vmatprep.mubr.bf16.mxu0 0
  %4407 = vmatmul.mubr.bf16.gmra.mrb[0].mxu0 %v4151
  %v4408 = vpop.f32.mrb[0].mxu0
  %v4409 = vadd.f32 0.0, %v4408
  %v4410 = vpop.f32.mrb[0].mxu0
  %v4411 = vpop.f32.mrb[0].mxu0
  %v4412 = vadd.f32 0.0, %v4411
  %v4413 = vpop.f32.mrb[0].mxu0
  %4414 = vmatprep.mubr.bf16.mxu0 0
  %4415 = vmatmul.mubr.bf16.gmra.mrb[0].mxu0 %v4154
  %v4416 = vpop.f32.mrb[0].mxu0
  %v4417 = vadd.f32 0.0, %v4416
  %v4418 = vpop.f32.mrb[0].mxu0
  %v4419 = vpop.f32.mrb[0].mxu0
  %v4420 = vadd.f32 0.0, %v4419
  %v4421 = vpop.f32.mrb[0].mxu0
  %4422 = vmatprep.mubr.bf16.mxu0 0
  %4423 = vmatmul.mubr.bf16.gmra.mrb[0].mxu0 %v4157
  %v4424 = vpop.f32.mrb[0].mxu0
  %v4425 = vadd.f32 0.0, %v4424
  %v4426 = vpop.f32.mrb[0].mxu0
  %v4427 = vpop.f32.mrb[0].mxu0
  %v4428 = vadd.f32 0.0, %v4427
  %v4429 = vpop.f32.mrb[0].mxu0
  %4430 = vmatprep.mubr.bf16.mxu0 0
  %4431 = vmatmul.mubr.bf16.gmra.mrb[0].mxu0 %v4160
  %v4432 = vpop.f32.mrb[0].mxu0
  %v4433 = vadd.f32 0.0, %v4432
  %v4434 = vpop.f32.mrb[0].mxu0
  %v4435 = vpop.f32.mrb[0].mxu0
  %v4436 = vadd.f32 0.0, %v4435
  %v4437 = vpop.f32.mrb[0].mxu0
  %4438 = vmatprep.mubr.bf16.mxu0 0
  %4439 = vmatmul.mubr.bf16.gmra.mrb[0].mxu0 %v4163
  %v4440 = vpop.f32.mrb[0].mxu0
  %v4441 = vadd.f32 0.0, %v4440
  %v4442 = vpop.f32.mrb[0].mxu0
  %v4443 = vpop.f32.mrb[0].mxu0
  %v4444 = vadd.f32 0.0, %v4443
  %v4445 = vpop.f32.mrb[0].mxu0
  %4446 = vmatprep.mubr.bf16.mxu0 0
  %4447 = vmatmul.mubr.bf16.gmra.mrb[0].mxu0 %v4166
  %v4448 = vpop.f32.mrb[0].mxu0
  %v4449 = vadd.f32 0.0, %v4448
  %v4450 = vpop.f32.mrb[0].mxu0
  %v4451 = vpop.f32.mrb[0].mxu0
  %v4452 = vadd.f32 0.0, %v4451
  %v4453 = vpop.f32.mrb[0].mxu0
  %4454 = vmatprep.mubr.bf16.mxu0 0
  %4455 = vmatmul.mubr.bf16.gmra.mrb[0].mxu0 %v4169
  %v4456 = vpop.f32.mrb[0].mxu0
  %v4457 = vadd.f32 0.0, %v4456
  %v4458 = vpop.f32.mrb[0].mxu0
  %v4459 = vpop.f32.mrb[0].mxu0
  %v4460 = vadd.f32 0.0, %v4459
  %v4461 = vpop.f32.mrb[0].mxu0
  %4462 = vdwg.mxu0
  %v4463 = vadd.f32 %v3913, %v4209
  %v4464 = vadd.f32 %v3914, %v4212
  %v4465 = vadd.f32 %v3915, %v4217
  %v4466 = vadd.f32 %v3916, %v4220
  %v4467 = vadd.f32 %v3917, %v4225
  %v4468 = vadd.f32 %v3918, %v4228
  %v4469 = vadd.f32 %v3919, %v4233
  %v4470 = vadd.f32 %v3920, %v4236
  %v4471 = vadd.f32 %v3921, %v4241
  %v4472 = vadd.f32 %v3922, %v4244
  %v4473 = vadd.f32 %v3923, %v4249
  %v4474 = vadd.f32 %v3924, %v4252
  %v4475 = vadd.f32 %v3925, %v4257
  %v4476 = vadd.f32 %v3926, %v4260
  %v4477 = vadd.f32 %v3927, %v4265
  %v4478 = vadd.f32 %v3928, %v4268
  %v4479 = vadd.f32 %v3929, %v4273
  %v4480 = vadd.f32 %v3930, %v4276
  %v4481 = vadd.f32 %v3931, %v4281
  %v4482 = vadd.f32 %v3932, %v4284
  %v4483 = vadd.f32 %v3933, %v4289
  %v4484 = vadd.f32 %v3934, %v4292
  %v4485 = vadd.f32 %v3935, %v4297
  %v4486 = vadd.f32 %v3936, %v4300
  %v4487 = vadd.f32 %v3937, %v4305
  %v4488 = vadd.f32 %v3938, %v4308
  %v4489 = vadd.f32 %v3939, %v4313
  %v4490 = vadd.f32 %v3940, %v4316
  %v4491 = vadd.f32 %v3941, %v4321
  %v4492 = vadd.f32 %v3942, %v4324
  %v4493 = vadd.f32 %v3943, %v4329
  %v4494 = vadd.f32 %v3944, %v4332
  %v4495 = vadd.f32 %v3945, %v4337
  %v4496 = vadd.f32 %v3946, %v4340
  %v4497 = vadd.f32 %v3947, %v4345
  %v4498 = vadd.f32 %v3948, %v4348
  %v4499 = vadd.f32 %v3949, %v4353
  %v4500 = vadd.f32 %v3950, %v4356
  %v4501 = vadd.f32 %v3951, %v4361
  %v4502 = vadd.f32 %v3952, %v4364
  %v4503 = vadd.f32 %v3953, %v4369
  %v4504 = vadd.f32 %v3954, %v4372
  %v4505 = vadd.f32 %v3955, %v4377
  %v4506 = vadd.f32 %v3956, %v4380
  %v4507 = vadd.f32 %v3957, %v4385
  %v4508 = vadd.f32 %v3958, %v4388
  %v4509 = vadd.f32 %v3959, %v4393
  %v4510 = vadd.f32 %v3960, %v4396
  %v4511 = vadd.f32 %v3961, %v4401
  %v4512 = vadd.f32 %v3962, %v4404
  %v4513 = vadd.f32 %v3963, %v4409
  %v4514 = vadd.f32 %v3964, %v4412
  %v4515 = vadd.f32 %v3965, %v4417
  %v4516 = vadd.f32 %v3966, %v4420
  %v4517 = vadd.f32 %v3967, %v4425
  %v4518 = vadd.f32 %v3968, %v4428
  %v4519 = vadd.f32 %v3969, %v4433
  %v4520 = vadd.f32 %v3970, %v4436
  %v4521 = vadd.f32 %v3971, %v4441
  %v4522 = vadd.f32 %v3972, %v4444
  %v4523 = vadd.f32 %v3973, %v4449
  %v4524 = vadd.f32 %v3974, %v4452
  %v4525 = vadd.f32 %v3975, %v4457
  %v4526 = vadd.f32 %v3976, %v4460
  %v4527 = vld [vmem:[%s3426 + $0x2] sm:$0xff]
  %v4528 = vld [vmem:[%s3426 + $0xa] sm:$0xff]
  %v4529 = vld [vmem:[%s3426 + $0x1a] sm:$0xff]
  %v4530 = vld [vmem:[%s3426 + $0x22] sm:$0xff]
  %v4531 = vld [vmem:[%s3426 + $0x32] sm:$0xff]
  %v4532 = vld [vmem:[%s3426 + $0x3a] sm:$0xff]
  %v4533 = vld [vmem:[%s3426 + $0x4a] sm:$0xff]
  %v4534 = vld [vmem:[%s3426 + $0x52] sm:$0xff]
  %v4535 = vld [vmem:[%s3426 + $0x62] sm:$0xff]
  %v4536 = vld [vmem:[%s3426 + $0x6a] sm:$0xff]
  %v4537 = vld [vmem:[%s3426 + $0x7a] sm:$0xff]
  %v4538 = vld [vmem:[%s3426 + $0x82] sm:$0xff]
  %v4539 = vld [vmem:[%s3426 + $0x92] sm:$0xff]
  %v4540 = vld [vmem:[%s3426 + $0x9a] sm:$0xff]
  %v4541 = vld [vmem:[%s3426 + $0xaa] sm:$0xff]
  %v4542 = vld [vmem:[%s3426 + $0xb2] sm:$0xff]
  %v4543 = vld [vmem:[%s3426 + $0xc2] sm:$0xff]
  %v4544 = vld [vmem:[%s3426 + $0xca] sm:$0xff]
  %v4545 = vld [vmem:[%s3426 + $0xda] sm:$0xff]
  %v4546 = vld [vmem:[%s3426 + $0xe2] sm:$0xff]
  %v4547 = vld [vmem:[%s3426 + $0xf2] sm:$0xff]
  %v4548 = vld [vmem:[%s3426 + $0xfa] sm:$0xff]
  %v4549 = vld [vmem:[%s3426 + $0x10a] sm:$0xff]
  %v4550 = vld [vmem:[%s3426 + $0x112] sm:$0xff]
  %v4551 = vld [vmem:[%s3426 + $0x122] sm:$0xff]
  %v4552 = vld [vmem:[%s3426 + $0x12a] sm:$0xff]
  %v4553 = vld [vmem:[%s3426 + $0x13a] sm:$0xff]
  %v4554 = vld [vmem:[%s3426 + $0x142] sm:$0xff]
  %v4555 = vld [vmem:[%s3426 + $0x152] sm:$0xff]
  %v4556 = vld [vmem:[%s3426 + $0x15a] sm:$0xff]
  %v4557 = vld [vmem:[%s3426 + $0x16a] sm:$0xff]
  %v4558 = vld [vmem:[%s3426 + $0x172] sm:$0xff]
  %v4559 = vld [vmem:[%s3426 + $0x1b2] sm:$0xff]
  %v4560 = vld [vmem:[%s3426 + $0x1ba] sm:$0xff]
  %v4561 = vld [vmem:[%s3426 + $0x1ca] sm:$0xff]
  %v4562 = vld [vmem:[%s3426 + $0x1d2] sm:$0xff]
  %v4563 = vld [vmem:[%s3426 + $0x1e2] sm:$0xff]
  %v4564 = vld [vmem:[%s3426 + $0x1ea] sm:$0xff]
  %v4565 = vld [vmem:[%s3426 + $0x1fa] sm:$0xff]
  %v4566 = vld [vmem:[%s3426 + $0x202] sm:$0xff]
  %v4567 = vld [vmem:[%s3426 + $0x212] sm:$0xff]
  %v4568 = vld [vmem:[%s3426 + $0x21a] sm:$0xff]
  %v4569 = vld [vmem:[%s3426 + $0x22a] sm:$0xff]
  %v4570 = vld [vmem:[%s3426 + $0x232] sm:$0xff]
  %v4571 = vld [vmem:[%s3426 + $0x242] sm:$0xff]
  %v4572 = vld [vmem:[%s3426 + $0x24a] sm:$0xff]
  %v4573 = vld [vmem:[%s3426 + $0x25a] sm:$0xff]
  %v4574 = vld [vmem:[%s3426 + $0x262] sm:$0xff]
  %v4575 = vld [vmem:[%s3426 + $0x272] sm:$0xff]
  %v4576 = vld [vmem:[%s3426 + $0x27a] sm:$0xff]
  %v4577 = vld [vmem:[%s3426 + $0x28a] sm:$0xff]
  %v4578 = vld [vmem:[%s3426 + $0x292] sm:$0xff]
  %v4579 = vld [vmem:[%s3426 + $0x2a2] sm:$0xff]
  %v4580 = vld [vmem:[%s3426 + $0x2aa] sm:$0xff]
  %v4581 = vld [vmem:[%s3426 + $0x2ba] sm:$0xff]
  %v4582 = vld [vmem:[%s3426 + $0x2c2] sm:$0xff]
  %v4583 = vld [vmem:[%s3426 + $0x2d2] sm:$0xff]
  %v4584 = vld [vmem:[%s3426 + $0x2da] sm:$0xff]
  %v4585 = vld [vmem:[%s3426 + $0x2ea] sm:$0xff]
  %v4586 = vld [vmem:[%s3426 + $0x2f2] sm:$0xff]
  %v4587 = vld [vmem:[%s3426 + $0x302] sm:$0xff]
  %v4588 = vld [vmem:[%s3426 + $0x30a] sm:$0xff]
  %v4589 = vld [vmem:[%s3426 + $0x31a] sm:$0xff]
  %v4590 = vld [vmem:[%s3426 + $0x322] sm:$0xff]
  %v4591 = vpack.c.bf16 %v4528, %v4527
  %v4592 = vpack.c.bf16 %v4530, %v4529
  %v4593 = vpack.c.bf16 %v4532, %v4531
  %v4594 = vpack.c.bf16 %v4534, %v4533
  %v4595 = vpack.c.bf16 %v4536, %v4535
  %v4596 = vpack.c.bf16 %v4538, %v4537
  %v4597 = vpack.c.bf16 %v4540, %v4539
  %v4598 = vpack.c.bf16 %v4542, %v4541
  %v4599 = vpack.c.bf16 %v4544, %v4543
  %v4600 = vpack.c.bf16 %v4546, %v4545
  %v4601 = vpack.c.bf16 %v4548, %v4547
  %v4602 = vpack.c.bf16 %v4550, %v4549
  %v4603 = vpack.c.bf16 %v4552, %v4551
  %v4604 = vpack.c.bf16 %v4554, %v4553
  %v4605 = vpack.c.bf16 %v4556, %v4555
  %v4606 = vpack.c.bf16 %v4558, %v4557
  %v4607 = vpack.c.bf16 %v4560, %v4559
  %v4608 = vpack.c.bf16 %v4562, %v4561
  %v4609 = vpack.c.bf16 %v4564, %v4563
  %v4610 = vpack.c.bf16 %v4566, %v4565
  %v4611 = vpack.c.bf16 %v4568, %v4567
  %v4612 = vpack.c.bf16 %v4570, %v4569
  %v4613 = vpack.c.bf16 %v4572, %v4571
  %v4614 = vpack.c.bf16 %v4574, %v4573
  %v4615 = vpack.c.bf16 %v4576, %v4575
  %v4616 = vpack.c.bf16 %v4578, %v4577
  %v4617 = vpack.c.bf16 %v4580, %v4579
  %v4618 = vpack.c.bf16 %v4582, %v4581
  %v4619 = vpack.c.bf16 %v4584, %v4583
  %v4620 = vpack.c.bf16 %v4586, %v4585
  %v4621 = vpack.c.bf16 %v4588, %v4587
  %v4622 = vpack.c.bf16 %v4590, %v4589
  %s4623 = scalar_lea.vmem %s1, 16
  %v4624 = vld [vmem:[%s4623] sm:$0x3]
  %v4626 = vsel %vm15, %v4591, 0
  %v4629 = vsel %vm15, %v4592, 0
  %v4632 = vsel %vm15, %v4593, 0
  %v4635 = vsel %vm15, %v4594, 0
  %v4638 = vsel %vm15, %v4595, 0
  %v4641 = vsel %vm15, %v4596, 0
  %v4644 = vsel %vm15, %v4597, 0
  %v4647 = vsel %vm15, %v4598, 0
  %v4650 = vsel %vm15, %v4599, 0
  %v4653 = vsel %vm15, %v4600, 0
  %v4656 = vsel %vm15, %v4601, 0
  %v4659 = vsel %vm15, %v4602, 0
  %v4662 = vsel %vm15, %v4603, 0
  %v4665 = vsel %vm15, %v4604, 0
  %v4668 = vsel %vm15, %v4605, 0
  %v4671 = vsel %vm15, %v4606, 0
  %v4674 = vsel %vm15, %v4607, 0
  %v4677 = vsel %vm15, %v4608, 0
  %v4680 = vsel %vm15, %v4609, 0
  %v4683 = vsel %vm15, %v4610, 0
  %v4686 = vsel %vm15, %v4611, 0
  %v4689 = vsel %vm15, %v4612, 0
  %v4692 = vsel %vm15, %v4613, 0
  %v4695 = vsel %vm15, %v4614, 0
  %v4698 = vsel %vm15, %v4615, 0
  %v4701 = vsel %vm15, %v4616, 0
  %v4704 = vsel %vm15, %v4617, 0
  %v4707 = vsel %vm15, %v4618, 0
  %v4710 = vsel %vm15, %v4619, 0
  %v4713 = vsel %vm15, %v4620, 0
  %v4716 = vsel %vm15, %v4621, 0
  %v4719 = vsel %vm15, %v4622, 0
  %v4722 = vsel %vm545, %v4624, 0
  %4724 = vmatprep.subr.bf16.mxu0 0
  %4725 = vmatpush1.bf16.msra.mxu0 %v4722
  %4726 = vmatprep.subr.bf16.mxu0 0
  %4727 = vmatpush1.bf16.msra.mxu0 0
  %4728 = vmatprep.subr.bf16.mxu0 0
  %4729 = vmatpush1.bf16.msra.mxu0 0
  %4730 = vmatprep.subr.bf16.mxu0 0
  %4731 = vmatpush1.bf16.msra.mxu0 0
  %4732 = vmatprep.subr.bf16.mxu0 0
  %4733 = vmatpush1.bf16.msra.mxu0 0
  %4734 = vmatprep.subr.bf16.mxu0 0
  %4735 = vmatpush1.bf16.msra.mxu0 0
  %4736 = vmatprep.subr.bf16.mxu0 0
  %4737 = vmatpush1.bf16.msra.mxu0 0
  %4738 = vmatprep.subr.bf16.mxu0 0
  %4739 = vmatpush1.bf16.msra.mxu0 0
  %4740 = vmatprep.subr.bf16.mxu0 0
  %4741 = vmatpush1.bf16.msra.mxu0 0
  %4742 = vmatprep.subr.bf16.mxu0 0
  %4743 = vmatpush1.bf16.msra.mxu0 0
  %4744 = vmatprep.subr.bf16.mxu0 0
  %4745 = vmatpush1.bf16.msra.mxu0 0
  %4746 = vmatprep.subr.bf16.mxu0 0
  %4747 = vmatpush1.bf16.msra.mxu0 0
  %4748 = vmatprep.subr.bf16.mxu0 0
  %4749 = vmatpush1.bf16.msra.mxu0 0
  %4750 = vmatprep.subr.bf16.mxu0 0
  %4751 = vmatpush1.bf16.msra.mxu0 0
  %4752 = vmatprep.subr.bf16.mxu0 0
  %4753 = vmatpush1.bf16.msra.mxu0 0
  %4754 = vmatprep.subr.bf16.mxu0 0
  %4755 = vmatpush1.bf16.msra.mxu0 0
  %4756 = vmatprep.mubr.bf16.mxu0 0
  %4757 = vmatmul.mubr.bf16.gmra.mrb[0].mxu0 %v4626
  %v4758 = vpop.f32.mrb[0].mxu0
  %v4759 = vadd.f32 0.0, %v4758
  %v4760 = vpop.f32.mrb[0].mxu0
  %v4761 = vpop.f32.mrb[0].mxu0
  %v4762 = vadd.f32 0.0, %v4761
  %v4763 = vpop.f32.mrb[0].mxu0
  %4764 = vmatprep.mubr.bf16.mxu0 0
  %4765 = vmatmul.mubr.bf16.gmra.mrb[0].mxu0 %v4629
  %v4766 = vpop.f32.mrb[0].mxu0
  %v4767 = vadd.f32 0.0, %v4766
  %v4768 = vpop.f32.mrb[0].mxu0
  %v4769 = vpop.f32.mrb[0].mxu0
  %v4770 = vadd.f32 0.0, %v4769
  %v4771 = vpop.f32.mrb[0].mxu0
  %4772 = vmatprep.mubr.bf16.mxu0 0
  %4773 = vmatmul.mubr.bf16.gmra.mrb[0].mxu0 %v4632
  %v4774 = vpop.f32.mrb[0].mxu0
  %v4775 = vadd.f32 0.0, %v4774
  %v4776 = vpop.f32.mrb[0].mxu0
  %v4777 = vpop.f32.mrb[0].mxu0
  %v4778 = vadd.f32 0.0, %v4777
  %v4779 = vpop.f32.mrb[0].mxu0
  %4780 = vmatprep.mubr.bf16.mxu0 0
  %4781 = vmatmul.mubr.bf16.gmra.mrb[0].mxu0 %v4635
  %v4782 = vpop.f32.mrb[0].mxu0
  %v4783 = vadd.f32 0.0, %v4782
  %v4784 = vpop.f32.mrb[0].mxu0
  %v4785 = vpop.f32.mrb[0].mxu0
  %v4786 = vadd.f32 0.0, %v4785
  %v4787 = vpop.f32.mrb[0].mxu0
  %4788 = vmatprep.mubr.bf16.mxu0 0
  %4789 = vmatmul.mubr.bf16.gmra.mrb[0].mxu0 %v4638
  %v4790 = vpop.f32.mrb[0].mxu0
  %v4791 = vadd.f32 0.0, %v4790
  %v4792 = vpop.f32.mrb[0].mxu0
  %v4793 = vpop.f32.mrb[0].mxu0
  %v4794 = vadd.f32 0.0, %v4793
  %v4795 = vpop.f32.mrb[0].mxu0
  %4796 = vmatprep.mubr.bf16.mxu0 0
  %4797 = vmatmul.mubr.bf16.gmra.mrb[0].mxu0 %v4641
  %v4798 = vpop.f32.mrb[0].mxu0
  %v4799 = vadd.f32 0.0, %v4798
  %v4800 = vpop.f32.mrb[0].mxu0
  %v4801 = vpop.f32.mrb[0].mxu0
  %v4802 = vadd.f32 0.0, %v4801
  %v4803 = vpop.f32.mrb[0].mxu0
  %4804 = vmatprep.mubr.bf16.mxu0 0
  %4805 = vmatmul.mubr.bf16.gmra.mrb[0].mxu0 %v4644
  %v4806 = vpop.f32.mrb[0].mxu0
  %v4807 = vadd.f32 0.0, %v4806
  %v4808 = vpop.f32.mrb[0].mxu0
  %v4809 = vpop.f32.mrb[0].mxu0
  %v4810 = vadd.f32 0.0, %v4809
  %v4811 = vpop.f32.mrb[0].mxu0
  %4812 = vmatprep.mubr.bf16.mxu0 0
  %4813 = vmatmul.mubr.bf16.gmra.mrb[0].mxu0 %v4647
  %v4814 = vpop.f32.mrb[0].mxu0
  %v4815 = vadd.f32 0.0, %v4814
  %v4816 = vpop.f32.mrb[0].mxu0
  %v4817 = vpop.f32.mrb[0].mxu0
  %v4818 = vadd.f32 0.0, %v4817
  %v4819 = vpop.f32.mrb[0].mxu0
  %4820 = vmatprep.mubr.bf16.mxu0 0
  %4821 = vmatmul.mubr.bf16.gmra.mrb[0].mxu0 %v4650
  %v4822 = vpop.f32.mrb[0].mxu0
  %v4823 = vadd.f32 0.0, %v4822
  %v4824 = vpop.f32.mrb[0].mxu0
  %v4825 = vpop.f32.mrb[0].mxu0
  %v4826 = vadd.f32 0.0, %v4825
  %v4827 = vpop.f32.mrb[0].mxu0
  %4828 = vmatprep.mubr.bf16.mxu0 0
  %4829 = vmatmul.mubr.bf16.gmra.mrb[0].mxu0 %v4653
  %v4830 = vpop.f32.mrb[0].mxu0
  %v4831 = vadd.f32 0.0, %v4830
  %v4832 = vpop.f32.mrb[0].mxu0
  %v4833 = vpop.f32.mrb[0].mxu0
  %v4834 = vadd.f32 0.0, %v4833
  %v4835 = vpop.f32.mrb[0].mxu0
  %4836 = vmatprep.mubr.bf16.mxu0 0
  %4837 = vmatmul.mubr.bf16.gmra.mrb[0].mxu0 %v4656
  %v4838 = vpop.f32.mrb[0].mxu0
  %v4839 = vadd.f32 0.0, %v4838
  %v4840 = vpop.f32.mrb[0].mxu0
  %v4841 = vpop.f32.mrb[0].mxu0
  %v4842 = vadd.f32 0.0, %v4841
  %v4843 = vpop.f32.mrb[0].mxu0
  %4844 = vmatprep.mubr.bf16.mxu0 0
  %4845 = vmatmul.mubr.bf16.gmra.mrb[0].mxu0 %v4659
  %v4846 = vpop.f32.mrb[0].mxu0
  %v4847 = vadd.f32 0.0, %v4846
  %v4848 = vpop.f32.mrb[0].mxu0
  %v4849 = vpop.f32.mrb[0].mxu0
  %v4850 = vadd.f32 0.0, %v4849
  %v4851 = vpop.f32.mrb[0].mxu0
  %4852 = vmatprep.mubr.bf16.mxu0 0
  %4853 = vmatmul.mubr.bf16.gmra.mrb[0].mxu0 %v4662
  %v4854 = vpop.f32.mrb[0].mxu0
  %v4855 = vadd.f32 0.0, %v4854
  %v4856 = vpop.f32.mrb[0].mxu0
  %v4857 = vpop.f32.mrb[0].mxu0
  %v4858 = vadd.f32 0.0, %v4857
  %v4859 = vpop.f32.mrb[0].mxu0
  %4860 = vmatprep.mubr.bf16.mxu0 0
  %4861 = vmatmul.mubr.bf16.gmra.mrb[0].mxu0 %v4665
  %v4862 = vpop.f32.mrb[0].mxu0
  %v4863 = vadd.f32 0.0, %v4862
  %v4864 = vpop.f32.mrb[0].mxu0
  %v4865 = vpop.f32.mrb[0].mxu0
  %v4866 = vadd.f32 0.0, %v4865
  %v4867 = vpop.f32.mrb[0].mxu0
  %4868 = vmatprep.mubr.bf16.mxu0 0
  %4869 = vmatmul.mubr.bf16.gmra.mrb[0].mxu0 %v4668
  %v4870 = vpop.f32.mrb[0].mxu0
  %v4871 = vadd.f32 0.0, %v4870
  %v4872 = vpop.f32.mrb[0].mxu0
  %v4873 = vpop.f32.mrb[0].mxu0
  %v4874 = vadd.f32 0.0, %v4873
  %v4875 = vpop.f32.mrb[0].mxu0
  %4876 = vmatprep.mubr.bf16.mxu0 0
  %4877 = vmatmul.mubr.bf16.gmra.mrb[0].mxu0 %v4671
  %v4878 = vpop.f32.mrb[0].mxu0
  %v4879 = vadd.f32 0.0, %v4878
  %v4880 = vpop.f32.mrb[0].mxu0
  %v4881 = vpop.f32.mrb[0].mxu0
  %v4882 = vadd.f32 0.0, %v4881
  %v4883 = vpop.f32.mrb[0].mxu0
  %4884 = vmatprep.mubr.bf16.mxu0 0
  %4885 = vmatmul.mubr.bf16.gmra.mrb[0].mxu0 %v4674
  %v4886 = vpop.f32.mrb[0].mxu0
  %v4887 = vadd.f32 0.0, %v4886
  %v4888 = vpop.f32.mrb[0].mxu0
  %v4889 = vpop.f32.mrb[0].mxu0
  %v4890 = vadd.f32 0.0, %v4889
  %v4891 = vpop.f32.mrb[0].mxu0
  %4892 = vmatprep.mubr.bf16.mxu0 0
  %4893 = vmatmul.mubr.bf16.gmra.mrb[0].mxu0 %v4677
  %v4894 = vpop.f32.mrb[0].mxu0
  %v4895 = vadd.f32 0.0, %v4894
  %v4896 = vpop.f32.mrb[0].mxu0
  %v4897 = vpop.f32.mrb[0].mxu0
  %v4898 = vadd.f32 0.0, %v4897
  %v4899 = vpop.f32.mrb[0].mxu0
  %4900 = vmatprep.mubr.bf16.mxu0 0
  %4901 = vmatmul.mubr.bf16.gmra.mrb[0].mxu0 %v4680
  %v4902 = vpop.f32.mrb[0].mxu0
  %v4903 = vadd.f32 0.0, %v4902
  %v4904 = vpop.f32.mrb[0].mxu0
  %v4905 = vpop.f32.mrb[0].mxu0
  %v4906 = vadd.f32 0.0, %v4905
  %v4907 = vpop.f32.mrb[0].mxu0
  %4908 = vmatprep.mubr.bf16.mxu0 0
  %4909 = vmatmul.mubr.bf16.gmra.mrb[0].mxu0 %v4683
  %v4910 = vpop.f32.mrb[0].mxu0
  %v4911 = vadd.f32 0.0, %v4910
  %v4912 = vpop.f32.mrb[0].mxu0
  %v4913 = vpop.f32.mrb[0].mxu0
  %v4914 = vadd.f32 0.0, %v4913
  %v4915 = vpop.f32.mrb[0].mxu0
  %4916 = vmatprep.mubr.bf16.mxu0 0
  %4917 = vmatmul.mubr.bf16.gmra.mrb[0].mxu0 %v4686
  %v4918 = vpop.f32.mrb[0].mxu0
  %v4919 = vadd.f32 0.0, %v4918
  %v4920 = vpop.f32.mrb[0].mxu0
  %v4921 = vpop.f32.mrb[0].mxu0
  %v4922 = vadd.f32 0.0, %v4921
  %v4923 = vpop.f32.mrb[0].mxu0
  %4924 = vmatprep.mubr.bf16.mxu0 0
  %4925 = vmatmul.mubr.bf16.gmra.mrb[0].mxu0 %v4689
  %v4926 = vpop.f32.mrb[0].mxu0
  %v4927 = vadd.f32 0.0, %v4926
  %v4928 = vpop.f32.mrb[0].mxu0
  %v4929 = vpop.f32.mrb[0].mxu0
  %v4930 = vadd.f32 0.0, %v4929
  %v4931 = vpop.f32.mrb[0].mxu0
  %4932 = vmatprep.mubr.bf16.mxu0 0
  %4933 = vmatmul.mubr.bf16.gmra.mrb[0].mxu0 %v4692
  %v4934 = vpop.f32.mrb[0].mxu0
  %v4935 = vadd.f32 0.0, %v4934
  %v4936 = vpop.f32.mrb[0].mxu0
  %v4937 = vpop.f32.mrb[0].mxu0
  %v4938 = vadd.f32 0.0, %v4937
  %v4939 = vpop.f32.mrb[0].mxu0
  %4940 = vmatprep.mubr.bf16.mxu0 0
  %4941 = vmatmul.mubr.bf16.gmra.mrb[0].mxu0 %v4695
  %v4942 = vpop.f32.mrb[0].mxu0
  %v4943 = vadd.f32 0.0, %v4942
  %v4944 = vpop.f32.mrb[0].mxu0
  %v4945 = vpop.f32.mrb[0].mxu0
  %v4946 = vadd.f32 0.0, %v4945
  %v4947 = vpop.f32.mrb[0].mxu0
  %4948 = vmatprep.mubr.bf16.mxu0 0
  %4949 = vmatmul.mubr.bf16.gmra.mrb[0].mxu0 %v4698
  %v4950 = vpop.f32.mrb[0].mxu0
  %v4951 = vadd.f32 0.0, %v4950
  %v4952 = vpop.f32.mrb[0].mxu0
  %v4953 = vpop.f32.mrb[0].mxu0
  %v4954 = vadd.f32 0.0, %v4953
  %v4955 = vpop.f32.mrb[0].mxu0
  %4956 = vmatprep.mubr.bf16.mxu0 0
  %4957 = vmatmul.mubr.bf16.gmra.mrb[0].mxu0 %v4701
  %v4958 = vpop.f32.mrb[0].mxu0
  %v4959 = vadd.f32 0.0, %v4958
  %v4960 = vpop.f32.mrb[0].mxu0
  %v4961 = vpop.f32.mrb[0].mxu0
  %v4962 = vadd.f32 0.0, %v4961
  %v4963 = vpop.f32.mrb[0].mxu0
  %4964 = vmatprep.mubr.bf16.mxu0 0
  %4965 = vmatmul.mubr.bf16.gmra.mrb[0].mxu0 %v4704
  %v4966 = vpop.f32.mrb[0].mxu0
  %v4967 = vadd.f32 0.0, %v4966
  %v4968 = vpop.f32.mrb[0].mxu0
  %v4969 = vpop.f32.mrb[0].mxu0
  %v4970 = vadd.f32 0.0, %v4969
  %v4971 = vpop.f32.mrb[0].mxu0
  %4972 = vmatprep.mubr.bf16.mxu0 0
  %4973 = vmatmul.mubr.bf16.gmra.mrb[0].mxu0 %v4707
  %v4974 = vpop.f32.mrb[0].mxu0
  %v4975 = vadd.f32 0.0, %v4974
  %v4976 = vpop.f32.mrb[0].mxu0
  %v4977 = vpop.f32.mrb[0].mxu0
  %v4978 = vadd.f32 0.0, %v4977
  %v4979 = vpop.f32.mrb[0].mxu0
  %4980 = vmatprep.mubr.bf16.mxu0 0
  %4981 = vmatmul.mubr.bf16.gmra.mrb[0].mxu0 %v4710
  %v4982 = vpop.f32.mrb[0].mxu0
  %v4983 = vadd.f32 0.0, %v4982
  %v4984 = vpop.f32.mrb[0].mxu0
  %v4985 = vpop.f32.mrb[0].mxu0
  %v4986 = vadd.f32 0.0, %v4985
  %v4987 = vpop.f32.mrb[0].mxu0
  %4988 = vmatprep.mubr.bf16.mxu0 0
  %4989 = vmatmul.mubr.bf16.gmra.mrb[0].mxu0 %v4713
  %v4990 = vpop.f32.mrb[0].mxu0
  %v4991 = vadd.f32 0.0, %v4990
  %v4992 = vpop.f32.mrb[0].mxu0
  %v4993 = vpop.f32.mrb[0].mxu0
  %v4994 = vadd.f32 0.0, %v4993
  %v4995 = vpop.f32.mrb[0].mxu0
  %4996 = vmatprep.mubr.bf16.mxu0 0
  %4997 = vmatmul.mubr.bf16.gmra.mrb[0].mxu0 %v4716
  %v4998 = vpop.f32.mrb[0].mxu0
  %v4999 = vadd.f32 0.0, %v4998
  %v5000 = vpop.f32.mrb[0].mxu0
  %v5001 = vpop.f32.mrb[0].mxu0
  %v5002 = vadd.f32 0.0, %v5001
  %v5003 = vpop.f32.mrb[0].mxu0
  %5004 = vmatprep.mubr.bf16.mxu0 0
  %5005 = vmatmul.mubr.bf16.gmra.mrb[0].mxu0 %v4719
  %v5006 = vpop.f32.mrb[0].mxu0
  %v5007 = vadd.f32 0.0, %v5006
  %v5008 = vpop.f32.mrb[0].mxu0
  %v5009 = vpop.f32.mrb[0].mxu0
  %v5010 = vadd.f32 0.0, %v5009
  %v5011 = vpop.f32.mrb[0].mxu0
  %5012 = vdwg.mxu0
  %v5013 = vadd.f32 %v4463, %v4759
  %v5014 = vadd.f32 %v4464, %v4762
  %v5015 = vadd.f32 %v4465, %v4767
  %v5016 = vadd.f32 %v4466, %v4770
  %v5017 = vadd.f32 %v4467, %v4775
  %v5018 = vadd.f32 %v4468, %v4778
  %v5019 = vadd.f32 %v4469, %v4783
  %v5020 = vadd.f32 %v4470, %v4786
  %v5021 = vadd.f32 %v4471, %v4791
  %v5022 = vadd.f32 %v4472, %v4794
  %v5023 = vadd.f32 %v4473, %v4799
  %v5024 = vadd.f32 %v4474, %v4802
  %v5025 = vadd.f32 %v4475, %v4807
  %v5026 = vadd.f32 %v4476, %v4810
  %v5027 = vadd.f32 %v4477, %v4815
  %v5028 = vadd.f32 %v4478, %v4818
  %v5029 = vadd.f32 %v4479, %v4823
  %v5030 = vadd.f32 %v4480, %v4826
  %v5031 = vadd.f32 %v4481, %v4831
  %v5032 = vadd.f32 %v4482, %v4834
  %v5033 = vadd.f32 %v4483, %v4839
  %v5034 = vadd.f32 %v4484, %v4842
  %v5035 = vadd.f32 %v4485, %v4847
  %v5036 = vadd.f32 %v4486, %v4850
  %v5037 = vadd.f32 %v4487, %v4855
  %v5038 = vadd.f32 %v4488, %v4858
  %v5039 = vadd.f32 %v4489, %v4863
  %v5040 = vadd.f32 %v4490, %v4866
  %v5041 = vadd.f32 %v4491, %v4871
  %v5042 = vadd.f32 %v4492, %v4874
  %v5043 = vadd.f32 %v4493, %v4879
  %v5044 = vadd.f32 %v4494, %v4882
  %v5045 = vadd.f32 %v4495, %v4887
  %v5046 = vadd.f32 %v4496, %v4890
  %v5047 = vadd.f32 %v4497, %v4895
  %v5048 = vadd.f32 %v4498, %v4898
  %v5049 = vadd.f32 %v4499, %v4903
  %v5050 = vadd.f32 %v4500, %v4906
  %v5051 = vadd.f32 %v4501, %v4911
  %v5052 = vadd.f32 %v4502, %v4914
  %v5053 = vadd.f32 %v4503, %v4919
  %v5054 = vadd.f32 %v4504, %v4922
  %v5055 = vadd.f32 %v4505, %v4927
  %v5056 = vadd.f32 %v4506, %v4930
  %v5057 = vadd.f32 %v4507, %v4935
  %v5058 = vadd.f32 %v4508, %v4938
  %v5059 = vadd.f32 %v4509, %v4943
  %v5060 = vadd.f32 %v4510, %v4946
  %v5061 = vadd.f32 %v4511, %v4951
  %v5062 = vadd.f32 %v4512, %v4954
  %v5063 = vadd.f32 %v4513, %v4959
  %v5064 = vadd.f32 %v4514, %v4962
  %v5065 = vadd.f32 %v4515, %v4967
  %v5066 = vadd.f32 %v4516, %v4970
  %v5067 = vadd.f32 %v4517, %v4975
  %v5068 = vadd.f32 %v4518, %v4978
  %v5069 = vadd.f32 %v4519, %v4983
  %v5070 = vadd.f32 %v4520, %v4986
  %v5071 = vadd.f32 %v4521, %v4991
  %v5072 = vadd.f32 %v4522, %v4994
  %v5073 = vadd.f32 %v4523, %v4999
  %v5074 = vadd.f32 %v4524, %v5002
  %v5075 = vadd.f32 %v4525, %v5007
  %v5076 = vadd.f32 %v4526, %v5010
  %v5077 = vld [vmem:[%s2] sm:$0x1]
  %v5079 = vlaneseq
  %v5080 = vshrl.u32 %v5079, 7
  %v5081 = vsub.s32 0, %v5080
  %v5082 = vrot.slane %v5077, %v5081
  %v5084 = vadd.f32 %v5013, %v5082
  %v5085 = vadd.f32 %v5014, %v5082
  %v5086 = vadd.f32 %v5015, %v5082
  %v5087 = vadd.f32 %v5016, %v5082
  %v5088 = vadd.f32 %v5017, %v5082
  %v5089 = vadd.f32 %v5018, %v5082
  %v5090 = vadd.f32 %v5019, %v5082
  %v5091 = vadd.f32 %v5020, %v5082
  %v5092 = vadd.f32 %v5021, %v5082
  %v5093 = vadd.f32 %v5022, %v5082
  %v5094 = vadd.f32 %v5023, %v5082
  %v5095 = vadd.f32 %v5024, %v5082
  %v5096 = vadd.f32 %v5025, %v5082
  %v5097 = vadd.f32 %v5026, %v5082
  %v5098 = vadd.f32 %v5027, %v5082
  %v5099 = vadd.f32 %v5028, %v5082
  %v5100 = vadd.f32 %v5029, %v5082
  %v5101 = vadd.f32 %v5030, %v5082
  %v5102 = vadd.f32 %v5031, %v5082
  %v5103 = vadd.f32 %v5032, %v5082
  %v5104 = vadd.f32 %v5033, %v5082
  %v5105 = vadd.f32 %v5034, %v5082
  %v5106 = vadd.f32 %v5035, %v5082
  %v5107 = vadd.f32 %v5036, %v5082
  %v5108 = vadd.f32 %v5037, %v5082
  %v5109 = vadd.f32 %v5038, %v5082
  %v5110 = vadd.f32 %v5039, %v5082
  %v5111 = vadd.f32 %v5040, %v5082
  %v5112 = vadd.f32 %v5041, %v5082
  %v5113 = vadd.f32 %v5042, %v5082
  %v5114 = vadd.f32 %v5043, %v5082
  %v5115 = vadd.f32 %v5044, %v5082
  %v5116 = vadd.f32 %v5045, %v5082
  %v5117 = vadd.f32 %v5046, %v5082
  %v5118 = vadd.f32 %v5047, %v5082
  %v5119 = vadd.f32 %v5048, %v5082
  %v5120 = vadd.f32 %v5049, %v5082
  %v5121 = vadd.f32 %v5050, %v5082
  %v5122 = vadd.f32 %v5051, %v5082
  %v5123 = vadd.f32 %v5052, %v5082
  %v5124 = vadd.f32 %v5053, %v5082
  %v5125 = vadd.f32 %v5054, %v5082
  %v5126 = vadd.f32 %v5055, %v5082
  %v5127 = vadd.f32 %v5056, %v5082
  %v5128 = vadd.f32 %v5057, %v5082
  %v5129 = vadd.f32 %v5058, %v5082
  %v5130 = vadd.f32 %v5059, %v5082
  %v5131 = vadd.f32 %v5060, %v5082
  %v5132 = vadd.f32 %v5061, %v5082
  %v5133 = vadd.f32 %v5062, %v5082
  %v5134 = vadd.f32 %v5063, %v5082
  %v5135 = vadd.f32 %v5064, %v5082
  %v5136 = vadd.f32 %v5065, %v5082
  %v5137 = vadd.f32 %v5066, %v5082
  %v5138 = vadd.f32 %v5067, %v5082
  %v5139 = vadd.f32 %v5068, %v5082
  %v5140 = vadd.f32 %v5069, %v5082
  %v5141 = vadd.f32 %v5070, %v5082
  %v5142 = vadd.f32 %v5071, %v5082
  %v5143 = vadd.f32 %v5072, %v5082
  %v5144 = vadd.f32 %v5073, %v5082
  %v5145 = vadd.f32 %v5074, %v5082
  %v5146 = vadd.f32 %v5075, %v5082
  %v5147 = vadd.f32 %v5076, %v5082
  %v5148 = vmax.f32 %v5084, 0.0
  %v5149 = vmax.f32 %v5085, 0.0
  %v5150 = vmax.f32 %v5086, 0.0
  %v5151 = vmax.f32 %v5087, 0.0
  %v5152 = vmax.f32 %v5088, 0.0
  %v5153 = vmax.f32 %v5089, 0.0
  %v5154 = vmax.f32 %v5090, 0.0
  %v5155 = vmax.f32 %v5091, 0.0
  %v5156 = vmax.f32 %v5092, 0.0
  %v5157 = vmax.f32 %v5093, 0.0
  %v5158 = vmax.f32 %v5094, 0.0
  %v5159 = vmax.f32 %v5095, 0.0
  %v5160 = vmax.f32 %v5096, 0.0
  %v5161 = vmax.f32 %v5097, 0.0
  %v5162 = vmax.f32 %v5098, 0.0
  %v5163 = vmax.f32 %v5099, 0.0
  %v5164 = vmax.f32 %v5100, 0.0
  %v5165 = vmax.f32 %v5101, 0.0
  %v5166 = vmax.f32 %v5102, 0.0
  %v5167 = vmax.f32 %v5103, 0.0
  %v5168 = vmax.f32 %v5104, 0.0
  %v5169 = vmax.f32 %v5105, 0.0
  %v5170 = vmax.f32 %v5106, 0.0
  %v5171 = vmax.f32 %v5107, 0.0
  %v5172 = vmax.f32 %v5108, 0.0
  %v5173 = vmax.f32 %v5109, 0.0
  %v5174 = vmax.f32 %v5110, 0.0
  %v5175 = vmax.f32 %v5111, 0.0
  %v5176 = vmax.f32 %v5112, 0.0
  %v5177 = vmax.f32 %v5113, 0.0
  %v5178 = vmax.f32 %v5114, 0.0
  %v5179 = vmax.f32 %v5115, 0.0
  %v5180 = vmax.f32 %v5116, 0.0
  %v5181 = vmax.f32 %v5117, 0.0
  %v5182 = vmax.f32 %v5118, 0.0
  %v5183 = vmax.f32 %v5119, 0.0
  %v5184 = vmax.f32 %v5120, 0.0
  %v5185 = vmax.f32 %v5121, 0.0
  %v5186 = vmax.f32 %v5122, 0.0
  %v5187 = vmax.f32 %v5123, 0.0
  %v5188 = vmax.f32 %v5124, 0.0
  %v5189 = vmax.f32 %v5125, 0.0
  %v5190 = vmax.f32 %v5126, 0.0
  %v5191 = vmax.f32 %v5127, 0.0
  %v5192 = vmax.f32 %v5128, 0.0
  %v5193 = vmax.f32 %v5129, 0.0
  %v5194 = vmax.f32 %v5130, 0.0
  %v5195 = vmax.f32 %v5131, 0.0
  %v5196 = vmax.f32 %v5132, 0.0
  %v5197 = vmax.f32 %v5133, 0.0
  %v5198 = vmax.f32 %v5134, 0.0
  %v5199 = vmax.f32 %v5135, 0.0
  %v5200 = vmax.f32 %v5136, 0.0
  %v5201 = vmax.f32 %v5137, 0.0
  %v5202 = vmax.f32 %v5138, 0.0
  %v5203 = vmax.f32 %v5139, 0.0
  %v5204 = vmax.f32 %v5140, 0.0
  %v5205 = vmax.f32 %v5141, 0.0
  %v5206 = vmax.f32 %v5142, 0.0
  %v5207 = vmax.f32 %v5143, 0.0
  %v5208 = vmax.f32 %v5144, 0.0
  %v5209 = vmax.f32 %v5145, 0.0
  %v5210 = vmax.f32 %v5146, 0.0
  %v5211 = vmax.f32 %v5147, 0.0
  %vm5212 = vcmask 64512
  %5213 = vst.msk [vmem:[%s3] sm:$0xff] %vm5212, %v5148
  %5214 = vst.msk [vmem:[%s3 + $0x8] sm:$0xff] %vm5212, %v5149
  %5215 = vst.msk [vmem:[%s3 + $0x10] sm:$0xff] %vm5212, %v5150
  %5216 = vst.msk [vmem:[%s3 + $0x18] sm:$0xff] %vm5212, %v5151
  %5217 = vst.msk [vmem:[%s3 + $0x20] sm:$0xff] %vm5212, %v5152
  %5218 = vst.msk [vmem:[%s3 + $0x28] sm:$0xff] %vm5212, %v5153
  %5219 = vst.msk [vmem:[%s3 + $0x30] sm:$0xff] %vm5212, %v5154
  %5220 = vst.msk [vmem:[%s3 + $0x38] sm:$0xff] %vm5212, %v5155
  %5221 = vst.msk [vmem:[%s3 + $0x40] sm:$0xff] %vm5212, %v5156
  %5222 = vst.msk [vmem:[%s3 + $0x48] sm:$0xff] %vm5212, %v5157
  %5223 = vst.msk [vmem:[%s3 + $0x50] sm:$0xff] %vm5212, %v5158
  %5224 = vst.msk [vmem:[%s3 + $0x58] sm:$0xff] %vm5212, %v5159
  %5225 = vst.msk [vmem:[%s3 + $0x60] sm:$0xff] %vm5212, %v5160
  %5226 = vst.msk [vmem:[%s3 + $0x68] sm:$0xff] %vm5212, %v5161
  %5227 = vst.msk [vmem:[%s3 + $0x70] sm:$0xff] %vm5212, %v5162
  %5228 = vst.msk [vmem:[%s3 + $0x78] sm:$0xff] %vm5212, %v5163
  %5229 = vst.msk [vmem:[%s3 + $0x80] sm:$0xff] %vm5212, %v5164
  %5230 = vst.msk [vmem:[%s3 + $0x88] sm:$0xff] %vm5212, %v5165
  %5231 = vst.msk [vmem:[%s3 + $0x90] sm:$0xff] %vm5212, %v5166
  %5232 = vst.msk [vmem:[%s3 + $0x98] sm:$0xff] %vm5212, %v5167
  %5233 = vst.msk [vmem:[%s3 + $0xa0] sm:$0xff] %vm5212, %v5168
  %5234 = vst.msk [vmem:[%s3 + $0xa8] sm:$0xff] %vm5212, %v5169
  %5235 = vst.msk [vmem:[%s3 + $0xb0] sm:$0xff] %vm5212, %v5170
  %5236 = vst.msk [vmem:[%s3 + $0xb8] sm:$0xff] %vm5212, %v5171
  %5237 = vst.msk [vmem:[%s3 + $0xc0] sm:$0xff] %vm5212, %v5172
  %5238 = vst.msk [vmem:[%s3 + $0xc8] sm:$0xff] %vm5212, %v5173
  %5239 = vst.msk [vmem:[%s3 + $0xd0] sm:$0xff] %vm5212, %v5174
  %5240 = vst.msk [vmem:[%s3 + $0xd8] sm:$0xff] %vm5212, %v5175
  %5241 = vst.msk [vmem:[%s3 + $0xe0] sm:$0xff] %vm5212, %v5176
  %5242 = vst.msk [vmem:[%s3 + $0xe8] sm:$0xff] %vm5212, %v5177
  %5243 = vst.msk [vmem:[%s3 + $0xf0] sm:$0xff] %vm5212, %v5178
  %5244 = vst.msk [vmem:[%s3 + $0xf8] sm:$0xff] %vm5212, %v5179
  %5245 = vst.msk [vmem:[%s3 + $0x100] sm:$0xff] %vm5212, %v5180
  %5246 = vst.msk [vmem:[%s3 + $0x108] sm:$0xff] %vm5212, %v5181
  %5247 = vst.msk [vmem:[%s3 + $0x110] sm:$0xff] %vm5212, %v5182
  %5248 = vst.msk [vmem:[%s3 + $0x118] sm:$0xff] %vm5212, %v5183
  %5249 = vst.msk [vmem:[%s3 + $0x120] sm:$0xff] %vm5212, %v5184
  %5250 = vst.msk [vmem:[%s3 + $0x128] sm:$0xff] %vm5212, %v5185
  %5251 = vst.msk [vmem:[%s3 + $0x130] sm:$0xff] %vm5212, %v5186
  %5252 = vst.msk [vmem:[%s3 + $0x138] sm:$0xff] %vm5212, %v5187
  %5253 = vst.msk [vmem:[%s3 + $0x140] sm:$0xff] %vm5212, %v5188
  %5254 = vst.msk [vmem:[%s3 + $0x148] sm:$0xff] %vm5212, %v5189
  %5255 = vst.msk [vmem:[%s3 + $0x150] sm:$0xff] %vm5212, %v5190
  %5256 = vst.msk [vmem:[%s3 + $0x158] sm:$0xff] %vm5212, %v5191
  %5257 = vst.msk [vmem:[%s3 + $0x160] sm:$0xff] %vm5212, %v5192
  %5258 = vst.msk [vmem:[%s3 + $0x168] sm:$0xff] %vm5212, %v5193
  %5259 = vst.msk [vmem:[%s3 + $0x170] sm:$0xff] %vm5212, %v5194
  %5260 = vst.msk [vmem:[%s3 + $0x178] sm:$0xff] %vm5212, %v5195
  %5261 = vst.msk [vmem:[%s3 + $0x180] sm:$0xff] %vm5212, %v5196
  %5262 = vst.msk [vmem:[%s3 + $0x188] sm:$0xff] %vm5212, %v5197
  %5263 = vst.msk [vmem:[%s3 + $0x190] sm:$0xff] %vm5212, %v5198
  %5264 = vst.msk [vmem:[%s3 + $0x198] sm:$0xff] %vm5212, %v5199
  %5265 = vst.msk [vmem:[%s3 + $0x1a0] sm:$0xff] %vm5212, %v5200
  %5266 = vst.msk [vmem:[%s3 + $0x1a8] sm:$0xff] %vm5212, %v5201
  %5267 = vst.msk [vmem:[%s3 + $0x1b0] sm:$0xff] %vm5212, %v5202
  %5268 = vst.msk [vmem:[%s3 + $0x1b8] sm:$0xff] %vm5212, %v5203
  %5269 = vst.msk [vmem:[%s3 + $0x1c0] sm:$0xff] %vm5212, %v5204
  %5270 = vst.msk [vmem:[%s3 + $0x1c8] sm:$0xff] %vm5212, %v5205
  %5271 = vst.msk [vmem:[%s3 + $0x1d0] sm:$0xff] %vm5212, %v5206
  %5272 = vst.msk [vmem:[%s3 + $0x1d8] sm:$0xff] %vm5212, %v5207
  %5273 = vst.msk [vmem:[%s3 + $0x1e0] sm:$0xff] %vm5212, %v5208
  %5274 = vst.msk [vmem:[%s3 + $0x1e8] sm:$0xff] %vm5212, %v5209
  %5275 = vst.msk [vmem:[%s3 + $0x1f0] sm:$0xff] %vm5212, %v5210
  %5276 = vst.msk [vmem:[%s3 + $0x1f8] sm:$0xff] %vm5212, %v5211
  // Predicated region
  $region14: #{tpu_custom_call.1} parent=0 // pred_check
    _
  $region15: #{tpu_custom_call.1} parent=0 // pred_check_branch
    %5278 = sbr.rel (0) target = $region17
  $region16: #{tpu_custom_call.1} parent=0 // pred_region
    _
  $region17: #{tpu_custom_call.1} parent=0 // pred_fallthru
    _
  // Predicated region
  $region18: #{tpu_custom_call.1} parent=0 // pred_check
    _
  $region19: #{tpu_custom_call.1} parent=0 // pred_check_branch
    %5280 = sbr.rel (0) target = $region21
  $region20: #{tpu_custom_call.1} parent=0 // pred_region
    _
  $region21: #{tpu_custom_call.1} parent=0 // pred_fallthru
    _

</llo_original>
